<compile_context>
chip_gen: v6e
topology: v6e:2x2x1
jax: 0.10.0
libtpu: 0.0.40
codegen_flags: <defaults>
</compile_context>

<pallas_src>
import functools

import numpy as np
import jax
import jax.numpy as jnp
from jax import lax
from jax.experimental import pallas as pl
from jax.experimental.pallas import tpu as pltpu

EPS = 1e-5


# ---------------------------------------------------------------------------
# In-kernel helpers
# ---------------------------------------------------------------------------
def _bn_dense(t, gamma_t, beta_t, p_sum, t_tile, n):
    """Training-mode BatchNorm in the lane-dense (rows, W*C) layout.

    t:       (R, W*C) activations, f32
    gamma_t: (1, W*C) gamma tiled W times        beta_t: (1, W*C)
    p_sum:   (W*C, C) 0/1 matrix summing the W copies of each channel
    t_tile:  (C, W*C) 0/1 matrix tiling a per-channel vector W times
    n:       elements per channel (B*H*W)
    """
    s_wc = jnp.sum(t, axis=0, keepdims=True)           # (1, W*C)
    q_wc = jnp.sum(t * t, axis=0, keepdims=True)       # (1, W*C)
    s_c = jnp.dot(s_wc, p_sum, preferred_element_type=jnp.float32)   # (1, C)
    q_c = jnp.dot(q_wc, p_sum, preferred_element_type=jnp.float32)   # (1, C)
    mean_c = s_c * (1.0 / n)
    var_c = q_c * (1.0 / n) - mean_c * mean_c            # biased variance
    inv_c = lax.rsqrt(var_c + EPS)
    mean_t = jnp.dot(mean_c, t_tile, preferred_element_type=jnp.float32)
    inv_t = jnp.dot(inv_c, t_tile, preferred_element_type=jnp.float32)
    return (t - mean_t) * inv_t * gamma_t + beta_t


def resblock_kernel(x_ref,
                    we_ref, be_ref, ge_ref, bbe_ref,
                    m3_ref, bm_ref, gm_ref, bbm_ref,
                    wa1_ref, wa2_ref, wx1_ref, wx2_ref,
                    s7_ref, gs_ref, bbs_ref,
                    wc_ref, bc_ref, gc_ref, bbc_ref,
                    p_hid_ref, t_hid_ref, q_hid_ref, e_hid_ref,
                    p_in_ref, t_in_ref,
                    out_ref, *, B, H, W, Cin, Chid):
    BH = B * H
    WC = W * Chid
    n = float(B * H * W)
    inv_hw = 1.0 / float(H * W)
    inv_ch = 1.0 / float(Chid)

    x = x_ref[...]                                   # (BH, W*Cin) lane-dense
    p_hid = p_hid_ref[...]                           # (WC, Chid)
    t_hid = t_hid_ref[...]                           # (Chid, WC)

    # ---------------- conv_expand (1x1, block-diag matmul) + BN + ReLU ------
    h = jnp.dot(x.astype(jnp.bfloat16), we_ref[...],
                preferred_element_type=jnp.float32) + be_ref[...]      # (BH, WC)
    h = jnp.maximum(_bn_dense(h, ge_ref[...], bbe_ref[...], p_hid, t_hid, n),
                    0.0)

    # ---------------- conv_main (3x3) as one banded matmul ------------------
    # H-direction taps: 3 row-shifted windows concatenated along lanes.
    # W-direction taps: folded into the band structure of m3 (3*WC, WC).
    h3 = h.reshape(B, H, WC)
    zrow = jnp.zeros((B, 1, WC), jnp.float32)
    hpad = jnp.concatenate([zrow, h3, zrow], axis=1)                   # (B,H+2,WC)
    slab = jnp.concatenate([hpad[:, dh:dh + H, :] for dh in range(3)],
                           axis=-1)                                    # (B,H,3*WC)
    hm = jnp.dot(slab.reshape(BH, 3 * WC).astype(jnp.bfloat16), m3_ref[...],
                 preferred_element_type=jnp.float32) + bm_ref[...]     # (BH, WC)
    hm = jnp.maximum(_bn_dense(hm, gm_ref[...], bbm_ref[...], p_hid, t_hid, n),
                     0.0)

    # ---------------- channel attention --------------------------------------
    hm3 = hm.reshape(B, H, WC)
    avg_pool = jnp.dot(jnp.sum(hm3, axis=1), p_hid,
                       preferred_element_type=jnp.float32) * inv_hw    # (B, Chid)
    max_pool = jnp.max(jnp.max(hm3, axis=1).reshape(B, W, Chid), axis=1)
    avg_out = jnp.dot(
        jnp.maximum(jnp.dot(avg_pool, wa1_ref[...],
                            preferred_element_type=jnp.float32), 0.0),
        wa2_ref[...], preferred_element_type=jnp.float32)
    max_out = jnp.dot(
        jnp.maximum(jnp.dot(max_pool, wx1_ref[...],
                            preferred_element_type=jnp.float32), 0.0),
        wx2_ref[...], preferred_element_type=jnp.float32)
    cmask = jax.nn.sigmoid(avg_out + max_out)                          # (B, Chid)
    cmask_d = jnp.dot(cmask, t_hid, preferred_element_type=jnp.float32)  # (B, WC)
    o3 = hm3 * cmask_d[:, None, :]
    o2 = o3.reshape(BH, WC)

    # ---------------- spatial attention (7x7 banded matmul) ------------------
    mean_map = jnp.dot(o2, q_hid_ref[...],
                       preferred_element_type=jnp.float32) * inv_ch    # (BH, W)
    max_map = jnp.max(o2.reshape(BH, W, Chid), axis=-1)                # (BH, W)
    sp3 = jnp.concatenate([mean_map, max_map], axis=-1).reshape(B, H, 2 * W)
    zrow7 = jnp.zeros((B, 3, 2 * W), jnp.float32)
    spad = jnp.concatenate([zrow7, sp3, zrow7], axis=1)                # (B,H+6,2W)
    sslab = jnp.concatenate([spad[:, dh:dh + H, :] for dh in range(7)],
                            axis=-1)                                   # (B,H,14W)
    s_lin = jnp.dot(sslab.reshape(BH, 14 * W), s7_ref[...],
                    preferred_element_type=jnp.float32)                # (BH, W)
    sm = jnp.mean(s_lin, keepdims=True)                                # (1, 1)
    sv = jnp.mean(s_lin * s_lin, keepdims=True) - sm * sm
    smask = jax.nn.sigmoid((s_lin - sm) * lax.rsqrt(sv + EPS) * gs_ref[...]
                           + bbs_ref[...])                             # (BH, W)
    of = o2 * jnp.dot(smask, e_hid_ref[...],
                      preferred_element_type=jnp.float32)              # (BH, WC)

    # ------------- conv_compress (1x1) + BN + residual + ReLU ----------------
    oc = jnp.dot(of.astype(jnp.bfloat16), wc_ref[...],
                 preferred_element_type=jnp.float32) + bc_ref[...]     # (BH, W*Cin)
    oc = _bn_dense(oc, gc_ref[...], bbc_ref[...],
                   p_in_ref[...], t_in_ref[...], n)
    out_ref[...] = jnp.maximum(oc + x, 0.0)


# ---------------------------------------------------------------------------
# Host-side weight preprocessing (block-diagonal / banded matrices, tilings)
# ---------------------------------------------------------------------------
def prepare_params(params, H, W):
    Cin, Chid = params["we"].shape
    WC = W * Chid
    WI = W * Cin

    npf = lambda a: np.asarray(a, dtype=np.float32)
    we, wm, wc, ws = npf(params["we"]), npf(params["wm"]), npf(params["wc"]), npf(params["ws"])

    # 1x1 convs as block-diagonal matmuls in the (w, c) lane layout.
    we_blk = np.zeros((WI, WC), np.float32)
    wc_blk = np.zeros((WC, WI), np.float32)
    for w in range(W):
        we_blk[w * Cin:(w + 1) * Cin, w * Chid:(w + 1) * Chid] = we
        wc_blk[w * Chid:(w + 1) * Chid, w * Cin:(w + 1) * Cin] = wc

    # 3x3 conv: stacked banded matrix (3*WC, WC); rows = (dh, w_in, c_in).
    m3 = np.zeros((3 * WC, WC), np.float32)
    for dh in range(3):
        for w in range(W):
            for dw in range(3):
                wp = w + dw - 1
                if 0 <= wp < W:
                    m3[dh * WC + wp * Chid:dh * WC + (wp + 1) * Chid,
                       w * Chid:(w + 1) * Chid] = wm[dh, dw]

    # 7x7 spatial conv: stacked banded matrix (7*2W, W);
    # lanes of its input are [mean(w=0..W-1), max(w=0..W-1)] per row window.
    ws_hwi = np.transpose(ws, (0, 1, 3, 2))[:, :, :, 0]        # (7, 7, 2): [dh,dw,c]
    s7 = np.zeros((7 * 2 * W, W), np.float32)
    for dh in range(7):
        for c in range(2):
            for w in range(W):
                for dw in range(7):
                    wp = w + dw - 3
                    if 0 <= wp < W:
                        s7[dh * 2 * W + c * W + wp, w] = ws_hwi[dh, dw, c]

    # 0/1 bookkeeping matrices between per-channel and (w, c) lane layouts.
    def sum_over_w(C):                 # (W*C, C): folds W copies of channel c
        p = np.zeros((W * C, C), np.float32)
        for w in range(W):
            for c in range(C):
                p[w * C + c, c] = 1.0
        return p

    def sum_over_c(C):                 # (W*C, W): folds C channels of column w
        q = np.zeros((W * C, W), np.float32)
        for w in range(W):
            for c in range(C):
                q[w * C + c, w] = 1.0
        return q

    p_hid = sum_over_w(Chid)
    q_hid = sum_over_c(Chid)
    p_in = sum_over_w(Cin)

    tile_w = lambda v: np.tile(npf(v).reshape(-1), W)[None, :]   # (1, W*C)

    return dict(
        we=jnp.asarray(we_blk, jnp.bfloat16),
        be=jnp.asarray(tile_w(params["be"])),
        ge=jnp.asarray(tile_w(params["ge"])),
        bbe=jnp.asarray(tile_w(params["bbe"])),
        m3=jnp.asarray(m3, jnp.bfloat16),
        bm=jnp.asarray(tile_w(params["bm"])),
        gm=jnp.asarray(tile_w(params["gm"])),
        bbm=jnp.asarray(tile_w(params["bbm"])),
        wa1=jnp.asarray(npf(params["wa1"])), wa2=jnp.asarray(npf(params["wa2"])),
        wx1=jnp.asarray(npf(params["wx1"])), wx2=jnp.asarray(npf(params["wx2"])),
        s7=jnp.asarray(s7),
        gs=jnp.asarray(npf(params["gs"])), bbs=jnp.asarray(npf(params["bbs"])),
        wc=jnp.asarray(wc_blk, jnp.bfloat16),
        bc=jnp.asarray(tile_w(params["bc"])),
        gc=jnp.asarray(tile_w(params["gc"])),
        bbc=jnp.asarray(tile_w(params["bbc"])),
        p_hid=jnp.asarray(p_hid), t_hid=jnp.asarray(p_hid.T.copy()),
        q_hid=jnp.asarray(q_hid), e_hid=jnp.asarray(q_hid.T.copy()),
        p_in=jnp.asarray(p_in), t_in=jnp.asarray(p_in.T.copy()),
    )


@functools.partial(jax.jit, static_argnames=("B", "H", "W", "Cin", "Chid"))
def _run(x_nchw, prep, *, B, H, W, Cin, Chid):
    # glue: NCHW -> lane-dense (B*H, W*Cin)
    x = jnp.transpose(x_nchw, (0, 2, 3, 1)).astype(jnp.float32)
    x_d = x.reshape(B * H, W * Cin)

    args = (x_d,
            prep["we"], prep["be"], prep["ge"], prep["bbe"],
            prep["m3"], prep["bm"], prep["gm"], prep["bbm"],
            prep["wa1"], prep["wa2"], prep["wx1"], prep["wx2"],
            prep["s7"], prep["gs"], prep["bbs"],
            prep["wc"], prep["bc"], prep["gc"], prep["bbc"],
            prep["p_hid"], prep["t_hid"], prep["q_hid"], prep["e_hid"],
            prep["p_in"], prep["t_in"])

    kern = functools.partial(resblock_kernel, B=B, H=H, W=W, Cin=Cin, Chid=Chid)
    out_d = pl.pallas_call(
        kern,
        out_shape=jax.ShapeDtypeStruct((B * H, W * Cin), jnp.float32),
        in_specs=[pl.BlockSpec(memory_space=pltpu.MemorySpace.VMEM)] * len(args),
        out_specs=pl.BlockSpec(memory_space=pltpu.MemorySpace.VMEM),
        compiler_params=pltpu.CompilerParams(
            vmem_limit_bytes=32 * 1024 * 1024),
    )(*args)

    # glue: lane-dense -> NCHW
    out = out_d.reshape(B, H, W, Cin)
    return jnp.transpose(out, (0, 3, 1, 2))


def residual_attn_block(x_nchw, params):
    B, Cin, H, W = x_nchw.shape
    Chid = params["we"].shape[1]
    prep = prepare_params(params, H, W)
    return _run(x_nchw, prep, B=B, H=H, W=W, Cin=Cin, Chid=Chid)


# ---------------------------------------------------------------------------
# Pure-JAX reference mirroring the PyTorch forward (train-mode BN, f32 math)
# ---------------------------------------------------------------------------
def reference(x_nchw, params):
    hi = lax.Precision.HIGHEST
    x = jnp.transpose(x_nchw, (0, 2, 3, 1)).astype(jnp.float32)

    def bn(t, g, b):
        axes = tuple(range(t.ndim - 1))
        m = jnp.mean(t, axis=axes, keepdims=True)
        v = jnp.mean((t - m) ** 2, axis=axes, keepdims=True)
        return (t - m) / jnp.sqrt(v + EPS) * g.reshape(-1) + b.reshape(-1)

    h = jnp.einsum("bhwc,cd->bhwd", x, params["we"], precision=hi) + params["be"].reshape(-1)
    h = jax.nn.relu(bn(h, params["ge"], params["bbe"]))
    h = lax.conv_general_dilated(h, params["wm"], (1, 1), "SAME",
                                 dimension_numbers=("NHWC", "HWIO", "NHWC"),
                                 precision=hi)
    h = h + params["bm"].reshape(-1)
    h = jax.nn.relu(bn(h, params["gm"], params["bbm"]))

    avg = jnp.mean(h, axis=(1, 2))
    mx = jnp.max(h, axis=(1, 2))
    a = jnp.dot(jax.nn.relu(jnp.dot(avg, params["wa1"], precision=hi)),
                params["wa2"], precision=hi)
    m = jnp.dot(jax.nn.relu(jnp.dot(mx, params["wx1"], precision=hi)),
                params["wx2"], precision=hi)
    cmask = jax.nn.sigmoid(a + m)[:, None, None, :]
    o = h * cmask
    mean_map = jnp.mean(o, axis=-1, keepdims=True)
    max_map = jnp.max(o, axis=-1, keepdims=True)
    sin = jnp.concatenate([mean_map, max_map], axis=-1)
    w_hwio = jnp.transpose(params["ws"], (0, 1, 3, 2))  # (7,7,2,1)
    s = lax.conv_general_dilated(sin, w_hwio, (1, 1), "SAME",
                                 dimension_numbers=("NHWC", "HWIO", "NHWC"),
                                 precision=hi)
    s = jax.nn.sigmoid(bn(s, params["gs"], params["bbs"]))
    o = o * s
    o = jnp.einsum("bhwc,cd->bhwd", o, params["wc"], precision=hi) + params["bc"].reshape(-1)
    o = bn(o, params["gc"], params["bbc"])
    o = jax.nn.relu(o + x)
    return jnp.transpose(o, (0, 3, 1, 2))


if __name__ == "__main__":
    B, Cin, H, W = 2, 4, 16, 16
    expansion = 2
    Chid = Cin * expansion
    r = max(1, Chid // 8)

    key = jax.random.PRNGKey(0)
    keys = iter(jax.random.split(key, 32))

    def rnd(shape, scale=0.2):
        return (scale * jax.random.normal(next(keys), shape)).astype(jnp.float32)

    params = dict(
        we=rnd((Cin, Chid)), be=rnd((1, Chid), 0.1),
        ge=1.0 + rnd((1, Chid), 0.1), bbe=rnd((1, Chid), 0.1),
        wm=rnd((3, 3, Chid, Chid)), bm=rnd((1, Chid), 0.1),
        gm=1.0 + rnd((1, Chid), 0.1), bbm=rnd((1, Chid), 0.1),
        wa1=rnd((Chid, r)), wa2=rnd((r, Chid)),
        wx1=rnd((Chid, r)), wx2=rnd((r, Chid)),
        ws=rnd((7, 7, 1, 2)),
        gs=1.0 + rnd((1, 1), 0.1), bbs=rnd((1, 1), 0.1),
        wc=rnd((Chid, Cin)), bc=rnd((1, Cin), 0.1),
        gc=1.0 + rnd((1, Cin), 0.1), bbc=rnd((1, Cin), 0.1),
    )
    x = rnd((B, Cin, H, W), 1.0)  # NCHW, like the PyTorch module's input

    out = residual_attn_block(x, params)
    out = jax.block_until_ready(out)

    ref_out = reference(x, params)
    err = float(jnp.max(jnp.abs(out - ref_out)))
    assert out.shape == (B, Cin, H, W)
    # bf16 MXU operands (f32 accumulation) -> typical max-abs error vs the
    # f32 reference is ~1e-2; the bound below leaves margin for tail cases.
    assert err < 1e-1, f"max abs error vs reference: {err}"
    print("KERNEL_OK")
</pallas_src>

<mosaic_0001>
module attributes {stable_mosaic.version = 11 : i64} {
  func.func @resblock_kernel(%arg0: memref<32x64xf32, #tpu.memory_space<vmem>>, %arg1: memref<64x128xbf16, #tpu.memory_space<vmem>>, %arg2: memref<1x128xf32, #tpu.memory_space<vmem>>, %arg3: memref<1x128xf32, #tpu.memory_space<vmem>>, %arg4: memref<1x128xf32, #tpu.memory_space<vmem>>, %arg5: memref<384x128xbf16, #tpu.memory_space<vmem>>, %arg6: memref<1x128xf32, #tpu.memory_space<vmem>>, %arg7: memref<1x128xf32, #tpu.memory_space<vmem>>, %arg8: memref<1x128xf32, #tpu.memory_space<vmem>>, %arg9: memref<8x1xf32, #tpu.memory_space<vmem>>, %arg10: memref<1x8xf32, #tpu.memory_space<vmem>>, %arg11: memref<8x1xf32, #tpu.memory_space<vmem>>, %arg12: memref<1x8xf32, #tpu.memory_space<vmem>>, %arg13: memref<224x16xf32, #tpu.memory_space<vmem>>, %arg14: memref<1x1xf32, #tpu.memory_space<vmem>>, %arg15: memref<1x1xf32, #tpu.memory_space<vmem>>, %arg16: memref<128x64xbf16, #tpu.memory_space<vmem>>, %arg17: memref<1x64xf32, #tpu.memory_space<vmem>>, %arg18: memref<1x64xf32, #tpu.memory_space<vmem>>, %arg19: memref<1x64xf32, #tpu.memory_space<vmem>>, %arg20: memref<128x8xf32, #tpu.memory_space<vmem>>, %arg21: memref<8x128xf32, #tpu.memory_space<vmem>>, %arg22: memref<128x16xf32, #tpu.memory_space<vmem>>, %arg23: memref<16x128xf32, #tpu.memory_space<vmem>>, %arg24: memref<64x4xf32, #tpu.memory_space<vmem>>, %arg25: memref<4x64xf32, #tpu.memory_space<vmem>>, %arg26: memref<32x64xf32, #tpu.memory_space<vmem>>) attributes {dimension_semantics = [], scalar_prefetch = 0 : i64, scratch_operands = 0 : i64, tpu.core_type = #tpu.core_type<tc>} {
    %c0 = arith.constant 0 : index
    %c0_0 = arith.constant 0 : index
    %0 = vector.load %arg0[%c0, %c0_0] : memref<32x64xf32, #tpu.memory_space<vmem>>, vector<32x64xf32>
    %c0_1 = arith.constant 0 : index
    %c0_2 = arith.constant 0 : index
    %1 = vector.load %arg20[%c0_1, %c0_2] : memref<128x8xf32, #tpu.memory_space<vmem>>, vector<128x8xf32>
    %c0_3 = arith.constant 0 : index
    %c0_4 = arith.constant 0 : index
    %2 = vector.load %arg21[%c0_3, %c0_4] : memref<8x128xf32, #tpu.memory_space<vmem>>, vector<8x128xf32>
    %3 = arith.truncf %0 : vector<32x64xf32> to vector<32x64xbf16>
    %c0_5 = arith.constant 0 : index
    %c0_6 = arith.constant 0 : index
    %4 = vector.load %arg1[%c0_5, %c0_6] : memref<64x128xbf16, #tpu.memory_space<vmem>>, vector<64x128xbf16>
    %cst = arith.constant dense<0.000000e+00> : vector<32x128xf32>
    %5 = tpu.matmul %3, %4, %cst {dimension_numbers = #tpu.dot_dimension_numbers<[1], [0], [0], [1], [0, 0, 1, 1], [], []>} : vector<32x64xbf16>, vector<64x128xbf16>, vector<32x128xf32> -> vector<32x128xf32>
    %c0_7 = arith.constant 0 : index
    %c0_8 = arith.constant 0 : index
    %6 = vector.load %arg2[%c0_7, %c0_8] : memref<1x128xf32, #tpu.memory_space<vmem>>, vector<1x128xf32>
    %7 = vector.broadcast %6 : vector<1x128xf32> to vector<32x128xf32>
    %8 = arith.addf %5, %7 : vector<32x128xf32>
    %c0_9 = arith.constant 0 : index
    %c0_10 = arith.constant 0 : index
    %9 = vector.load %arg3[%c0_9, %c0_10] : memref<1x128xf32, #tpu.memory_space<vmem>>, vector<1x128xf32>
    %c0_11 = arith.constant 0 : index
    %c0_12 = arith.constant 0 : index
    %10 = vector.load %arg4[%c0_11, %c0_12] : memref<1x128xf32, #tpu.memory_space<vmem>>, vector<1x128xf32>
    %cst_13 = arith.constant dense<0.000000e+00> : vector<128xf32>
    %11 = vector.multi_reduction <add>, %8, %cst_13 [0] : vector<32x128xf32> to vector<128xf32>
    %12 = vector.shape_cast %11 : vector<128xf32> to vector<1x128xf32>
    %13 = arith.mulf %8, %8 : vector<32x128xf32>
    %cst_14 = arith.constant dense<0.000000e+00> : vector<128xf32>
    %14 = vector.multi_reduction <add>, %13, %cst_14 [0] : vector<32x128xf32> to vector<128xf32>
    %15 = vector.shape_cast %14 : vector<128xf32> to vector<1x128xf32>
    %cst_15 = arith.constant dense<0.000000e+00> : vector<1x8xf32>
    %16 = tpu.matmul %12, %1, %cst_15 {dimension_numbers = #tpu.dot_dimension_numbers<[1], [0], [0], [1], [0, 0, 1, 1], [], []>} : vector<1x128xf32>, vector<128x8xf32>, vector<1x8xf32> -> vector<1x8xf32>
    %cst_16 = arith.constant dense<0.000000e+00> : vector<1x8xf32>
    %17 = tpu.matmul %15, %1, %cst_16 {dimension_numbers = #tpu.dot_dimension_numbers<[1], [0], [0], [1], [0, 0, 1, 1], [], []>} : vector<1x128xf32>, vector<128x8xf32>, vector<1x8xf32> -> vector<1x8xf32>
    %cst_17 = arith.constant 0.001953125 : f32
    %18 = vector.broadcast %cst_17 : f32 to vector<1x8xf32>
    %19 = arith.mulf %16, %18 : vector<1x8xf32>
    %cst_18 = arith.constant 0.001953125 : f32
    %20 = vector.broadcast %cst_18 : f32 to vector<1x8xf32>
    %21 = arith.mulf %17, %20 : vector<1x8xf32>
    %22 = arith.mulf %19, %19 : vector<1x8xf32>
    %23 = arith.subf %21, %22 : vector<1x8xf32>
    %cst_19 = arith.constant 9.99999974E-6 : f32
    %24 = vector.broadcast %cst_19 : f32 to vector<1x8xf32>
    %25 = arith.addf %23, %24 : vector<1x8xf32>
    %26 = math.rsqrt %25 : vector<1x8xf32>
    %cst_20 = arith.constant dense<0.000000e+00> : vector<1x128xf32>
    %27 = tpu.matmul %19, %2, %cst_20 {dimension_numbers = #tpu.dot_dimension_numbers<[1], [0], [0], [1], [0, 0, 1, 1], [], []>} : vector<1x8xf32>, vector<8x128xf32>, vector<1x128xf32> -> vector<1x128xf32>
    %cst_21 = arith.constant dense<0.000000e+00> : vector<1x128xf32>
    %28 = tpu.matmul %26, %2, %cst_21 {dimension_numbers = #tpu.dot_dimension_numbers<[1], [0], [0], [1], [0, 0, 1, 1], [], []>} : vector<1x8xf32>, vector<8x128xf32>, vector<1x128xf32> -> vector<1x128xf32>
    %29 = vector.broadcast %27 : vector<1x128xf32> to vector<32x128xf32>
    %30 = arith.subf %8, %29 : vector<32x128xf32>
    %31 = vector.broadcast %28 : vector<1x128xf32> to vector<32x128xf32>
    %32 = arith.mulf %30, %31 : vector<32x128xf32>
    %33 = vector.broadcast %9 : vector<1x128xf32> to vector<32x128xf32>
    %34 = arith.mulf %32, %33 : vector<32x128xf32>
    %35 = vector.broadcast %10 : vector<1x128xf32> to vector<32x128xf32>
    %36 = arith.addf %34, %35 : vector<32x128xf32>
    %cst_22 = arith.constant 0.000000e+00 : f32
    %37 = vector.broadcast %cst_22 : f32 to vector<32x128xf32>
    %38 = arith.maximumf %36, %37 : vector<32x128xf32>
    %39 = vector.shape_cast %38 : vector<32x128xf32> to vector<2x16x128xf32>
    %cst_23 = arith.constant 0.000000e+00 : f32
    %40 = vector.broadcast %cst_23 : f32 to vector<2x1x128xf32>
    %41 = tpu.concatenate %40, %39, %40 in 1 : vector<2x1x128xf32>, vector<2x16x128xf32>, vector<2x1x128xf32> -> vector<2x18x128xf32>
    %42 = vector.extract_strided_slice %41 {offsets = [0, 0, 0], sizes = [2, 16, 128], strides = [1, 1, 1]} : vector<2x18x128xf32> to vector<2x16x128xf32>
    %43 = vector.extract_strided_slice %41 {offsets = [0, 1, 0], sizes = [2, 16, 128], strides = [1, 1, 1]} : vector<2x18x128xf32> to vector<2x16x128xf32>
    %44 = vector.extract_strided_slice %41 {offsets = [0, 2, 0], sizes = [2, 16, 128], strides = [1, 1, 1]} : vector<2x18x128xf32> to vector<2x16x128xf32>
    %45 = tpu.concatenate %42, %43, %44 in 2 : vector<2x16x128xf32>, vector<2x16x128xf32>, vector<2x16x128xf32> -> vector<2x16x384xf32>
    %46 = vector.shape_cast %45 : vector<2x16x384xf32> to vector<32x384xf32>
    %47 = arith.truncf %46 : vector<32x384xf32> to vector<32x384xbf16>
    %c0_24 = arith.constant 0 : index
    %c0_25 = arith.constant 0 : index
    %48 = vector.load %arg5[%c0_24, %c0_25] : memref<384x128xbf16, #tpu.memory_space<vmem>>, vector<384x128xbf16>
    %cst_26 = arith.constant dense<0.000000e+00> : vector<32x128xf32>
    %49 = tpu.matmul %47, %48, %cst_26 {dimension_numbers = #tpu.dot_dimension_numbers<[1], [0], [0], [1], [0, 0, 1, 1], [], []>} : vector<32x384xbf16>, vector<384x128xbf16>, vector<32x128xf32> -> vector<32x128xf32>
    %c0_27 = arith.constant 0 : index
    %c0_28 = arith.constant 0 : index
    %50 = vector.load %arg6[%c0_27, %c0_28] : memref<1x128xf32, #tpu.memory_space<vmem>>, vector<1x128xf32>
    %51 = vector.broadcast %50 : vector<1x128xf32> to vector<32x128xf32>
    %52 = arith.addf %49, %51 : vector<32x128xf32>
    %c0_29 = arith.constant 0 : index
    %c0_30 = arith.constant 0 : index
    %53 = vector.load %arg7[%c0_29, %c0_30] : memref<1x128xf32, #tpu.memory_space<vmem>>, vector<1x128xf32>
    %c0_31 = arith.constant 0 : index
    %c0_32 = arith.constant 0 : index
    %54 = vector.load %arg8[%c0_31, %c0_32] : memref<1x128xf32, #tpu.memory_space<vmem>>, vector<1x128xf32>
    %cst_33 = arith.constant dense<0.000000e+00> : vector<128xf32>
    %55 = vector.multi_reduction <add>, %52, %cst_33 [0] : vector<32x128xf32> to vector<128xf32>
    %56 = vector.shape_cast %55 : vector<128xf32> to vector<1x128xf32>
    %57 = arith.mulf %52, %52 : vector<32x128xf32>
    %cst_34 = arith.constant dense<0.000000e+00> : vector<128xf32>
    %58 = vector.multi_reduction <add>, %57, %cst_34 [0] : vector<32x128xf32> to vector<128xf32>
    %59 = vector.shape_cast %58 : vector<128xf32> to vector<1x128xf32>
    %cst_35 = arith.constant dense<0.000000e+00> : vector<1x8xf32>
    %60 = tpu.matmul %56, %1, %cst_35 {dimension_numbers = #tpu.dot_dimension_numbers<[1], [0], [0], [1], [0, 0, 1, 1], [], []>} : vector<1x128xf32>, vector<128x8xf32>, vector<1x8xf32> -> vector<1x8xf32>
    %cst_36 = arith.constant dense<0.000000e+00> : vector<1x8xf32>
    %61 = tpu.matmul %59, %1, %cst_36 {dimension_numbers = #tpu.dot_dimension_numbers<[1], [0], [0], [1], [0, 0, 1, 1], [], []>} : vector<1x128xf32>, vector<128x8xf32>, vector<1x8xf32> -> vector<1x8xf32>
    %cst_37 = arith.constant 0.001953125 : f32
    %62 = vector.broadcast %cst_37 : f32 to vector<1x8xf32>
    %63 = arith.mulf %60, %62 : vector<1x8xf32>
    %cst_38 = arith.constant 0.001953125 : f32
    %64 = vector.broadcast %cst_38 : f32 to vector<1x8xf32>
    %65 = arith.mulf %61, %64 : vector<1x8xf32>
    %66 = arith.mulf %63, %63 : vector<1x8xf32>
    %67 = arith.subf %65, %66 : vector<1x8xf32>
    %cst_39 = arith.constant 9.99999974E-6 : f32
    %68 = vector.broadcast %cst_39 : f32 to vector<1x8xf32>
    %69 = arith.addf %67, %68 : vector<1x8xf32>
    %70 = math.rsqrt %69 : vector<1x8xf32>
    %cst_40 = arith.constant dense<0.000000e+00> : vector<1x128xf32>
    %71 = tpu.matmul %63, %2, %cst_40 {dimension_numbers = #tpu.dot_dimension_numbers<[1], [0], [0], [1], [0, 0, 1, 1], [], []>} : vector<1x8xf32>, vector<8x128xf32>, vector<1x128xf32> -> vector<1x128xf32>
    %cst_41 = arith.constant dense<0.000000e+00> : vector<1x128xf32>
    %72 = tpu.matmul %70, %2, %cst_41 {dimension_numbers = #tpu.dot_dimension_numbers<[1], [0], [0], [1], [0, 0, 1, 1], [], []>} : vector<1x8xf32>, vector<8x128xf32>, vector<1x128xf32> -> vector<1x128xf32>
    %73 = vector.broadcast %71 : vector<1x128xf32> to vector<32x128xf32>
    %74 = arith.subf %52, %73 : vector<32x128xf32>
    %75 = vector.broadcast %72 : vector<1x128xf32> to vector<32x128xf32>
    %76 = arith.mulf %74, %75 : vector<32x128xf32>
    %77 = vector.broadcast %53 : vector<1x128xf32> to vector<32x128xf32>
    %78 = arith.mulf %76, %77 : vector<32x128xf32>
    %79 = vector.broadcast %54 : vector<1x128xf32> to vector<32x128xf32>
    %80 = arith.addf %78, %79 : vector<32x128xf32>
    %cst_42 = arith.constant 0.000000e+00 : f32
    %81 = vector.broadcast %cst_42 : f32 to vector<32x128xf32>
    %82 = arith.maximumf %80, %81 : vector<32x128xf32>
    %83 = vector.shape_cast %82 : vector<32x128xf32> to vector<2x16x128xf32>
    %cst_43 = arith.constant dense<0.000000e+00> : vector<2x128xf32>
    %84 = vector.multi_reduction <add>, %83, %cst_43 [1] : vector<2x16x128xf32> to vector<2x128xf32>
    %cst_44 = arith.constant dense<0.000000e+00> : vector<2x8xf32>
    %85 = tpu.matmul %84, %1, %cst_44 {dimension_numbers = #tpu.dot_dimension_numbers<[1], [0], [0], [1], [0, 0, 1, 1], [], []>} : vector<2x128xf32>, vector<128x8xf32>, vector<2x8xf32> -> vector<2x8xf32>
    %cst_45 = arith.constant 3.906250e-03 : f32
    %86 = vector.broadcast %cst_45 : f32 to vector<2x8xf32>
    %87 = arith.mulf %85, %86 : vector<2x8xf32>
    %cst_46 = arith.constant dense<0xFF800000> : vector<2x128xf32>
    %88 = vector.multi_reduction <maximumf>, %83, %cst_46 [1] : vector<2x16x128xf32> to vector<2x128xf32>
    %89 = vector.shape_cast %88 : vector<2x128xf32> to vector<2x16x8xf32>
    %cst_47 = arith.constant dense<0xFF800000> : vector<2x8xf32>
    %90 = vector.multi_reduction <maximumf>, %89, %cst_47 [1] : vector<2x16x8xf32> to vector<2x8xf32>
    %c0_48 = arith.constant 0 : index
    %c0_49 = arith.constant 0 : index
    %91 = vector.load %arg9[%c0_48, %c0_49] : memref<8x1xf32, #tpu.memory_space<vmem>>, vector<8x1xf32>
    %cst_50 = arith.constant dense<0.000000e+00> : vector<2x1xf32>
    %92 = tpu.matmul %87, %91, %cst_50 {dimension_numbers = #tpu.dot_dimension_numbers<[1], [0], [0], [1], [0, 0, 1, 1], [], []>} : vector<2x8xf32>, vector<8x1xf32>, vector<2x1xf32> -> vector<2x1xf32>
    %cst_51 = arith.constant 0.000000e+00 : f32
    %93 = vector.broadcast %cst_51 : f32 to vector<2x1xf32>
    %94 = arith.maximumf %92, %93 : vector<2x1xf32>
    %c0_52 = arith.constant 0 : index
    %c0_53 = arith.constant 0 : index
    %95 = vector.load %arg10[%c0_52, %c0_53] : memref<1x8xf32, #tpu.memory_space<vmem>>, vector<1x8xf32>
    %cst_54 = arith.constant dense<0.000000e+00> : vector<2x8xf32>
    %96 = tpu.matmul %94, %95, %cst_54 {dimension_numbers = #tpu.dot_dimension_numbers<[1], [0], [0], [1], [0, 0, 1, 1], [], []>} : vector<2x1xf32>, vector<1x8xf32>, vector<2x8xf32> -> vector<2x8xf32>
    %c0_55 = arith.constant 0 : index
    %c0_56 = arith.constant 0 : index
    %97 = vector.load %arg11[%c0_55, %c0_56] : memref<8x1xf32, #tpu.memory_space<vmem>>, vector<8x1xf32>
    %cst_57 = arith.constant dense<0.000000e+00> : vector<2x1xf32>
    %98 = tpu.matmul %90, %97, %cst_57 {dimension_numbers = #tpu.dot_dimension_numbers<[1], [0], [0], [1], [0, 0, 1, 1], [], []>} : vector<2x8xf32>, vector<8x1xf32>, vector<2x1xf32> -> vector<2x1xf32>
    %cst_58 = arith.constant 0.000000e+00 : f32
    %99 = vector.broadcast %cst_58 : f32 to vector<2x1xf32>
    %100 = arith.maximumf %98, %99 : vector<2x1xf32>
    %c0_59 = arith.constant 0 : index
    %c0_60 = arith.constant 0 : index
    %101 = vector.load %arg12[%c0_59, %c0_60] : memref<1x8xf32, #tpu.memory_space<vmem>>, vector<1x8xf32>
    %cst_61 = arith.constant dense<0.000000e+00> : vector<2x8xf32>
    %102 = tpu.matmul %100, %101, %cst_61 {dimension_numbers = #tpu.dot_dimension_numbers<[1], [0], [0], [1], [0, 0, 1, 1], [], []>} : vector<2x1xf32>, vector<1x8xf32>, vector<2x8xf32> -> vector<2x8xf32>
    %103 = arith.addf %96, %102 : vector<2x8xf32>
    %104 = arith.negf %103 : vector<2x8xf32>
    %105 = math.exp %104 : vector<2x8xf32>
    %cst_62 = arith.constant 1.000000e+00 : f32
    %106 = vector.broadcast %cst_62 : f32 to vector<2x8xf32>
    %107 = arith.addf %106, %105 : vector<2x8xf32>
    %108 = arith.divf %106, %107 : vector<2x8xf32>
    %cst_63 = arith.constant dense<0.000000e+00> : vector<2x128xf32>
    %109 = tpu.matmul %108, %2, %cst_63 {dimension_numbers = #tpu.dot_dimension_numbers<[1], [0], [0], [1], [0, 0, 1, 1], [], []>} : vector<2x8xf32>, vector<8x128xf32>, vector<2x128xf32> -> vector<2x128xf32>
    %110 = vector.shape_cast %109 : vector<2x128xf32> to vector<2x1x128xf32>
    %111 = vector.broadcast %110 : vector<2x1x128xf32> to vector<2x16x128xf32>
    %112 = arith.mulf %83, %111 : vector<2x16x128xf32>
    %113 = vector.shape_cast %112 : vector<2x16x128xf32> to vector<32x128xf32>
    %c0_64 = arith.constant 0 : index
    %c0_65 = arith.constant 0 : index
    %114 = vector.load %arg22[%c0_64, %c0_65] : memref<128x16xf32, #tpu.memory_space<vmem>>, vector<128x16xf32>
    %cst_66 = arith.constant dense<0.000000e+00> : vector<32x16xf32>
    %115 = tpu.matmul %113, %114, %cst_66 {dimension_numbers = #tpu.dot_dimension_numbers<[1], [0], [0], [1], [0, 0, 1, 1], [], []>} : vector<32x128xf32>, vector<128x16xf32>, vector<32x16xf32> -> vector<32x16xf32>
    %cst_67 = arith.constant 1.250000e-01 : f32
    %116 = vector.broadcast %cst_67 : f32 to vector<32x16xf32>
    %117 = arith.mulf %115, %116 : vector<32x16xf32>
    %118 = vector.shape_cast %113 : vector<32x128xf32> to vector<32x16x8xf32>
    %cst_68 = arith.constant dense<0xFF800000> : vector<32x16xf32>
    %119 = vector.multi_reduction <maximumf>, %118, %cst_68 [2] : vector<32x16x8xf32> to vector<32x16xf32>
    %120 = tpu.concatenate %117, %119 in 1 : vector<32x16xf32>, vector<32x16xf32> -> vector<32x32xf32>
    %121 = vector.shape_cast %120 : vector<32x32xf32> to vector<2x16x32xf32>
    %cst_69 = arith.constant 0.000000e+00 : f32
    %122 = vector.broadcast %cst_69 : f32 to vector<2x3x32xf32>
    %123 = tpu.concatenate %122, %121, %122 in 1 : vector<2x3x32xf32>, vector<2x16x32xf32>, vector<2x3x32xf32> -> vector<2x22x32xf32>
    %124 = vector.extract_strided_slice %123 {offsets = [0, 0, 0], sizes = [2, 16, 32], strides = [1, 1, 1]} : vector<2x22x32xf32> to vector<2x16x32xf32>
    %125 = vector.extract_strided_slice %123 {offsets = [0, 1, 0], sizes = [2, 16, 32], strides = [1, 1, 1]} : vector<2x22x32xf32> to vector<2x16x32xf32>
    %126 = vector.extract_strided_slice %123 {offsets = [0, 2, 0], sizes = [2, 16, 32], strides = [1, 1, 1]} : vector<2x22x32xf32> to vector<2x16x32xf32>
    %127 = vector.extract_strided_slice %123 {offsets = [0, 3, 0], sizes = [2, 16, 32], strides = [1, 1, 1]} : vector<2x22x32xf32> to vector<2x16x32xf32>
    %128 = vector.extract_strided_slice %123 {offsets = [0, 4, 0], sizes = [2, 16, 32], strides = [1, 1, 1]} : vector<2x22x32xf32> to vector<2x16x32xf32>
    %129 = vector.extract_strided_slice %123 {offsets = [0, 5, 0], sizes = [2, 16, 32], strides = [1, 1, 1]} : vector<2x22x32xf32> to vector<2x16x32xf32>
    %130 = vector.extract_strided_slice %123 {offsets = [0, 6, 0], sizes = [2, 16, 32], strides = [1, 1, 1]} : vector<2x22x32xf32> to vector<2x16x32xf32>
    %131 = tpu.concatenate %124, %125, %126, %127, %128, %129, %130 in 2 : vector<2x16x32xf32>, vector<2x16x32xf32>, vector<2x16x32xf32>, vector<2x16x32xf32>, vector<2x16x32xf32>, vector<2x16x32xf32>, vector<2x16x32xf32> -> vector<2x16x224xf32>
    %132 = vector.shape_cast %131 : vector<2x16x224xf32> to vector<32x224xf32>
    %c0_70 = arith.constant 0 : index
    %c0_71 = arith.constant 0 : index
    %133 = vector.load %arg13[%c0_70, %c0_71] : memref<224x16xf32, #tpu.memory_space<vmem>>, vector<224x16xf32>
    %cst_72 = arith.constant dense<0.000000e+00> : vector<32x16xf32>
    %134 = tpu.matmul %132, %133, %cst_72 {dimension_numbers = #tpu.dot_dimension_numbers<[1], [0], [0], [1], [0, 0, 1, 1], [], []>} : vector<32x224xf32>, vector<224x16xf32>, vector<32x16xf32> -> vector<32x16xf32>
    %135 = vector.shape_cast %134 : vector<32x16xf32> to vector<1x32x16xf32>
    %cst_73 = arith.constant dense<0.000000e+00> : vector<1xf32>
    %136 = vector.multi_reduction <add>, %135, %cst_73 [1, 2] : vector<1x32x16xf32> to vector<1xf32>
    %137 = vector.shape_cast %136 : vector<1xf32> to vector<1x1x1xf32>
    %138 = vector.extract %137[0, 0, 0] : f32 from vector<1x1x1xf32>
    %139 = vector.broadcast %138 : f32 to vector<1x1xf32>
    %cst_74 = arith.constant 5.120000e+02 : f32
    %140 = vector.broadcast %cst_74 : f32 to vector<1x1xf32>
    %141 = arith.divf %139, %140 : vector<1x1xf32>
    %142 = arith.mulf %134, %134 : vector<32x16xf32>
    %143 = vector.shape_cast %142 : vector<32x16xf32> to vector<1x32x16xf32>
    %cst_75 = arith.constant dense<0.000000e+00> : vector<1xf32>
    %144 = vector.multi_reduction <add>, %143, %cst_75 [1, 2] : vector<1x32x16xf32> to vector<1xf32>
    %145 = vector.shape_cast %144 : vector<1xf32> to vector<1x1x1xf32>
    %146 = vector.extract %145[0, 0, 0] : f32 from vector<1x1x1xf32>
    %147 = vector.broadcast %146 : f32 to vector<1x1xf32>
    %cst_76 = arith.constant 5.120000e+02 : f32
    %148 = vector.broadcast %cst_76 : f32 to vector<1x1xf32>
    %149 = arith.divf %147, %148 : vector<1x1xf32>
    %150 = arith.mulf %141, %141 : vector<1x1xf32>
    %151 = arith.subf %149, %150 : vector<1x1xf32>
    %152 = vector.broadcast %141 : vector<1x1xf32> to vector<32x16xf32>
    %153 = arith.subf %134, %152 : vector<32x16xf32>
    %cst_77 = arith.constant 9.99999974E-6 : f32
    %154 = vector.broadcast %cst_77 : f32 to vector<1x1xf32>
    %155 = arith.addf %151, %154 : vector<1x1xf32>
    %156 = math.rsqrt %155 : vector<1x1xf32>
    %157 = vector.broadcast %156 : vector<1x1xf32> to vector<32x16xf32>
    %158 = arith.mulf %153, %157 : vector<32x16xf32>
    %c0_78 = arith.constant 0 : index
    %c0_79 = arith.constant 0 : index
    %159 = vector.load %arg14[%c0_78, %c0_79] : memref<1x1xf32, #tpu.memory_space<vmem>>, vector<1x1xf32>
    %160 = vector.broadcast %159 : vector<1x1xf32> to vector<32x16xf32>
    %161 = arith.mulf %158, %160 : vector<32x16xf32>
    %c0_80 = arith.constant 0 : index
    %c0_81 = arith.constant 0 : index
    %162 = vector.load %arg15[%c0_80, %c0_81] : memref<1x1xf32, #tpu.memory_space<vmem>>, vector<1x1xf32>
    %163 = vector.broadcast %162 : vector<1x1xf32> to vector<32x16xf32>
    %164 = arith.addf %161, %163 : vector<32x16xf32>
    %165 = arith.negf %164 : vector<32x16xf32>
    %166 = math.exp %165 : vector<32x16xf32>
    %cst_82 = arith.constant 1.000000e+00 : f32
    %167 = vector.broadcast %cst_82 : f32 to vector<32x16xf32>
    %168 = arith.addf %167, %166 : vector<32x16xf32>
    %169 = arith.divf %167, %168 : vector<32x16xf32>
    %c0_83 = arith.constant 0 : index
    %c0_84 = arith.constant 0 : index
    %170 = vector.load %arg23[%c0_83, %c0_84] : memref<16x128xf32, #tpu.memory_space<vmem>>, vector<16x128xf32>
    %cst_85 = arith.constant dense<0.000000e+00> : vector<32x128xf32>
    %171 = tpu.matmul %169, %170, %cst_85 {dimension_numbers = #tpu.dot_dimension_numbers<[1], [0], [0], [1], [0, 0, 1, 1], [], []>} : vector<32x16xf32>, vector<16x128xf32>, vector<32x128xf32> -> vector<32x128xf32>
    %172 = arith.mulf %113, %171 : vector<32x128xf32>
    %173 = arith.truncf %172 : vector<32x128xf32> to vector<32x128xbf16>
    %c0_86 = arith.constant 0 : index
    %c0_87 = arith.constant 0 : index
    %174 = vector.load %arg16[%c0_86, %c0_87] : memref<128x64xbf16, #tpu.memory_space<vmem>>, vector<128x64xbf16>
    %cst_88 = arith.constant dense<0.000000e+00> : vector<32x64xf32>
    %175 = tpu.matmul %173, %174, %cst_88 {dimension_numbers = #tpu.dot_dimension_numbers<[1], [0], [0], [1], [0, 0, 1, 1], [], []>} : vector<32x128xbf16>, vector<128x64xbf16>, vector<32x64xf32> -> vector<32x64xf32>
    %c0_89 = arith.constant 0 : index
    %c0_90 = arith.constant 0 : index
    %176 = vector.load %arg17[%c0_89, %c0_90] : memref<1x64xf32, #tpu.memory_space<vmem>>, vector<1x64xf32>
    %177 = vector.broadcast %176 : vector<1x64xf32> to vector<32x64xf32>
    %178 = arith.addf %175, %177 : vector<32x64xf32>
    %c0_91 = arith.constant 0 : index
    %c0_92 = arith.constant 0 : index
    %179 = vector.load %arg18[%c0_91, %c0_92] : memref<1x64xf32, #tpu.memory_space<vmem>>, vector<1x64xf32>
    %c0_93 = arith.constant 0 : index
    %c0_94 = arith.constant 0 : index
    %180 = vector.load %arg19[%c0_93, %c0_94] : memref<1x64xf32, #tpu.memory_space<vmem>>, vector<1x64xf32>
    %c0_95 = arith.constant 0 : index
    %c0_96 = arith.constant 0 : index
    %181 = vector.load %arg24[%c0_95, %c0_96] : memref<64x4xf32, #tpu.memory_space<vmem>>, vector<64x4xf32>
    %c0_97 = arith.constant 0 : index
    %c0_98 = arith.constant 0 : index
    %182 = vector.load %arg25[%c0_97, %c0_98] : memref<4x64xf32, #tpu.memory_space<vmem>>, vector<4x64xf32>
    %cst_99 = arith.constant dense<0.000000e+00> : vector<64xf32>
    %183 = vector.multi_reduction <add>, %178, %cst_99 [0] : vector<32x64xf32> to vector<64xf32>
    %184 = vector.shape_cast %183 : vector<64xf32> to vector<1x64xf32>
    %185 = arith.mulf %178, %178 : vector<32x64xf32>
    %cst_100 = arith.constant dense<0.000000e+00> : vector<64xf32>
    %186 = vector.multi_reduction <add>, %185, %cst_100 [0] : vector<32x64xf32> to vector<64xf32>
    %187 = vector.shape_cast %186 : vector<64xf32> to vector<1x64xf32>
    %cst_101 = arith.constant dense<0.000000e+00> : vector<1x4xf32>
    %188 = tpu.matmul %184, %181, %cst_101 {dimension_numbers = #tpu.dot_dimension_numbers<[1], [0], [0], [1], [0, 0, 1, 1], [], []>} : vector<1x64xf32>, vector<64x4xf32>, vector<1x4xf32> -> vector<1x4xf32>
    %cst_102 = arith.constant dense<0.000000e+00> : vector<1x4xf32>
    %189 = tpu.matmul %187, %181, %cst_102 {dimension_numbers = #tpu.dot_dimension_numbers<[1], [0], [0], [1], [0, 0, 1, 1], [], []>} : vector<1x64xf32>, vector<64x4xf32>, vector<1x4xf32> -> vector<1x4xf32>
    %cst_103 = arith.constant 0.001953125 : f32
    %190 = vector.broadcast %cst_103 : f32 to vector<1x4xf32>
    %191 = arith.mulf %188, %190 : vector<1x4xf32>
    %cst_104 = arith.constant 0.001953125 : f32
    %192 = vector.broadcast %cst_104 : f32 to vector<1x4xf32>
    %193 = arith.mulf %189, %192 : vector<1x4xf32>
    %194 = arith.mulf %191, %191 : vector<1x4xf32>
    %195 = arith.subf %193, %194 : vector<1x4xf32>
    %cst_105 = arith.constant 9.99999974E-6 : f32
    %196 = vector.broadcast %cst_105 : f32 to vector<1x4xf32>
    %197 = arith.addf %195, %196 : vector<1x4xf32>
    %198 = math.rsqrt %197 : vector<1x4xf32>
    %cst_106 = arith.constant dense<0.000000e+00> : vector<1x64xf32>
    %199 = tpu.matmul %191, %182, %cst_106 {dimension_numbers = #tpu.dot_dimension_numbers<[1], [0], [0], [1], [0, 0, 1, 1], [], []>} : vector<1x4xf32>, vector<4x64xf32>, vector<1x64xf32> -> vector<1x64xf32>
    %cst_107 = arith.constant dense<0.000000e+00> : vector<1x64xf32>
    %200 = tpu.matmul %198, %182, %cst_107 {dimension_numbers = #tpu.dot_dimension_numbers<[1], [0], [0], [1], [0, 0, 1, 1], [], []>} : vector<1x4xf32>, vector<4x64xf32>, vector<1x64xf32> -> vector<1x64xf32>
    %201 = vector.broadcast %199 : vector<1x64xf32> to vector<32x64xf32>
    %202 = arith.subf %178, %201 : vector<32x64xf32>
    %203 = vector.broadcast %200 : vector<1x64xf32> to vector<32x64xf32>
    %204 = arith.mulf %202, %203 : vector<32x64xf32>
    %205 = vector.broadcast %179 : vector<1x64xf32> to vector<32x64xf32>
    %206 = arith.mulf %204, %205 : vector<32x64xf32>
    %207 = vector.broadcast %180 : vector<1x64xf32> to vector<32x64xf32>
    %208 = arith.addf %206, %207 : vector<32x64xf32>
    %209 = arith.addf %208, %0 : vector<32x64xf32>
    %cst_108 = arith.constant 0.000000e+00 : f32
    %210 = vector.broadcast %cst_108 : f32 to vector<32x64xf32>
    %211 = arith.maximumf %209, %210 : vector<32x64xf32>
    %c0_109 = arith.constant 0 : index
    %c0_110 = arith.constant 0 : index
    %212 = vector.load %arg26[%c0_109, %c0_110] : memref<32x64xf32, #tpu.memory_space<vmem>>, vector<32x64xf32>
    tpu.vector_store %arg26[%c0_109, %c0_110], %211 {strides = array<i32>} : memref<32x64xf32, #tpu.memory_space<vmem>>, vector<32x64xf32>,
    return
  }
}

</mosaic_0001>

<llo_original>
// kernel: _run.1
$region0: #{_run.1}
  #allocation0 [shape = 'u32[]', space=smem, size = 0x4, offset = 0x4, fixed_abs, tag = 'smem constant byte address 0x4 - core index']
  #allocation1 [shape = 'u32[144,128]{1,0:T(1,128)}', space=vmem, size = 0x12000, scoped, tag = 'internal scratch']
  #allocation2 [shape = 'f32[1,1]{1,0:T(1,128)S(1)}', space=vmem, size = 0x200, scoped, tag = 'scoped memory for _run.1']
  #allocation3 [shape = 'f32[1,1]{1,0:T(1,128)S(1)}', space=vmem, size = 0x200, scoped, tag = 'scoped memory for _run.1']
  %s0 = inlined_call_operand.vmem [shape: f32[32,64], index: 0, kind: input, shape index: {}]
  %s1 = inlined_call_operand.vmem [shape: bf16[64,128], index: 1, kind: input, shape index: {}]
  %s2 = inlined_call_operand.vmem [shape: f32[1,128], index: 2, kind: input, shape index: {}]
  %s3 = inlined_call_operand.vmem [shape: f32[1,128], index: 3, kind: input, shape index: {}]
  %s4 = inlined_call_operand.vmem [shape: f32[1,128], index: 4, kind: input, shape index: {}]
  %s5 = inlined_call_operand.vmem [shape: bf16[384,128], index: 5, kind: input, shape index: {}]
  %s6 = inlined_call_operand.vmem [shape: f32[1,128], index: 6, kind: input, shape index: {}]
  %s7 = inlined_call_operand.vmem [shape: f32[1,128], index: 7, kind: input, shape index: {}]
  %s8 = inlined_call_operand.vmem [shape: f32[1,128], index: 8, kind: input, shape index: {}]
  %s9 = inlined_call_operand.vmem [shape: f32[8,1], index: 9, kind: input, shape index: {}]
  %s10 = inlined_call_operand.vmem [shape: f32[1,8], index: 10, kind: input, shape index: {}]
  %s11 = inlined_call_operand.vmem [shape: f32[8,1], index: 11, kind: input, shape index: {}]
  %s12 = inlined_call_operand.vmem [shape: f32[1,8], index: 12, kind: input, shape index: {}]
  %s13 = inlined_call_operand.vmem [shape: f32[224,16], index: 13, kind: input, shape index: {}]
  %s14 = inlined_call_operand.<no memory space> [shape: f32[1,1], index: 14, kind: input, shape index: {}]
  %s15 = inlined_call_operand.<no memory space> [shape: f32[1,1], index: 15, kind: input, shape index: {}]
  %s16 = inlined_call_operand.vmem [shape: bf16[128,64], index: 16, kind: input, shape index: {}]
  %s17 = inlined_call_operand.vmem [shape: f32[1,64], index: 17, kind: input, shape index: {}]
  %s18 = inlined_call_operand.vmem [shape: f32[1,64], index: 18, kind: input, shape index: {}]
  %s19 = inlined_call_operand.vmem [shape: f32[1,64], index: 19, kind: input, shape index: {}]
  %s20 = inlined_call_operand.vmem [shape: f32[128,8], index: 20, kind: input, shape index: {}]
  %s21 = inlined_call_operand.vmem [shape: f32[8,128], index: 21, kind: input, shape index: {}]
  %s22 = inlined_call_operand.vmem [shape: f32[128,16], index: 22, kind: input, shape index: {}]
  %s23 = inlined_call_operand.vmem [shape: f32[16,128], index: 23, kind: input, shape index: {}]
  %s24 = inlined_call_operand.vmem [shape: f32[64,4], index: 24, kind: input, shape index: {}]
  %s25 = inlined_call_operand.vmem [shape: f32[4,64], index: 25, kind: input, shape index: {}]
  %s26 = inlined_call_operand.vmem [shape: f32[32,64], index: 26, kind: output, shape index: {}]
  %s27 = sld [smem:[#allocation0]]
  $region114: #{_run.1} parent=0
    _
  %s29 = ssub.s32 1, %s27
  %s30 = scalar_select 0, %s29, %s27
  %v31 = vstv %s14
  %32 = vst [vmem:[#allocation2] sm:$0x1] %v31
  %v33 = vstv %s15
  %34 = vst [vmem:[#allocation3] sm:$0x1] %v33
  // Predicated region
  $region2: #{_run.1} parent=0 // pred_check
    _
  $region3: #{_run.1} parent=0 // pred_check_branch
    %36 = sbr.rel (0) target = $region5
  $region4: #{_run.1} parent=0 // pred_region
    _
  $region5: #{_run.1} parent=0 // pred_fallthru
    _
  // Predicated region
  $region6: #{_run.1} parent=0 // pred_check
    _
  $region7: #{_run.1} parent=0 // pred_check_branch
    %38 = sbr.rel (0) target = $region9
  $region8: #{_run.1} parent=0 // pred_region
    _
  $region9: #{_run.1} parent=0 // pred_fallthru
    _
  // Predicated region
  $region10: #{_run.1} parent=0 // pred_check
    _
  $region11: #{_run.1} parent=0 // pred_check_branch
    %40 = sbr.rel (0) target = $region13
  $region12: #{_run.1} parent=0 // pred_region
    _
  $region13: #{_run.1} parent=0 // pred_fallthru
    _
  // Predicated region
  $region14: #{_run.1} parent=0 // pred_check
    _
  $region15: #{_run.1} parent=0 // pred_check_branch
    %42 = sbr.rel (0) target = $region17
  $region16: #{_run.1} parent=0 // pred_region
    _
  $region17: #{_run.1} parent=0 // pred_fallthru
    _
  // Predicated region
  $region18: #{_run.1} parent=0 // pred_check
    _
  $region19: #{_run.1} parent=0 // pred_check_branch
    %44 = sbr.rel (0) target = $region21
  $region20: #{_run.1} parent=0 // pred_region
    _
  $region21: #{_run.1} parent=0 // pred_fallthru
    _
  // Predicated region
  $region22: #{_run.1} parent=0 // pred_check
    _
  $region23: #{_run.1} parent=0 // pred_check_branch
    %46 = sbr.rel (0) target = $region25
  $region24: #{_run.1} parent=0 // pred_region
    _
  $region25: #{_run.1} parent=0 // pred_fallthru
    _
  // Predicated region
  $region26: #{_run.1} parent=0 // pred_check
    _
  $region27: #{_run.1} parent=0 // pred_check_branch
    %48 = sbr.rel (0) target = $region29
  $region28: #{_run.1} parent=0 // pred_region
    _
  $region29: #{_run.1} parent=0 // pred_fallthru
    _
  // Predicated region
  $region30: #{_run.1} parent=0 // pred_check
    _
  $region31: #{_run.1} parent=0 // pred_check_branch
    %50 = sbr.rel (0) target = $region33
  $region32: #{_run.1} parent=0 // pred_region
    _
  $region33: #{_run.1} parent=0 // pred_fallthru
    _
  // Predicated region
  $region34: #{_run.1} parent=0 // pred_check
    _
  $region35: #{_run.1} parent=0 // pred_check_branch
    %52 = sbr.rel (0) target = $region37
  $region36: #{_run.1} parent=0 // pred_region
    _
  $region37: #{_run.1} parent=0 // pred_fallthru
    _
  // Predicated region
  $region38: #{_run.1} parent=0 // pred_check
    _
  $region39: #{_run.1} parent=0 // pred_check_branch
    %54 = sbr.rel (0) target = $region41
  $region40: #{_run.1} parent=0 // pred_region
    _
  $region41: #{_run.1} parent=0 // pred_fallthru
    _
  // Predicated region
  $region42: #{_run.1} parent=0 // pred_check
    _
  $region43: #{_run.1} parent=0 // pred_check_branch
    %56 = sbr.rel (0) target = $region45
  $region44: #{_run.1} parent=0 // pred_region
    _
  $region45: #{_run.1} parent=0 // pred_fallthru
    _
  // Predicated region
  $region46: #{_run.1} parent=0 // pred_check
    _
  $region47: #{_run.1} parent=0 // pred_check_branch
    %58 = sbr.rel (0) target = $region49
  $region48: #{_run.1} parent=0 // pred_region
    _
  $region49: #{_run.1} parent=0 // pred_fallthru
    _
  // Predicated region
  $region50: #{_run.1} parent=0 // pred_check
    _
  $region51: #{_run.1} parent=0 // pred_check_branch
    %60 = sbr.rel (0) target = $region53
  $region52: #{_run.1} parent=0 // pred_region
    _
  $region53: #{_run.1} parent=0 // pred_fallthru
    _
  // Predicated region
  $region54: #{_run.1} parent=0 // pred_check
    _
  $region55: #{_run.1} parent=0 // pred_check_branch
    %62 = sbr.rel (0) target = $region57
  $region56: #{_run.1} parent=0 // pred_region
    _
  $region57: #{_run.1} parent=0 // pred_fallthru
    _
  // Predicated region
  $region58: #{_run.1} parent=0 // pred_check
    _
  $region59: #{_run.1} parent=0 // pred_check_branch
    %64 = sbr.rel (0) target = $region61
  $region60: #{_run.1} parent=0 // pred_region
    _
  $region61: #{_run.1} parent=0 // pred_fallthru
    _
  // Predicated region
  $region62: #{_run.1} parent=0 // pred_check
    _
  $region63: #{_run.1} parent=0 // pred_check_branch
    %66 = sbr.rel (0) target = $region65
  $region64: #{_run.1} parent=0 // pred_region
    _
  $region65: #{_run.1} parent=0 // pred_fallthru
    _
  // Predicated region
  $region66: #{_run.1} parent=0 // pred_check
    _
  $region67: #{_run.1} parent=0 // pred_check_branch
    %68 = sbr.rel (0) target = $region69
  $region68: #{_run.1} parent=0 // pred_region
    _
  $region69: #{_run.1} parent=0 // pred_fallthru
    _
  // Predicated region
  $region70: #{_run.1} parent=0 // pred_check
    _
  $region71: #{_run.1} parent=0 // pred_check_branch
    %70 = sbr.rel (0) target = $region73
  $region72: #{_run.1} parent=0 // pred_region
    _
  $region73: #{_run.1} parent=0 // pred_fallthru
    _
  // Predicated region
  $region74: #{_run.1} parent=0 // pred_check
    _
  $region75: #{_run.1} parent=0 // pred_check_branch
    %72 = sbr.rel (0) target = $region77
  $region76: #{_run.1} parent=0 // pred_region
    _
  $region77: #{_run.1} parent=0 // pred_fallthru
    _
  // Predicated region
  $region78: #{_run.1} parent=0 // pred_check
    _
  $region79: #{_run.1} parent=0 // pred_check_branch
    %74 = sbr.rel (0) target = $region81
  $region80: #{_run.1} parent=0 // pred_region
    _
  $region81: #{_run.1} parent=0 // pred_fallthru
    _
  // Predicated region
  $region82: #{_run.1} parent=0 // pred_check
    _
  $region83: #{_run.1} parent=0 // pred_check_branch
    %76 = sbr.rel (0) target = $region85
  $region84: #{_run.1} parent=0 // pred_region
    _
  $region85: #{_run.1} parent=0 // pred_fallthru
    _
  // Predicated region
  $region86: #{_run.1} parent=0 // pred_check
    _
  $region87: #{_run.1} parent=0 // pred_check_branch
    %78 = sbr.rel (0) target = $region89
  $region88: #{_run.1} parent=0 // pred_region
    _
  $region89: #{_run.1} parent=0 // pred_fallthru
    _
  // Predicated region
  $region90: #{_run.1} parent=0 // pred_check
    _
  $region91: #{_run.1} parent=0 // pred_check_branch
    %80 = sbr.rel (0) target = $region93
  $region92: #{_run.1} parent=0 // pred_region
    _
  $region93: #{_run.1} parent=0 // pred_fallthru
    _
  // Predicated region
  $region94: #{_run.1} parent=0 // pred_check
    _
  $region95: #{_run.1} parent=0 // pred_check_branch
    %82 = sbr.rel (0) target = $region97
  $region96: #{_run.1} parent=0 // pred_region
    _
  $region97: #{_run.1} parent=0 // pred_fallthru
    _
  // Predicated region
  $region98: #{_run.1} parent=0 // pred_check
    _
  $region99: #{_run.1} parent=0 // pred_check_branch
    %84 = sbr.rel (0) target = $region101
  $region100: #{_run.1} parent=0 // pred_region
    _
  $region101: #{_run.1} parent=0 // pred_fallthru
    _
  // Predicated region
  $region102: #{_run.1} parent=0 // pred_check
    _
  $region103: #{_run.1} parent=0 // pred_check_branch
    %86 = sbr.rel (0) target = $region105
  $region104: #{_run.1} parent=0 // pred_region
    _
  $region105: #{_run.1} parent=0 // pred_fallthru
    _
  %v88 = vld [vmem:[%s0] sm:$0xff]
  %v89 = vld [vmem:[%s0 + $0x8] sm:$0xff]
  %v90 = vld [vmem:[%s0 + $0x10] sm:$0xff]
  %v91 = vld [vmem:[%s0 + $0x18] sm:$0xff]
  %v92 = vld [vmem:[%s20] sm:$0xff]
  %v93 = vld [vmem:[%s20 + $0x8] sm:$0xff]
  %v94 = vld [vmem:[%s20 + $0x10] sm:$0xff]
  %v95 = vld [vmem:[%s20 + $0x18] sm:$0xff]
  %v96 = vld [vmem:[%s20 + $0x20] sm:$0xff]
  %v97 = vld [vmem:[%s20 + $0x28] sm:$0xff]
  %v98 = vld [vmem:[%s20 + $0x30] sm:$0xff]
  %v99 = vld [vmem:[%s20 + $0x38] sm:$0xff]
  %v100 = vld [vmem:[%s20 + $0x40] sm:$0xff]
  %v101 = vld [vmem:[%s20 + $0x48] sm:$0xff]
  %v102 = vld [vmem:[%s20 + $0x50] sm:$0xff]
  %v103 = vld [vmem:[%s20 + $0x58] sm:$0xff]
  %v104 = vld [vmem:[%s20 + $0x60] sm:$0xff]
  %v105 = vld [vmem:[%s20 + $0x68] sm:$0xff]
  %v106 = vld [vmem:[%s20 + $0x70] sm:$0xff]
  %v107 = vld [vmem:[%s20 + $0x78] sm:$0xff]
  %v108 = vld [vmem:[%s21] sm:$0xff]
  %v109 = vpack.c.bf16 %v89, %v88
  %v110 = vpack.c.bf16 %v91, %v90
  %v111 = vld [vmem:[%s1] sm:$0xf]
  %v112 = vld [vmem:[%s1 + $0x4] sm:$0xf]
  %v113 = vld [vmem:[%s1 + $0x8] sm:$0xf]
  %v114 = vld [vmem:[%s1 + $0xc] sm:$0xf]
  %v115 = vld [vmem:[%s1 + $0x10] sm:$0xf]
  %v116 = vld [vmem:[%s1 + $0x14] sm:$0xf]
  %v117 = vld [vmem:[%s1 + $0x18] sm:$0xf]
  %v118 = vld [vmem:[%s1 + $0x1c] sm:$0xf]
  %v119 = vld [vmem:[%s2] sm:$0x1]
  %v121 = vlaneseq
  %v122 = vshrl.u32 %v121, 7
  %v123 = vsub.s32 0, %v122
  %v124 = vrot.slane %v119, %v123
  %v134 = vunpack.c.l.b16 %v111
  %v135 = vunpack.c.l.b16 %v112
  %v136 = vunpack.c.l.b16 %v113
  %v137 = vunpack.c.l.b16 %v114
  %v138 = vunpack.c.l.b16 %v115
  %v139 = vunpack.c.l.b16 %v116
  %v140 = vunpack.c.l.b16 %v117
  %v141 = vunpack.c.l.b16 %v118
  %v142 = vpack.c.b16 %v135, %v134
  %v143 = vpack.c.b16 %v137, %v136
  %v144 = vpack.c.b16 %v139, %v138
  %v145 = vpack.c.b16 %v141, %v140
  %vm150 = vcmask 523264
  %v152 = vsel %vm150, %v109, 0
  %v155 = vsel %vm150, %v110, 0
  %157 = vmatprep.subr.bf16.mxu0 0
  %158 = vmatpush1.bf16.msra.mxu0 0
  %159 = vmatprep.subr.bf16.mxu0 0
  %160 = vmatpush1.bf16.msra.mxu0 0
  %161 = vmatprep.subr.bf16.mxu0 0
  %162 = vmatpush1.bf16.msra.mxu0 0
  %163 = vmatprep.subr.bf16.mxu0 0
  %164 = vmatpush1.bf16.msra.mxu0 0
  %165 = vmatprep.subr.bf16.mxu0 0
  %166 = vmatpush1.bf16.msra.mxu0 %v145
  %167 = vmatprep.subr.bf16.mxu0 0
  %168 = vmatpush1.bf16.msra.mxu0 %v144
  %169 = vmatprep.subr.bf16.mxu0 0
  %170 = vmatpush1.bf16.msra.mxu0 %v143
  %171 = vmatprep.subr.bf16.mxu0 0
  %172 = vmatpush1.bf16.msra.mxu0 %v142
  %173 = vmatprep.subr.bf16.mxu0 0
  %174 = vmatpush2.bf16.msra.mxu0 0
  %175 = vmatprep.subr.bf16.mxu0 0
  %176 = vmatpush2.bf16.msra.mxu0 0
  %177 = vmatprep.subr.bf16.mxu0 0
  %178 = vmatpush2.bf16.msra.mxu0 0
  %179 = vmatprep.subr.bf16.mxu0 0
  %180 = vmatpush2.bf16.msra.mxu0 0
  %181 = vmatprep.subr.bf16.mxu0 0
  %182 = vmatpush2.bf16.msra.mxu0 0
  %183 = vmatprep.subr.bf16.mxu0 0
  %184 = vmatpush2.bf16.msra.mxu0 0
  %185 = vmatprep.subr.bf16.mxu0 0
  %186 = vmatpush2.bf16.msra.mxu0 0
  %187 = vmatprep.subr.bf16.mxu0 0
  %188 = vmatpush2.bf16.msra.mxu0 0
  %189 = vmatprep.mubr.bf16.mxu0 0
  %190 = vmatmul.mubr.bf16.gmra.mxu0 %v152
  %v191 = vpop.f32.mrf.mxu0
  %v192 = vadd.f32 %v124, %v191
  %v193 = vpop.f32.mrf.mxu0
  %v194 = vpop.f32.mrf.mxu0
  %v195 = vadd.f32 %v124, %v194
  %v196 = vpop.f32.mrf.mxu0
  %197 = vmatprep.mubr.bf16.mxu0 0
  %198 = vmatmul.mubr.bf16.gmra.mxu0 %v155
  %v199 = vpop.f32.mrf.mxu0
  %v200 = vadd.f32 %v124, %v199
  %v201 = vpop.f32.mrf.mxu0
  %v202 = vpop.f32.mrf.mxu0
  %v203 = vadd.f32 %v124, %v202
  %v204 = vpop.f32.mrf.mxu0
  %205 = vdwg.mxu0
  %v206 = vld [vmem:[%s3] sm:$0x1]
  %v207 = vld [vmem:[%s4] sm:$0x1]
  %v208 = vadd.f32 %v192, %v195
  %v209 = vadd.f32 %v208, %v200
  %v210 = vadd.f32 %v209, %v203
  %v211 = vrot.slane %v210, 4
  %v212 = vadd.f32 %v210, %v211
  %v213 = vrot.slane %v212, 2
  %v214 = vadd.f32 %v212, %v213
  %v215 = vrot.slane %v214, 1
  %v216 = vadd.f32 %v214, %v215
  %v217 = vmul.f32 %v192, %v192
  %v218 = vmul.f32 %v195, %v195
  %v219 = vmul.f32 %v200, %v200
  %v220 = vmul.f32 %v203, %v203
  %v221 = vadd.f32 %v217, %v218
  %v222 = vadd.f32 %v221, %v219
  %v223 = vadd.f32 %v222, %v220
  %v224 = vrot.slane %v223, 4
  %v225 = vadd.f32 %v223, %v224
  %v226 = vrot.slane %v225, 2
  %v227 = vadd.f32 %v225, %v226
  %v228 = vrot.slane %v227, 1
  %v229 = vadd.f32 %v227, %v228
  %230 = vmatprep.subr.mxu0 0.0
  %231 = vmatpush1.msra.mxu0 %v107
  %232 = vmatprep.subr.mxu0 0.0
  %233 = vmatpush1.msra.mxu0 %v106
  %234 = vmatprep.subr.mxu0 0.0
  %235 = vmatpush1.msra.mxu0 %v105
  %236 = vmatprep.subr.mxu0 0.0
  %237 = vmatpush1.msra.mxu0 %v104
  %238 = vmatprep.subr.mxu0 0.0
  %239 = vmatpush1.msra.mxu0 %v103
  %240 = vmatprep.subr.mxu0 0.0
  %241 = vmatpush1.msra.mxu0 %v102
  %242 = vmatprep.subr.mxu0 0.0
  %243 = vmatpush1.msra.mxu0 %v101
  %244 = vmatprep.subr.mxu0 0.0
  %245 = vmatpush1.msra.mxu0 %v100
  %246 = vmatprep.subr.mxu0 0.0
  %247 = vmatpush1.msra.mxu0 %v99
  %248 = vmatprep.subr.mxu0 0.0
  %249 = vmatpush1.msra.mxu0 %v98
  %250 = vmatprep.subr.mxu0 0.0
  %251 = vmatpush1.msra.mxu0 %v97
  %252 = vmatprep.subr.mxu0 0.0
  %253 = vmatpush1.msra.mxu0 %v96
  %254 = vmatprep.subr.mxu0 0.0
  %255 = vmatpush1.msra.mxu0 %v95
  %256 = vmatprep.subr.mxu0 0.0
  %257 = vmatpush1.msra.mxu0 %v94
  %258 = vmatprep.subr.mxu0 0.0
  %259 = vmatpush1.msra.mxu0 %v93
  %260 = vmatprep.subr.mxu0 0.0
  %261 = vmatpush1.msra.mxu0 %v92
  %262 = vmatprep.subr.mxu0 0.0
  %263 = vmatpush2.msra.mxu0 0.0
  %264 = vmatprep.subr.mxu0 0.0
  %265 = vmatpush2.msra.mxu0 0.0
  %266 = vmatprep.subr.mxu0 0.0
  %267 = vmatpush2.msra.mxu0 0.0
  %268 = vmatprep.subr.mxu0 0.0
  %269 = vmatpush2.msra.mxu0 0.0
  %270 = vmatprep.subr.mxu0 0.0
  %271 = vmatpush2.msra.mxu0 0.0
  %272 = vmatprep.subr.mxu0 0.0
  %273 = vmatpush2.msra.mxu0 0.0
  %274 = vmatprep.subr.mxu0 0.0
  %275 = vmatpush2.msra.mxu0 0.0
  %276 = vmatprep.subr.mxu0 0.0
  %277 = vmatpush2.msra.mxu0 0.0
  %278 = vmatprep.subr.mxu0 0.0
  %279 = vmatpush2.msra.mxu0 0.0
  %280 = vmatprep.subr.mxu0 0.0
  %281 = vmatpush2.msra.mxu0 0.0
  %282 = vmatprep.subr.mxu0 0.0
  %283 = vmatpush2.msra.mxu0 0.0
  %284 = vmatprep.subr.mxu0 0.0
  %285 = vmatpush2.msra.mxu0 0.0
  %286 = vmatprep.subr.mxu0 0.0
  %287 = vmatpush2.msra.mxu0 0.0
  %288 = vmatprep.subr.mxu0 0.0
  %289 = vmatpush2.msra.mxu0 0.0
  %290 = vmatprep.subr.mxu0 0.0
  %291 = vmatpush2.msra.mxu0 0.0
  %292 = vmatprep.subr.mxu0 0.0
  %293 = vmatpush2.msra.mxu0 0.0
  %294 = vmatprep.mubr.f32.mxu0 0.0
  %295 = vmatmul.mubr.f32.gmra.mxu0 %v216
  %v296 = vpop.f32.mrf.mxu0
  %v297 = vadd.f32 0.0, %v296
  %v298 = vpop.f32.mrf.mxu0
  %299 = vdwg.mxu0
  %300 = vmatprep.subr.mxu0 0.0
  %301 = vmatpush1.msra.mxu0 %v107
  %302 = vmatprep.subr.mxu0 0.0
  %303 = vmatpush1.msra.mxu0 %v106
  %304 = vmatprep.subr.mxu0 0.0
  %305 = vmatpush1.msra.mxu0 %v105
  %306 = vmatprep.subr.mxu0 0.0
  %307 = vmatpush1.msra.mxu0 %v104
  %308 = vmatprep.subr.mxu0 0.0
  %309 = vmatpush1.msra.mxu0 %v103
  %310 = vmatprep.subr.mxu0 0.0
  %311 = vmatpush1.msra.mxu0 %v102
  %312 = vmatprep.subr.mxu0 0.0
  %313 = vmatpush1.msra.mxu0 %v101
  %314 = vmatprep.subr.mxu0 0.0
  %315 = vmatpush1.msra.mxu0 %v100
  %316 = vmatprep.subr.mxu0 0.0
  %317 = vmatpush1.msra.mxu0 %v99
  %318 = vmatprep.subr.mxu0 0.0
  %319 = vmatpush1.msra.mxu0 %v98
  %320 = vmatprep.subr.mxu0 0.0
  %321 = vmatpush1.msra.mxu0 %v97
  %322 = vmatprep.subr.mxu0 0.0
  %323 = vmatpush1.msra.mxu0 %v96
  %324 = vmatprep.subr.mxu0 0.0
  %325 = vmatpush1.msra.mxu0 %v95
  %326 = vmatprep.subr.mxu0 0.0
  %327 = vmatpush1.msra.mxu0 %v94
  %328 = vmatprep.subr.mxu0 0.0
  %329 = vmatpush1.msra.mxu0 %v93
  %330 = vmatprep.subr.mxu0 0.0
  %331 = vmatpush1.msra.mxu0 %v92
  %332 = vmatprep.subr.mxu0 0.0
  %333 = vmatpush2.msra.mxu0 0.0
  %334 = vmatprep.subr.mxu0 0.0
  %335 = vmatpush2.msra.mxu0 0.0
  %336 = vmatprep.subr.mxu0 0.0
  %337 = vmatpush2.msra.mxu0 0.0
  %338 = vmatprep.subr.mxu0 0.0
  %339 = vmatpush2.msra.mxu0 0.0
  %340 = vmatprep.subr.mxu0 0.0
  %341 = vmatpush2.msra.mxu0 0.0
  %342 = vmatprep.subr.mxu0 0.0
  %343 = vmatpush2.msra.mxu0 0.0
  %344 = vmatprep.subr.mxu0 0.0
  %345 = vmatpush2.msra.mxu0 0.0
  %346 = vmatprep.subr.mxu0 0.0
  %347 = vmatpush2.msra.mxu0 0.0
  %348 = vmatprep.subr.mxu0 0.0
  %349 = vmatpush2.msra.mxu0 0.0
  %350 = vmatprep.subr.mxu0 0.0
  %351 = vmatpush2.msra.mxu0 0.0
  %352 = vmatprep.subr.mxu0 0.0
  %353 = vmatpush2.msra.mxu0 0.0
  %354 = vmatprep.subr.mxu0 0.0
  %355 = vmatpush2.msra.mxu0 0.0
  %356 = vmatprep.subr.mxu0 0.0
  %357 = vmatpush2.msra.mxu0 0.0
  %358 = vmatprep.subr.mxu0 0.0
  %359 = vmatpush2.msra.mxu0 0.0
  %360 = vmatprep.subr.mxu0 0.0
  %361 = vmatpush2.msra.mxu0 0.0
  %362 = vmatprep.subr.mxu0 0.0
  %363 = vmatpush2.msra.mxu0 0.0
  %364 = vmatprep.mubr.f32.mxu0 0.0
  %365 = vmatmul.mubr.f32.gmra.mxu0 %v229
  %v366 = vpop.f32.mrf.mxu0
  %v367 = vadd.f32 0.0, %v366
  %v368 = vpop.f32.mrf.mxu0
  %369 = vdwg.mxu0
  %v370 = vmul.f32 %v297, 0.001953125
  %v371 = vmul.f32 %v367, 0.001953125
  %v372 = vmul.f32 %v370, %v370
  %v373 = vsub.f32 %v371, %v372
  %v374 = vadd.f32 %v373, 1e-05
  %v375 = vrsqrt.pop %v374
  %vm376 = vcmask 64512
  %v378 = vsel %vm376, %v370, 0
  %380 = vmatprep.subr.mxu0 0.0
  %381 = vmatpush1.msra.mxu0 0.0
  %382 = vmatprep.subr.mxu0 0.0
  %383 = vmatpush1.msra.mxu0 0.0
  %384 = vmatprep.subr.mxu0 0.0
  %385 = vmatpush1.msra.mxu0 0.0
  %386 = vmatprep.subr.mxu0 0.0
  %387 = vmatpush1.msra.mxu0 0.0
  %388 = vmatprep.subr.mxu0 0.0
  %389 = vmatpush1.msra.mxu0 0.0
  %390 = vmatprep.subr.mxu0 0.0
  %391 = vmatpush1.msra.mxu0 0.0
  %392 = vmatprep.subr.mxu0 0.0
  %393 = vmatpush1.msra.mxu0 0.0
  %394 = vmatprep.subr.mxu0 0.0
  %395 = vmatpush1.msra.mxu0 0.0
  %396 = vmatprep.subr.mxu0 0.0
  %397 = vmatpush1.msra.mxu0 0.0
  %398 = vmatprep.subr.mxu0 0.0
  %399 = vmatpush1.msra.mxu0 0.0
  %400 = vmatprep.subr.mxu0 0.0
  %401 = vmatpush1.msra.mxu0 0.0
  %402 = vmatprep.subr.mxu0 0.0
  %403 = vmatpush1.msra.mxu0 0.0
  %404 = vmatprep.subr.mxu0 0.0
  %405 = vmatpush1.msra.mxu0 0.0
  %406 = vmatprep.subr.mxu0 0.0
  %407 = vmatpush1.msra.mxu0 0.0
  %408 = vmatprep.subr.mxu0 0.0
  %409 = vmatpush1.msra.mxu0 0.0
  %410 = vmatprep.subr.mxu0 0.0
  %411 = vmatpush1.msra.mxu0 %v108
  %412 = vmatprep.subr.mxu0 0.0
  %413 = vmatpush2.msra.mxu0 0.0
  %414 = vmatprep.subr.mxu0 0.0
  %415 = vmatpush2.msra.mxu0 0.0
  %416 = vmatprep.subr.mxu0 0.0
  %417 = vmatpush2.msra.mxu0 0.0
  %418 = vmatprep.subr.mxu0 0.0
  %419 = vmatpush2.msra.mxu0 0.0
  %420 = vmatprep.subr.mxu0 0.0
  %421 = vmatpush2.msra.mxu0 0.0
  %422 = vmatprep.subr.mxu0 0.0
  %423 = vmatpush2.msra.mxu0 0.0
  %424 = vmatprep.subr.mxu0 0.0
  %425 = vmatpush2.msra.mxu0 0.0
  %426 = vmatprep.subr.mxu0 0.0
  %427 = vmatpush2.msra.mxu0 0.0
  %428 = vmatprep.subr.mxu0 0.0
  %429 = vmatpush2.msra.mxu0 0.0
  %430 = vmatprep.subr.mxu0 0.0
  %431 = vmatpush2.msra.mxu0 0.0
  %432 = vmatprep.subr.mxu0 0.0
  %433 = vmatpush2.msra.mxu0 0.0
  %434 = vmatprep.subr.mxu0 0.0
  %435 = vmatpush2.msra.mxu0 0.0
  %436 = vmatprep.subr.mxu0 0.0
  %437 = vmatpush2.msra.mxu0 0.0
  %438 = vmatprep.subr.mxu0 0.0
  %439 = vmatpush2.msra.mxu0 0.0
  %440 = vmatprep.subr.mxu0 0.0
  %441 = vmatpush2.msra.mxu0 0.0
  %442 = vmatprep.subr.mxu0 0.0
  %443 = vmatpush2.msra.mxu0 0.0
  %444 = vmatprep.mubr.f32.mxu0 0.0
  %445 = vmatmul.mubr.f32.gmra.mxu0 %v378
  %v446 = vpop.f32.mrf.mxu0
  %v447 = vadd.f32 0.0, %v446
  %v448 = vpop.f32.mrf.mxu0
  %449 = vdwg.mxu0
  %v451 = vsel %vm376, %v375, 0
  %453 = vmatprep.subr.mxu0 0.0
  %454 = vmatpush1.msra.mxu0 0.0
  %455 = vmatprep.subr.mxu0 0.0
  %456 = vmatpush1.msra.mxu0 0.0
  %457 = vmatprep.subr.mxu0 0.0
  %458 = vmatpush1.msra.mxu0 0.0
  %459 = vmatprep.subr.mxu0 0.0
  %460 = vmatpush1.msra.mxu0 0.0
  %461 = vmatprep.subr.mxu0 0.0
  %462 = vmatpush1.msra.mxu0 0.0
  %463 = vmatprep.subr.mxu0 0.0
  %464 = vmatpush1.msra.mxu0 0.0
  %465 = vmatprep.subr.mxu0 0.0
  %466 = vmatpush1.msra.mxu0 0.0
  %467 = vmatprep.subr.mxu0 0.0
  %468 = vmatpush1.msra.mxu0 0.0
  %469 = vmatprep.subr.mxu0 0.0
  %470 = vmatpush1.msra.mxu0 0.0
  %471 = vmatprep.subr.mxu0 0.0
  %472 = vmatpush1.msra.mxu0 0.0
  %473 = vmatprep.subr.mxu0 0.0
  %474 = vmatpush1.msra.mxu0 0.0
  %475 = vmatprep.subr.mxu0 0.0
  %476 = vmatpush1.msra.mxu0 0.0
  %477 = vmatprep.subr.mxu0 0.0
  %478 = vmatpush1.msra.mxu0 0.0
  %479 = vmatprep.subr.mxu0 0.0
  %480 = vmatpush1.msra.mxu0 0.0
  %481 = vmatprep.subr.mxu0 0.0
  %482 = vmatpush1.msra.mxu0 0.0
  %483 = vmatprep.subr.mxu0 0.0
  %484 = vmatpush1.msra.mxu0 %v108
  %485 = vmatprep.subr.mxu0 0.0
  %486 = vmatpush2.msra.mxu0 0.0
  %487 = vmatprep.subr.mxu0 0.0
  %488 = vmatpush2.msra.mxu0 0.0
  %489 = vmatprep.subr.mxu0 0.0
  %490 = vmatpush2.msra.mxu0 0.0
  %491 = vmatprep.subr.mxu0 0.0
  %492 = vmatpush2.msra.mxu0 0.0
  %493 = vmatprep.subr.mxu0 0.0
  %494 = vmatpush2.msra.mxu0 0.0
  %495 = vmatprep.subr.mxu0 0.0
  %496 = vmatpush2.msra.mxu0 0.0
  %497 = vmatprep.subr.mxu0 0.0
  %498 = vmatpush2.msra.mxu0 0.0
  %499 = vmatprep.subr.mxu0 0.0
  %500 = vmatpush2.msra.mxu0 0.0
  %501 = vmatprep.subr.mxu0 0.0
  %502 = vmatpush2.msra.mxu0 0.0
  %503 = vmatprep.subr.mxu0 0.0
  %504 = vmatpush2.msra.mxu0 0.0
  %505 = vmatprep.subr.mxu0 0.0
  %506 = vmatpush2.msra.mxu0 0.0
  %507 = vmatprep.subr.mxu0 0.0
  %508 = vmatpush2.msra.mxu0 0.0
  %509 = vmatprep.subr.mxu0 0.0
  %510 = vmatpush2.msra.mxu0 0.0
  %511 = vmatprep.subr.mxu0 0.0
  %512 = vmatpush2.msra.mxu0 0.0
  %513 = vmatprep.subr.mxu0 0.0
  %514 = vmatpush2.msra.mxu0 0.0
  %515 = vmatprep.subr.mxu0 0.0
  %516 = vmatpush2.msra.mxu0 0.0
  %517 = vmatprep.mubr.f32.mxu0 0.0
  %518 = vmatmul.mubr.f32.gmra.mxu0 %v451
  %v519 = vpop.f32.mrf.mxu0
  %v520 = vadd.f32 0.0, %v519
  %v521 = vpop.f32.mrf.mxu0
  %522 = vdwg.mxu0
  %v523 = vlaneseq
  %v524 = vshrl.u32 %v523, 7
  %v525 = vsub.s32 0, %v524
  %v526 = vrot.slane %v447, %v525
  %v527 = vsub.f32 %v192, %v526
  %v528 = vsub.f32 %v195, %v526
  %v529 = vsub.f32 %v200, %v526
  %v530 = vsub.f32 %v203, %v526
  %v531 = vlaneseq
  %v532 = vshrl.u32 %v531, 7
  %v533 = vsub.s32 0, %v532
  %v534 = vrot.slane %v520, %v533
  %v535 = vmul.f32 %v527, %v534
  %v536 = vmul.f32 %v528, %v534
  %v537 = vmul.f32 %v529, %v534
  %v538 = vmul.f32 %v530, %v534
  %v540 = vlaneseq
  %v541 = vshrl.u32 %v540, 7
  %v542 = vsub.s32 0, %v541
  %v543 = vrot.slane %v206, %v542
  %v545 = vmul.f32 %v535, %v543
  %v546 = vmul.f32 %v536, %v543
  %v547 = vmul.f32 %v537, %v543
  %v548 = vmul.f32 %v538, %v543
  %v550 = vlaneseq
  %v551 = vshrl.u32 %v550, 7
  %v552 = vsub.s32 0, %v551
  %v553 = vrot.slane %v207, %v552
  %v555 = vadd.f32 %v545, %v553
  %v556 = vadd.f32 %v546, %v553
  %v557 = vadd.f32 %v547, %v553
  %v558 = vadd.f32 %v548, %v553
  %v559 = vmax.f32 %v555, 0.0
  %v560 = vmax.f32 %v556, 0.0
  %v561 = vmax.f32 %v557, 0.0
  %v562 = vmax.f32 %v558, 0.0
  %vm567 = vcmask 1040384
  %v568 = vrot.slane %v559, 7
  %v569 = vrot.slane %v560, 7
  %v570 = vsel %vm567, %v568, %v569
  %v571 = vrot.slane %v561, 7
  %v572 = vrot.slane %v562, 7
  %v573 = vsel %vm567, %v571, %v572
  %v580 = vsel %vm567, 0.0, %v568
  %v581 = vsel %vm567, 0.0, %v571
  %v582 = vsel %vm567, %v569, 0.0
  %v583 = vsel %vm567, %v572, 0.0
  %vm588 = vcmask 1046528
  %v589 = vrot.slane %v580, 1
  %v590 = vrot.slane %v570, 1
  %v591 = vsel %vm588, %v589, %v590
  %v592 = vrot.slane %v582, 1
  %v593 = vsel %vm588, %v590, %v592
  %v594 = vrot.slane %v581, 1
  %v595 = vrot.slane %v573, 1
  %v596 = vsel %vm588, %v594, %v595
  %v597 = vrot.slane %v583, 1
  %v598 = vsel %vm588, %v595, %v597
  %vm603 = vcmask 1045504
  %v604 = vrot.slane %v580, 2
  %v605 = vrot.slane %v570, 2
  %v606 = vsel %vm603, %v604, %v605
  %v607 = vrot.slane %v582, 2
  %v608 = vsel %vm603, %v605, %v607
  %v609 = vrot.slane %v581, 2
  %v610 = vrot.slane %v573, 2
  %v611 = vsel %vm603, %v609, %v610
  %v612 = vrot.slane %v583, 2
  %v613 = vsel %vm603, %v610, %v612
  %v618 = vpack.c.bf16 %v570, %v580
  %v619 = vpack.c.bf16 %v593, %v591
  %v620 = vpack.c.bf16 %v608, %v606
  %v621 = vpack.c.bf16 %v573, %v581
  %v622 = vpack.c.bf16 %v598, %v596
  %v623 = vpack.c.bf16 %v613, %v611
  %v624 = vld [vmem:[%s5] sm:$0xf]
  %v625 = vld [vmem:[%s5 + $0x4] sm:$0xf]
  %v626 = vld [vmem:[%s5 + $0x8] sm:$0xf]
  %v627 = vld [vmem:[%s5 + $0xc] sm:$0xf]
  %v628 = vld [vmem:[%s5 + $0x10] sm:$0xf]
  %v629 = vld [vmem:[%s5 + $0x14] sm:$0xf]
  %v630 = vld [vmem:[%s5 + $0x18] sm:$0xf]
  %v631 = vld [vmem:[%s5 + $0x1c] sm:$0xf]
  %v632 = vld [vmem:[%s5 + $0x20] sm:$0xf]
  %v633 = vld [vmem:[%s5 + $0x24] sm:$0xf]
  %v634 = vld [vmem:[%s5 + $0x28] sm:$0xf]
  %v635 = vld [vmem:[%s5 + $0x2c] sm:$0xf]
  %v636 = vld [vmem:[%s5 + $0x30] sm:$0xf]
  %v637 = vld [vmem:[%s5 + $0x34] sm:$0xf]
  %v638 = vld [vmem:[%s5 + $0x38] sm:$0xf]
  %v639 = vld [vmem:[%s5 + $0x3c] sm:$0xf]
  %v640 = vld [vmem:[%s5 + $0x40] sm:$0xf]
  %v641 = vld [vmem:[%s5 + $0x44] sm:$0xf]
  %v642 = vld [vmem:[%s5 + $0x48] sm:$0xf]
  %v643 = vld [vmem:[%s5 + $0x4c] sm:$0xf]
  %v644 = vld [vmem:[%s5 + $0x50] sm:$0xf]
  %v645 = vld [vmem:[%s5 + $0x54] sm:$0xf]
  %v646 = vld [vmem:[%s5 + $0x58] sm:$0xf]
  %v647 = vld [vmem:[%s5 + $0x5c] sm:$0xf]
  %v648 = vld [vmem:[%s5 + $0x60] sm:$0xf]
  %v649 = vld [vmem:[%s5 + $0x64] sm:$0xf]
  %v650 = vld [vmem:[%s5 + $0x68] sm:$0xf]
  %v651 = vld [vmem:[%s5 + $0x6c] sm:$0xf]
  %v652 = vld [vmem:[%s5 + $0x70] sm:$0xf]
  %v653 = vld [vmem:[%s5 + $0x74] sm:$0xf]
  %v654 = vld [vmem:[%s5 + $0x78] sm:$0xf]
  %v655 = vld [vmem:[%s5 + $0x7c] sm:$0xf]
  %v656 = vld [vmem:[%s5 + $0x80] sm:$0xf]
  %v657 = vld [vmem:[%s5 + $0x84] sm:$0xf]
  %v658 = vld [vmem:[%s5 + $0x88] sm:$0xf]
  %v659 = vld [vmem:[%s5 + $0x8c] sm:$0xf]
  %v660 = vld [vmem:[%s5 + $0x90] sm:$0xf]
  %v661 = vld [vmem:[%s5 + $0x94] sm:$0xf]
  %v662 = vld [vmem:[%s5 + $0x98] sm:$0xf]
  %v663 = vld [vmem:[%s5 + $0x9c] sm:$0xf]
  %v664 = vld [vmem:[%s5 + $0xa0] sm:$0xf]
  %v665 = vld [vmem:[%s5 + $0xa4] sm:$0xf]
  %v666 = vld [vmem:[%s5 + $0xa8] sm:$0xf]
  %v667 = vld [vmem:[%s5 + $0xac] sm:$0xf]
  %v668 = vld [vmem:[%s5 + $0xb0] sm:$0xf]
  %v669 = vld [vmem:[%s5 + $0xb4] sm:$0xf]
  %v670 = vld [vmem:[%s5 + $0xb8] sm:$0xf]
  %v671 = vld [vmem:[%s5 + $0xbc] sm:$0xf]
  %v672 = vld [vmem:[%s6] sm:$0x1]
  %v674 = vlaneseq
  %v675 = vshrl.u32 %v674, 7
  %v676 = vsub.s32 0, %v675
  %v677 = vrot.slane %v672, %v676
  %v727 = vunpack.c.l.b16 %v624
  %v728 = vunpack.c.l.b16 %v625
  %v729 = vunpack.c.l.b16 %v626
  %v730 = vunpack.c.l.b16 %v627
  %v731 = vunpack.c.l.b16 %v628
  %v732 = vunpack.c.l.b16 %v629
  %v733 = vunpack.c.l.b16 %v630
  %v734 = vunpack.c.l.b16 %v631
  %v735 = vunpack.c.l.b16 %v632
  %v736 = vunpack.c.l.b16 %v633
  %v737 = vunpack.c.l.b16 %v634
  %v738 = vunpack.c.l.b16 %v635
  %v739 = vunpack.c.l.b16 %v636
  %v740 = vunpack.c.l.b16 %v637
  %v741 = vunpack.c.l.b16 %v638
  %v742 = vunpack.c.l.b16 %v639
  %v743 = vunpack.c.l.b16 %v640
  %v744 = vunpack.c.l.b16 %v641
  %v745 = vunpack.c.l.b16 %v642
  %v746 = vunpack.c.l.b16 %v643
  %v747 = vunpack.c.l.b16 %v644
  %v748 = vunpack.c.l.b16 %v645
  %v749 = vunpack.c.l.b16 %v646
  %v750 = vunpack.c.l.b16 %v647
  %v751 = vunpack.c.l.b16 %v648
  %v752 = vunpack.c.l.b16 %v649
  %v753 = vunpack.c.l.b16 %v650
  %v754 = vunpack.c.l.b16 %v651
  %v755 = vunpack.c.l.b16 %v652
  %v756 = vunpack.c.l.b16 %v653
  %v757 = vunpack.c.l.b16 %v654
  %v758 = vunpack.c.l.b16 %v655
  %v759 = vunpack.c.l.b16 %v656
  %v760 = vunpack.c.l.b16 %v657
  %v761 = vunpack.c.l.b16 %v658
  %v762 = vunpack.c.l.b16 %v659
  %v763 = vunpack.c.l.b16 %v660
  %v764 = vunpack.c.l.b16 %v661
  %v765 = vunpack.c.l.b16 %v662
  %v766 = vunpack.c.l.b16 %v663
  %v767 = vunpack.c.l.b16 %v664
  %v768 = vunpack.c.l.b16 %v665
  %v769 = vunpack.c.l.b16 %v666
  %v770 = vunpack.c.l.b16 %v667
  %v771 = vunpack.c.l.b16 %v668
  %v772 = vunpack.c.l.b16 %v669
  %v773 = vunpack.c.l.b16 %v670
  %v774 = vunpack.c.l.b16 %v671
  %v775 = vpack.c.b16 %v728, %v727
  %v776 = vpack.c.b16 %v730, %v729
  %v777 = vpack.c.b16 %v732, %v731
  %v778 = vpack.c.b16 %v734, %v733
  %v779 = vpack.c.b16 %v736, %v735
  %v780 = vpack.c.b16 %v738, %v737
  %v781 = vpack.c.b16 %v740, %v739
  %v782 = vpack.c.b16 %v742, %v741
  %v783 = vpack.c.b16 %v744, %v743
  %v784 = vpack.c.b16 %v746, %v745
  %v785 = vpack.c.b16 %v748, %v747
  %v786 = vpack.c.b16 %v750, %v749
  %v787 = vpack.c.b16 %v752, %v751
  %v788 = vpack.c.b16 %v754, %v753
  %v789 = vpack.c.b16 %v756, %v755
  %v790 = vpack.c.b16 %v758, %v757
  %v791 = vpack.c.b16 %v760, %v759
  %v792 = vpack.c.b16 %v762, %v761
  %v793 = vpack.c.b16 %v764, %v763
  %v794 = vpack.c.b16 %v766, %v765
  %v795 = vpack.c.b16 %v768, %v767
  %v796 = vpack.c.b16 %v770, %v769
  %v797 = vpack.c.b16 %v772, %v771
  %v798 = vpack.c.b16 %v774, %v773
  %823 = vmatprep.subr.bf16.mxu0 0
  %824 = vmatpush1.bf16.msra.mxu0 %v782
  %825 = vmatprep.subr.bf16.mxu0 0
  %826 = vmatpush1.bf16.msra.mxu0 %v781
  %827 = vmatprep.subr.bf16.mxu0 0
  %828 = vmatpush1.bf16.msra.mxu0 %v780
  %829 = vmatprep.subr.bf16.mxu0 0
  %830 = vmatpush1.bf16.msra.mxu0 %v779
  %831 = vmatprep.subr.bf16.mxu0 0
  %832 = vmatpush1.bf16.msra.mxu0 %v778
  %833 = vmatprep.subr.bf16.mxu0 0
  %834 = vmatpush1.bf16.msra.mxu0 %v777
  %835 = vmatprep.subr.bf16.mxu0 0
  %836 = vmatpush1.bf16.msra.mxu0 %v776
  %837 = vmatprep.subr.bf16.mxu0 0
  %838 = vmatpush1.bf16.msra.mxu0 %v775
  %839 = vmatprep.subr.bf16.mxu0 0
  %840 = vmatpush2.bf16.msra.mxu0 %v790
  %841 = vmatprep.subr.bf16.mxu0 0
  %842 = vmatpush2.bf16.msra.mxu0 %v789
  %843 = vmatprep.subr.bf16.mxu0 0
  %844 = vmatpush2.bf16.msra.mxu0 %v788
  %845 = vmatprep.subr.bf16.mxu0 0
  %846 = vmatpush2.bf16.msra.mxu0 %v787
  %847 = vmatprep.subr.bf16.mxu0 0
  %848 = vmatpush2.bf16.msra.mxu0 %v786
  %849 = vmatprep.subr.bf16.mxu0 0
  %850 = vmatpush2.bf16.msra.mxu0 %v785
  %851 = vmatprep.subr.bf16.mxu0 0
  %852 = vmatpush2.bf16.msra.mxu0 %v784
  %853 = vmatprep.subr.bf16.mxu0 0
  %854 = vmatpush2.bf16.msra.mxu0 %v783
  %855 = vmatprep.mubr.bf16.mxu0 %v619
  %856 = vmatmul.mubr.bf16.gmra.mxu0 %v618
  %v857 = vpop.f32.mrf.mxu0
  %v858 = vadd.f32 %v677, %v857
  %v859 = vpop.f32.mrf.mxu0
  %v860 = vpop.f32.mrf.mxu0
  %v861 = vadd.f32 %v677, %v860
  %v862 = vpop.f32.mrf.mxu0
  %863 = vmatprep.mubr.bf16.mxu0 %v622
  %864 = vmatmul.mubr.bf16.gmra.mxu0 %v621
  %v865 = vpop.f32.mrf.mxu0
  %v866 = vadd.f32 %v677, %v865
  %v867 = vpop.f32.mrf.mxu0
  %v868 = vpop.f32.mrf.mxu0
  %v869 = vadd.f32 %v677, %v868
  %v870 = vpop.f32.mrf.mxu0
  %871 = vdwg.mxu0
  %872 = vmatprep.subr.bf16.mxu0 0
  %873 = vmatpush1.bf16.msra.mxu0 %v798
  %874 = vmatprep.subr.bf16.mxu0 0
  %875 = vmatpush1.bf16.msra.mxu0 %v797
  %876 = vmatprep.subr.bf16.mxu0 0
  %877 = vmatpush1.bf16.msra.mxu0 %v796
  %878 = vmatprep.subr.bf16.mxu0 0
  %879 = vmatpush1.bf16.msra.mxu0 %v795
  %880 = vmatprep.subr.bf16.mxu0 0
  %881 = vmatpush1.bf16.msra.mxu0 %v794
  %882 = vmatprep.subr.bf16.mxu0 0
  %883 = vmatpush1.bf16.msra.mxu0 %v793
  %884 = vmatprep.subr.bf16.mxu0 0
  %885 = vmatpush1.bf16.msra.mxu0 %v792
  %886 = vmatprep.subr.bf16.mxu0 0
  %887 = vmatpush1.bf16.msra.mxu0 %v791
  %888 = vmatprep.subr.bf16.mxu0 0
  %889 = vmatpush2.bf16.msra.mxu0 0
  %890 = vmatprep.subr.bf16.mxu0 0
  %891 = vmatpush2.bf16.msra.mxu0 0
  %892 = vmatprep.subr.bf16.mxu0 0
  %893 = vmatpush2.bf16.msra.mxu0 0
  %894 = vmatprep.subr.bf16.mxu0 0
  %895 = vmatpush2.bf16.msra.mxu0 0
  %896 = vmatprep.subr.bf16.mxu0 0
  %897 = vmatpush2.bf16.msra.mxu0 0
  %898 = vmatprep.subr.bf16.mxu0 0
  %899 = vmatpush2.bf16.msra.mxu0 0
  %900 = vmatprep.subr.bf16.mxu0 0
  %901 = vmatpush2.bf16.msra.mxu0 0
  %902 = vmatprep.subr.bf16.mxu0 0
  %903 = vmatpush2.bf16.msra.mxu0 0
  %904 = vmatprep.mubr.bf16.mxu0 0
  %905 = vmatmul.mubr.bf16.gmra.mxu0 %v620
  %v906 = vpop.f32.mrf.mxu0
  %v907 = vadd.f32 %v858, %v906
  %v908 = vpop.f32.mrf.mxu0
  %v909 = vpop.f32.mrf.mxu0
  %v910 = vadd.f32 %v861, %v909
  %v911 = vpop.f32.mrf.mxu0
  %912 = vmatprep.mubr.bf16.mxu0 0
  %913 = vmatmul.mubr.bf16.gmra.mxu0 %v623
  %v914 = vpop.f32.mrf.mxu0
  %v915 = vadd.f32 %v866, %v914
  %v916 = vpop.f32.mrf.mxu0
  %v917 = vpop.f32.mrf.mxu0
  %v918 = vadd.f32 %v869, %v917
  %v919 = vpop.f32.mrf.mxu0
  %920 = vdwg.mxu0
  %v921 = vld [vmem:[%s7] sm:$0x1]
  %v922 = vld [vmem:[%s8] sm:$0x1]
  %v923 = vadd.f32 %v907, %v910
  %v924 = vadd.f32 %v923, %v915
  %v925 = vadd.f32 %v924, %v918
  %v926 = vrot.slane %v925, 4
  %v927 = vadd.f32 %v925, %v926
  %v928 = vrot.slane %v927, 2
  %v929 = vadd.f32 %v927, %v928
  %v930 = vrot.slane %v929, 1
  %v931 = vadd.f32 %v929, %v930
  %v932 = vmul.f32 %v907, %v907
  %v933 = vmul.f32 %v910, %v910
  %v934 = vmul.f32 %v915, %v915
  %v935 = vmul.f32 %v918, %v918
  %v936 = vadd.f32 %v932, %v933
  %v937 = vadd.f32 %v936, %v934
  %v938 = vadd.f32 %v937, %v935
  %v939 = vrot.slane %v938, 4
  %v940 = vadd.f32 %v938, %v939
  %v941 = vrot.slane %v940, 2
  %v942 = vadd.f32 %v940, %v941
  %v943 = vrot.slane %v942, 1
  %v944 = vadd.f32 %v942, %v943
  %945 = vmatprep.subr.mxu0 0.0
  %946 = vmatpush1.msra.mxu0 %v107
  %947 = vmatprep.subr.mxu0 0.0
  %948 = vmatpush1.msra.mxu0 %v106
  %949 = vmatprep.subr.mxu0 0.0
  %950 = vmatpush1.msra.mxu0 %v105
  %951 = vmatprep.subr.mxu0 0.0
  %952 = vmatpush1.msra.mxu0 %v104
  %953 = vmatprep.subr.mxu0 0.0
  %954 = vmatpush1.msra.mxu0 %v103
  %955 = vmatprep.subr.mxu0 0.0
  %956 = vmatpush1.msra.mxu0 %v102
  %957 = vmatprep.subr.mxu0 0.0
  %958 = vmatpush1.msra.mxu0 %v101
  %959 = vmatprep.subr.mxu0 0.0
  %960 = vmatpush1.msra.mxu0 %v100
  %961 = vmatprep.subr.mxu0 0.0
  %962 = vmatpush1.msra.mxu0 %v99
  %963 = vmatprep.subr.mxu0 0.0
  %964 = vmatpush1.msra.mxu0 %v98
  %965 = vmatprep.subr.mxu0 0.0
  %966 = vmatpush1.msra.mxu0 %v97
  %967 = vmatprep.subr.mxu0 0.0
  %968 = vmatpush1.msra.mxu0 %v96
  %969 = vmatprep.subr.mxu0 0.0
  %970 = vmatpush1.msra.mxu0 %v95
  %971 = vmatprep.subr.mxu0 0.0
  %972 = vmatpush1.msra.mxu0 %v94
  %973 = vmatprep.subr.mxu0 0.0
  %974 = vmatpush1.msra.mxu0 %v93
  %975 = vmatprep.subr.mxu0 0.0
  %976 = vmatpush1.msra.mxu0 %v92
  %977 = vmatprep.subr.mxu0 0.0
  %978 = vmatpush2.msra.mxu0 0.0
  %979 = vmatprep.subr.mxu0 0.0
  %980 = vmatpush2.msra.mxu0 0.0
  %981 = vmatprep.subr.mxu0 0.0
  %982 = vmatpush2.msra.mxu0 0.0
  %983 = vmatprep.subr.mxu0 0.0
  %984 = vmatpush2.msra.mxu0 0.0
  %985 = vmatprep.subr.mxu0 0.0
  %986 = vmatpush2.msra.mxu0 0.0
  %987 = vmatprep.subr.mxu0 0.0
  %988 = vmatpush2.msra.mxu0 0.0
  %989 = vmatprep.subr.mxu0 0.0
  %990 = vmatpush2.msra.mxu0 0.0
  %991 = vmatprep.subr.mxu0 0.0
  %992 = vmatpush2.msra.mxu0 0.0
  %993 = vmatprep.subr.mxu0 0.0
  %994 = vmatpush2.msra.mxu0 0.0
  %995 = vmatprep.subr.mxu0 0.0
  %996 = vmatpush2.msra.mxu0 0.0
  %997 = vmatprep.subr.mxu0 0.0
  %998 = vmatpush2.msra.mxu0 0.0
  %999 = vmatprep.subr.mxu0 0.0
  %1000 = vmatpush2.msra.mxu0 0.0
  %1001 = vmatprep.subr.mxu0 0.0
  %1002 = vmatpush2.msra.mxu0 0.0
  %1003 = vmatprep.subr.mxu0 0.0
  %1004 = vmatpush2.msra.mxu0 0.0
  %1005 = vmatprep.subr.mxu0 0.0
  %1006 = vmatpush2.msra.mxu0 0.0
  %1007 = vmatprep.subr.mxu0 0.0
  %1008 = vmatpush2.msra.mxu0 0.0
  %1009 = vmatprep.mubr.f32.mxu0 0.0
  %1010 = vmatmul.mubr.f32.gmra.mxu0 %v931
  %v1011 = vpop.f32.mrf.mxu0
  %v1012 = vadd.f32 0.0, %v1011
  %v1013 = vpop.f32.mrf.mxu0
  %1014 = vdwg.mxu0
  %1015 = vmatprep.subr.mxu0 0.0
  %1016 = vmatpush1.msra.mxu0 %v107
  %1017 = vmatprep.subr.mxu0 0.0
  %1018 = vmatpush1.msra.mxu0 %v106
  %1019 = vmatprep.subr.mxu0 0.0
  %1020 = vmatpush1.msra.mxu0 %v105
  %1021 = vmatprep.subr.mxu0 0.0
  %1022 = vmatpush1.msra.mxu0 %v104
  %1023 = vmatprep.subr.mxu0 0.0
  %1024 = vmatpush1.msra.mxu0 %v103
  %1025 = vmatprep.subr.mxu0 0.0
  %1026 = vmatpush1.msra.mxu0 %v102
  %1027 = vmatprep.subr.mxu0 0.0
  %1028 = vmatpush1.msra.mxu0 %v101
  %1029 = vmatprep.subr.mxu0 0.0
  %1030 = vmatpush1.msra.mxu0 %v100
  %1031 = vmatprep.subr.mxu0 0.0
  %1032 = vmatpush1.msra.mxu0 %v99
  %1033 = vmatprep.subr.mxu0 0.0
  %1034 = vmatpush1.msra.mxu0 %v98
  %1035 = vmatprep.subr.mxu0 0.0
  %1036 = vmatpush1.msra.mxu0 %v97
  %1037 = vmatprep.subr.mxu0 0.0
  %1038 = vmatpush1.msra.mxu0 %v96
  %1039 = vmatprep.subr.mxu0 0.0
  %1040 = vmatpush1.msra.mxu0 %v95
  %1041 = vmatprep.subr.mxu0 0.0
  %1042 = vmatpush1.msra.mxu0 %v94
  %1043 = vmatprep.subr.mxu0 0.0
  %1044 = vmatpush1.msra.mxu0 %v93
  %1045 = vmatprep.subr.mxu0 0.0
  %1046 = vmatpush1.msra.mxu0 %v92
  %1047 = vmatprep.subr.mxu0 0.0
  %1048 = vmatpush2.msra.mxu0 0.0
  %1049 = vmatprep.subr.mxu0 0.0
  %1050 = vmatpush2.msra.mxu0 0.0
  %1051 = vmatprep.subr.mxu0 0.0
  %1052 = vmatpush2.msra.mxu0 0.0
  %1053 = vmatprep.subr.mxu0 0.0
  %1054 = vmatpush2.msra.mxu0 0.0
  %1055 = vmatprep.subr.mxu0 0.0
  %1056 = vmatpush2.msra.mxu0 0.0
  %1057 = vmatprep.subr.mxu0 0.0
  %1058 = vmatpush2.msra.mxu0 0.0
  %1059 = vmatprep.subr.mxu0 0.0
  %1060 = vmatpush2.msra.mxu0 0.0
  %1061 = vmatprep.subr.mxu0 0.0
  %1062 = vmatpush2.msra.mxu0 0.0
  %1063 = vmatprep.subr.mxu0 0.0
  %1064 = vmatpush2.msra.mxu0 0.0
  %1065 = vmatprep.subr.mxu0 0.0
  %1066 = vmatpush2.msra.mxu0 0.0
  %1067 = vmatprep.subr.mxu0 0.0
  %1068 = vmatpush2.msra.mxu0 0.0
  %1069 = vmatprep.subr.mxu0 0.0
  %1070 = vmatpush2.msra.mxu0 0.0
  %1071 = vmatprep.subr.mxu0 0.0
  %1072 = vmatpush2.msra.mxu0 0.0
  %1073 = vmatprep.subr.mxu0 0.0
  %1074 = vmatpush2.msra.mxu0 0.0
  %1075 = vmatprep.subr.mxu0 0.0
  %1076 = vmatpush2.msra.mxu0 0.0
  %1077 = vmatprep.subr.mxu0 0.0
  %1078 = vmatpush2.msra.mxu0 0.0
  %1079 = vmatprep.mubr.f32.mxu0 0.0
  %1080 = vmatmul.mubr.f32.gmra.mxu0 %v944
  %v1081 = vpop.f32.mrf.mxu0
  %v1082 = vadd.f32 0.0, %v1081
  %v1083 = vpop.f32.mrf.mxu0
  %1084 = vdwg.mxu0
  %v1085 = vmul.f32 %v1012, 0.001953125
  %v1086 = vmul.f32 %v1082, 0.001953125
  %v1087 = vmul.f32 %v1085, %v1085
  %v1088 = vsub.f32 %v1086, %v1087
  %v1089 = vadd.f32 %v1088, 1e-05
  %v1090 = vrsqrt.pop %v1089
  %v1092 = vsel %vm376, %v1085, 0
  %1094 = vmatprep.subr.mxu0 0.0
  %1095 = vmatpush1.msra.mxu0 0.0
  %1096 = vmatprep.subr.mxu0 0.0
  %1097 = vmatpush1.msra.mxu0 0.0
  %1098 = vmatprep.subr.mxu0 0.0
  %1099 = vmatpush1.msra.mxu0 0.0
  %1100 = vmatprep.subr.mxu0 0.0
  %1101 = vmatpush1.msra.mxu0 0.0
  %1102 = vmatprep.subr.mxu0 0.0
  %1103 = vmatpush1.msra.mxu0 0.0
  %1104 = vmatprep.subr.mxu0 0.0
  %1105 = vmatpush1.msra.mxu0 0.0
  %1106 = vmatprep.subr.mxu0 0.0
  %1107 = vmatpush1.msra.mxu0 0.0
  %1108 = vmatprep.subr.mxu0 0.0
  %1109 = vmatpush1.msra.mxu0 0.0
  %1110 = vmatprep.subr.mxu0 0.0
  %1111 = vmatpush1.msra.mxu0 0.0
  %1112 = vmatprep.subr.mxu0 0.0
  %1113 = vmatpush1.msra.mxu0 0.0
  %1114 = vmatprep.subr.mxu0 0.0
  %1115 = vmatpush1.msra.mxu0 0.0
  %1116 = vmatprep.subr.mxu0 0.0
  %1117 = vmatpush1.msra.mxu0 0.0
  %1118 = vmatprep.subr.mxu0 0.0
  %1119 = vmatpush1.msra.mxu0 0.0
  %1120 = vmatprep.subr.mxu0 0.0
  %1121 = vmatpush1.msra.mxu0 0.0
  %1122 = vmatprep.subr.mxu0 0.0
  %1123 = vmatpush1.msra.mxu0 0.0
  %1124 = vmatprep.subr.mxu0 0.0
  %1125 = vmatpush1.msra.mxu0 %v108
  %1126 = vmatprep.subr.mxu0 0.0
  %1127 = vmatpush2.msra.mxu0 0.0
  %1128 = vmatprep.subr.mxu0 0.0
  %1129 = vmatpush2.msra.mxu0 0.0
  %1130 = vmatprep.subr.mxu0 0.0
  %1131 = vmatpush2.msra.mxu0 0.0
  %1132 = vmatprep.subr.mxu0 0.0
  %1133 = vmatpush2.msra.mxu0 0.0
  %1134 = vmatprep.subr.mxu0 0.0
  %1135 = vmatpush2.msra.mxu0 0.0
  %1136 = vmatprep.subr.mxu0 0.0
  %1137 = vmatpush2.msra.mxu0 0.0
  %1138 = vmatprep.subr.mxu0 0.0
  %1139 = vmatpush2.msra.mxu0 0.0
  %1140 = vmatprep.subr.mxu0 0.0
  %1141 = vmatpush2.msra.mxu0 0.0
  %1142 = vmatprep.subr.mxu0 0.0
  %1143 = vmatpush2.msra.mxu0 0.0
  %1144 = vmatprep.subr.mxu0 0.0
  %1145 = vmatpush2.msra.mxu0 0.0
  %1146 = vmatprep.subr.mxu0 0.0
  %1147 = vmatpush2.msra.mxu0 0.0
  %1148 = vmatprep.subr.mxu0 0.0
  %1149 = vmatpush2.msra.mxu0 0.0
  %1150 = vmatprep.subr.mxu0 0.0
  %1151 = vmatpush2.msra.mxu0 0.0
  %1152 = vmatprep.subr.mxu0 0.0
  %1153 = vmatpush2.msra.mxu0 0.0
  %1154 = vmatprep.subr.mxu0 0.0
  %1155 = vmatpush2.msra.mxu0 0.0
  %1156 = vmatprep.subr.mxu0 0.0
  %1157 = vmatpush2.msra.mxu0 0.0
  %1158 = vmatprep.mubr.f32.mxu0 0.0
  %1159 = vmatmul.mubr.f32.gmra.mxu0 %v1092
  %v1160 = vpop.f32.mrf.mxu0
  %v1161 = vadd.f32 0.0, %v1160
  %v1162 = vpop.f32.mrf.mxu0
  %1163 = vdwg.mxu0
  %v1165 = vsel %vm376, %v1090, 0
  %1167 = vmatprep.subr.mxu0 0.0
  %1168 = vmatpush1.msra.mxu0 0.0
  %1169 = vmatprep.subr.mxu0 0.0
  %1170 = vmatpush1.msra.mxu0 0.0
  %1171 = vmatprep.subr.mxu0 0.0
  %1172 = vmatpush1.msra.mxu0 0.0
  %1173 = vmatprep.subr.mxu0 0.0
  %1174 = vmatpush1.msra.mxu0 0.0
  %1175 = vmatprep.subr.mxu0 0.0
  %1176 = vmatpush1.msra.mxu0 0.0
  %1177 = vmatprep.subr.mxu0 0.0
  %1178 = vmatpush1.msra.mxu0 0.0
  %1179 = vmatprep.subr.mxu0 0.0
  %1180 = vmatpush1.msra.mxu0 0.0
  %1181 = vmatprep.subr.mxu0 0.0
  %1182 = vmatpush1.msra.mxu0 0.0
  %1183 = vmatprep.subr.mxu0 0.0
  %1184 = vmatpush1.msra.mxu0 0.0
  %1185 = vmatprep.subr.mxu0 0.0
  %1186 = vmatpush1.msra.mxu0 0.0
  %1187 = vmatprep.subr.mxu0 0.0
  %1188 = vmatpush1.msra.mxu0 0.0
  %1189 = vmatprep.subr.mxu0 0.0
  %1190 = vmatpush1.msra.mxu0 0.0
  %1191 = vmatprep.subr.mxu0 0.0
  %1192 = vmatpush1.msra.mxu0 0.0
  %1193 = vmatprep.subr.mxu0 0.0
  %1194 = vmatpush1.msra.mxu0 0.0
  %1195 = vmatprep.subr.mxu0 0.0
  %1196 = vmatpush1.msra.mxu0 0.0
  %1197 = vmatprep.subr.mxu0 0.0
  %1198 = vmatpush1.msra.mxu0 %v108
  %1199 = vmatprep.subr.mxu0 0.0
  %1200 = vmatpush2.msra.mxu0 0.0
  %1201 = vmatprep.subr.mxu0 0.0
  %1202 = vmatpush2.msra.mxu0 0.0
  %1203 = vmatprep.subr.mxu0 0.0
  %1204 = vmatpush2.msra.mxu0 0.0
  %1205 = vmatprep.subr.mxu0 0.0
  %1206 = vmatpush2.msra.mxu0 0.0
  %1207 = vmatprep.subr.mxu0 0.0
  %1208 = vmatpush2.msra.mxu0 0.0
  %1209 = vmatprep.subr.mxu0 0.0
  %1210 = vmatpush2.msra.mxu0 0.0
  %1211 = vmatprep.subr.mxu0 0.0
  %1212 = vmatpush2.msra.mxu0 0.0
  %1213 = vmatprep.subr.mxu0 0.0
  %1214 = vmatpush2.msra.mxu0 0.0
  %1215 = vmatprep.subr.mxu0 0.0
  %1216 = vmatpush2.msra.mxu0 0.0
  %1217 = vmatprep.subr.mxu0 0.0
  %1218 = vmatpush2.msra.mxu0 0.0
  %1219 = vmatprep.subr.mxu0 0.0
  %1220 = vmatpush2.msra.mxu0 0.0
  %1221 = vmatprep.subr.mxu0 0.0
  %1222 = vmatpush2.msra.mxu0 0.0
  %1223 = vmatprep.subr.mxu0 0.0
  %1224 = vmatpush2.msra.mxu0 0.0
  %1225 = vmatprep.subr.mxu0 0.0
  %1226 = vmatpush2.msra.mxu0 0.0
  %1227 = vmatprep.subr.mxu0 0.0
  %1228 = vmatpush2.msra.mxu0 0.0
  %1229 = vmatprep.subr.mxu0 0.0
  %1230 = vmatpush2.msra.mxu0 0.0
  %1231 = vmatprep.mubr.f32.mxu0 0.0
  %1232 = vmatmul.mubr.f32.gmra.mxu0 %v1165
  %v1233 = vpop.f32.mrf.mxu0
  %v1234 = vadd.f32 0.0, %v1233
  %v1235 = vpop.f32.mrf.mxu0
  %1236 = vdwg.mxu0
  %v1237 = vlaneseq
  %v1238 = vshrl.u32 %v1237, 7
  %v1239 = vsub.s32 0, %v1238
  %v1240 = vrot.slane %v1161, %v1239
  %v1241 = vsub.f32 %v907, %v1240
  %v1242 = vsub.f32 %v910, %v1240
  %v1243 = vsub.f32 %v915, %v1240
  %v1244 = vsub.f32 %v918, %v1240
  %v1245 = vlaneseq
  %v1246 = vshrl.u32 %v1245, 7
  %v1247 = vsub.s32 0, %v1246
  %v1248 = vrot.slane %v1234, %v1247
  %v1249 = vmul.f32 %v1241, %v1248
  %v1250 = vmul.f32 %v1242, %v1248
  %v1251 = vmul.f32 %v1243, %v1248
  %v1252 = vmul.f32 %v1244, %v1248
  %v1254 = vlaneseq
  %v1255 = vshrl.u32 %v1254, 7
  %v1256 = vsub.s32 0, %v1255
  %v1257 = vrot.slane %v921, %v1256
  %v1259 = vmul.f32 %v1249, %v1257
  %v1260 = vmul.f32 %v1250, %v1257
  %v1261 = vmul.f32 %v1251, %v1257
  %v1262 = vmul.f32 %v1252, %v1257
  %v1264 = vlaneseq
  %v1265 = vshrl.u32 %v1264, 7
  %v1266 = vsub.s32 0, %v1265
  %v1267 = vrot.slane %v922, %v1266
  %v1269 = vadd.f32 %v1259, %v1267
  %v1270 = vadd.f32 %v1260, %v1267
  %v1271 = vadd.f32 %v1261, %v1267
  %v1272 = vadd.f32 %v1262, %v1267
  %v1273 = vmax.f32 %v1269, 0.0
  %v1274 = vmax.f32 %v1270, 0.0
  %v1275 = vmax.f32 %v1271, 0.0
  %v1276 = vmax.f32 %v1272, 0.0
  %v1277 = vadd.f32 %v1273, %v1274
  %v1278 = vrot.slane %v1277, 4
  %v1279 = vadd.f32 %v1277, %v1278
  %v1280 = vrot.slane %v1279, 2
  %v1281 = vadd.f32 %v1279, %v1280
  %v1282 = vrot.slane %v1281, 1
  %v1283 = vadd.f32 %v1281, %v1282
  %v1284 = vadd.f32 %v1275, %v1276
  %v1285 = vrot.slane %v1284, 4
  %v1286 = vadd.f32 %v1284, %v1285
  %v1287 = vrot.slane %v1286, 2
  %v1288 = vadd.f32 %v1286, %v1287
  %v1289 = vrot.slane %v1288, 1
  %v1290 = vadd.f32 %v1288, %v1289
  %vm1293 = vcmask 1041409
  %v1294 = vsel %vm1293, %v1290, %v1283
  %1296 = vmatprep.subr.mxu0 0.0
  %1297 = vmatpush1.msra.mxu0 %v107
  %1298 = vmatprep.subr.mxu0 0.0
  %1299 = vmatpush1.msra.mxu0 %v106
  %1300 = vmatprep.subr.mxu0 0.0
  %1301 = vmatpush1.msra.mxu0 %v105
  %1302 = vmatprep.subr.mxu0 0.0
  %1303 = vmatpush1.msra.mxu0 %v104
  %1304 = vmatprep.subr.mxu0 0.0
  %1305 = vmatpush1.msra.mxu0 %v103
  %1306 = vmatprep.subr.mxu0 0.0
  %1307 = vmatpush1.msra.mxu0 %v102
  %1308 = vmatprep.subr.mxu0 0.0
  %1309 = vmatpush1.msra.mxu0 %v101
  %1310 = vmatprep.subr.mxu0 0.0
  %1311 = vmatpush1.msra.mxu0 %v100
  %1312 = vmatprep.subr.mxu0 0.0
  %1313 = vmatpush1.msra.mxu0 %v99
  %1314 = vmatprep.subr.mxu0 0.0
  %1315 = vmatpush1.msra.mxu0 %v98
  %1316 = vmatprep.subr.mxu0 0.0
  %1317 = vmatpush1.msra.mxu0 %v97
  %1318 = vmatprep.subr.mxu0 0.0
  %1319 = vmatpush1.msra.mxu0 %v96
  %1320 = vmatprep.subr.mxu0 0.0
  %1321 = vmatpush1.msra.mxu0 %v95
  %1322 = vmatprep.subr.mxu0 0.0
  %1323 = vmatpush1.msra.mxu0 %v94
  %1324 = vmatprep.subr.mxu0 0.0
  %1325 = vmatpush1.msra.mxu0 %v93
  %1326 = vmatprep.subr.mxu0 0.0
  %1327 = vmatpush1.msra.mxu0 %v92
  %1328 = vmatprep.subr.mxu0 0.0
  %1329 = vmatpush2.msra.mxu0 0.0
  %1330 = vmatprep.subr.mxu0 0.0
  %1331 = vmatpush2.msra.mxu0 0.0
  %1332 = vmatprep.subr.mxu0 0.0
  %1333 = vmatpush2.msra.mxu0 0.0
  %1334 = vmatprep.subr.mxu0 0.0
  %1335 = vmatpush2.msra.mxu0 0.0
  %1336 = vmatprep.subr.mxu0 0.0
  %1337 = vmatpush2.msra.mxu0 0.0
  %1338 = vmatprep.subr.mxu0 0.0
  %1339 = vmatpush2.msra.mxu0 0.0
  %1340 = vmatprep.subr.mxu0 0.0
  %1341 = vmatpush2.msra.mxu0 0.0
  %1342 = vmatprep.subr.mxu0 0.0
  %1343 = vmatpush2.msra.mxu0 0.0
  %1344 = vmatprep.subr.mxu0 0.0
  %1345 = vmatpush2.msra.mxu0 0.0
  %1346 = vmatprep.subr.mxu0 0.0
  %1347 = vmatpush2.msra.mxu0 0.0
  %1348 = vmatprep.subr.mxu0 0.0
  %1349 = vmatpush2.msra.mxu0 0.0
  %1350 = vmatprep.subr.mxu0 0.0
  %1351 = vmatpush2.msra.mxu0 0.0
  %1352 = vmatprep.subr.mxu0 0.0
  %1353 = vmatpush2.msra.mxu0 0.0
  %1354 = vmatprep.subr.mxu0 0.0
  %1355 = vmatpush2.msra.mxu0 0.0
  %1356 = vmatprep.subr.mxu0 0.0
  %1357 = vmatpush2.msra.mxu0 0.0
  %1358 = vmatprep.subr.mxu0 0.0
  %1359 = vmatpush2.msra.mxu0 0.0
  %1360 = vmatprep.mubr.f32.mxu0 0.0
  %1361 = vmatmul.mubr.f32.gmra.mxu0 %v1294
  %v1362 = vpop.f32.mrf.mxu0
  %v1363 = vadd.f32 0.0, %v1362
  %v1364 = vpop.f32.mrf.mxu0
  %1365 = vdwg.mxu0
  %v1366 = vmul.f32 %v1363, 0.00390625
  %v1367 = vmax.f32 %v1273, %v1274
  %v1368 = vrot.slane %v1367, 4
  %v1369 = vmax.f32 %v1367, %v1368
  %v1370 = vrot.slane %v1369, 2
  %v1371 = vmax.f32 %v1369, %v1370
  %v1372 = vrot.slane %v1371, 1
  %v1373 = vmax.f32 %v1371, %v1372
  %v1374 = vmax.f32 %v1275, %v1276
  %v1375 = vrot.slane %v1374, 4
  %v1376 = vmax.f32 %v1374, %v1375
  %v1377 = vrot.slane %v1376, 2
  %v1378 = vmax.f32 %v1376, %v1377
  %v1379 = vrot.slane %v1378, 1
  %v1380 = vmax.f32 %v1378, %v1379
  %1383 = vrot.lane.b32.xlu0 %v1373, 120
  %v1384 = vpop.permute.xlu0 %1383
  %1385 = vrot.lane.b32.xlu0 %v1380, 120
  %v1386 = vpop.permute.xlu0 %1385
  %1387 = vrot.lane.b32.xlu0 %v1373, 112
  %v1388 = vpop.permute.xlu0 %1387
  %1389 = vrot.lane.b32.xlu0 %v1380, 112
  %v1390 = vpop.permute.xlu0 %1389
  %1391 = vrot.lane.b32.xlu0 %v1373, 104
  %v1392 = vpop.permute.xlu0 %1391
  %1393 = vrot.lane.b32.xlu0 %v1380, 104
  %v1394 = vpop.permute.xlu0 %1393
  %1395 = vrot.lane.b32.xlu0 %v1373, 96
  %v1396 = vpop.permute.xlu0 %1395
  %1397 = vrot.lane.b32.xlu0 %v1380, 96
  %v1398 = vpop.permute.xlu0 %1397
  %1399 = vrot.lane.b32.xlu0 %v1373, 88
  %v1400 = vpop.permute.xlu0 %1399
  %1401 = vrot.lane.b32.xlu0 %v1380, 88
  %v1402 = vpop.permute.xlu0 %1401
  %1403 = vrot.lane.b32.xlu0 %v1373, 80
  %v1404 = vpop.permute.xlu0 %1403
  %1405 = vrot.lane.b32.xlu0 %v1380, 80
  %v1406 = vpop.permute.xlu0 %1405
  %1407 = vrot.lane.b32.xlu0 %v1373, 72
  %v1408 = vpop.permute.xlu0 %1407
  %1409 = vrot.lane.b32.xlu0 %v1380, 72
  %v1410 = vpop.permute.xlu0 %1409
  %1411 = vrot.lane.b32.xlu0 %v1373, 64
  %v1412 = vpop.permute.xlu0 %1411
  %1413 = vrot.lane.b32.xlu0 %v1380, 64
  %v1414 = vpop.permute.xlu0 %1413
  %1415 = vrot.lane.b32.xlu0 %v1373, 56
  %v1416 = vpop.permute.xlu0 %1415
  %1417 = vrot.lane.b32.xlu0 %v1380, 56
  %v1418 = vpop.permute.xlu0 %1417
  %1419 = vrot.lane.b32.xlu0 %v1373, 48
  %v1420 = vpop.permute.xlu0 %1419
  %1421 = vrot.lane.b32.xlu0 %v1380, 48
  %v1422 = vpop.permute.xlu0 %1421
  %1423 = vrot.lane.b32.xlu0 %v1373, 40
  %v1424 = vpop.permute.xlu0 %1423
  %1425 = vrot.lane.b32.xlu0 %v1380, 40
  %v1426 = vpop.permute.xlu0 %1425
  %1427 = vrot.lane.b32.xlu0 %v1373, 32
  %v1428 = vpop.permute.xlu0 %1427
  %1429 = vrot.lane.b32.xlu0 %v1380, 32
  %v1430 = vpop.permute.xlu0 %1429
  %1431 = vrot.lane.b32.xlu0 %v1373, 24
  %v1432 = vpop.permute.xlu0 %1431
  %1433 = vrot.lane.b32.xlu0 %v1380, 24
  %v1434 = vpop.permute.xlu0 %1433
  %1435 = vrot.lane.b32.xlu0 %v1373, 16
  %v1436 = vpop.permute.xlu0 %1435
  %1437 = vrot.lane.b32.xlu0 %v1380, 16
  %v1438 = vpop.permute.xlu0 %1437
  %1439 = vrot.lane.b32.xlu0 %v1373, 8
  %v1440 = vpop.permute.xlu0 %1439
  %1441 = vrot.lane.b32.xlu0 %v1380, 8
  %v1442 = vpop.permute.xlu0 %1441
  %v1443 = vrot.slane %v1380, 7
  %v1444 = vsel %vm1293, %v1443, %v1373
  %v1445 = vrot.slane %v1386, 7
  %v1446 = vsel %vm1293, %v1445, %v1384
  %v1447 = vrot.slane %v1390, 7
  %v1448 = vsel %vm1293, %v1447, %v1388
  %v1449 = vrot.slane %v1394, 7
  %v1450 = vsel %vm1293, %v1449, %v1392
  %v1451 = vrot.slane %v1398, 7
  %v1452 = vsel %vm1293, %v1451, %v1396
  %v1453 = vrot.slane %v1402, 7
  %v1454 = vsel %vm1293, %v1453, %v1400
  %v1455 = vrot.slane %v1406, 7
  %v1456 = vsel %vm1293, %v1455, %v1404
  %v1457 = vrot.slane %v1410, 7
  %v1458 = vsel %vm1293, %v1457, %v1408
  %v1459 = vrot.slane %v1414, 7
  %v1460 = vsel %vm1293, %v1459, %v1412
  %v1461 = vrot.slane %v1418, 7
  %v1462 = vsel %vm1293, %v1461, %v1416
  %v1463 = vrot.slane %v1422, 7
  %v1464 = vsel %vm1293, %v1463, %v1420
  %v1465 = vrot.slane %v1426, 7
  %v1466 = vsel %vm1293, %v1465, %v1424
  %v1467 = vrot.slane %v1430, 7
  %v1468 = vsel %vm1293, %v1467, %v1428
  %v1469 = vrot.slane %v1434, 7
  %v1470 = vsel %vm1293, %v1469, %v1432
  %v1471 = vrot.slane %v1438, 7
  %v1472 = vsel %vm1293, %v1471, %v1436
  %v1473 = vrot.slane %v1442, 7
  %v1474 = vsel %vm1293, %v1473, %v1440
  %v1491 = vcombine.low %v1444, %v1448
  %v1493 = vunpack.c.l.s4 1983009808
  %v1494 = vunpack.c.0.s8 %v1493
  %v1495 = vlaneseq
  %v1496 = vshrl.u32 %v1495, 7
  %v1497 = vsub.s32 %v1494, %v1496
  %v1498 = vrot.slane %v1491, %v1497
  %v1499 = vcombine.low %v1446, %v1450
  %v1501 = vunpack.c.l.s4 1983009808
  %v1502 = vunpack.c.0.s8 %v1501
  %v1503 = vlaneseq
  %v1504 = vshrl.u32 %v1503, 7
  %v1505 = vsub.s32 %v1502, %v1504
  %v1506 = vrot.slane %v1499, %v1505
  %v1507 = vcombine.low %v1452, %v1456
  %v1509 = vunpack.c.l.s4 1983009808
  %v1510 = vunpack.c.0.s8 %v1509
  %v1511 = vlaneseq
  %v1512 = vshrl.u32 %v1511, 7
  %v1513 = vsub.s32 %v1510, %v1512
  %v1514 = vrot.slane %v1507, %v1513
  %v1515 = vcombine.low %v1454, %v1458
  %v1517 = vunpack.c.l.s4 1983009808
  %v1518 = vunpack.c.0.s8 %v1517
  %v1519 = vlaneseq
  %v1520 = vshrl.u32 %v1519, 7
  %v1521 = vsub.s32 %v1518, %v1520
  %v1522 = vrot.slane %v1515, %v1521
  %v1523 = vcombine.low %v1498, %v1506
  %v1525 = vunpack.c.l.s4 1934713408
  %v1526 = vunpack.c.0.s8 %v1525
  %v1527 = vlaneseq
  %v1528 = vshrl.u32 %v1527, 7
  %v1529 = vsub.s32 %v1526, %v1528
  %v1530 = vrot.slane %v1523, %v1529
  %v1531 = vcombine.low %v1514, %v1522
  %v1533 = vunpack.c.l.s4 1934713408
  %v1534 = vunpack.c.0.s8 %v1533
  %v1535 = vlaneseq
  %v1536 = vshrl.u32 %v1535, 7
  %v1537 = vsub.s32 %v1534, %v1536
  %v1538 = vrot.slane %v1531, %v1537
  %v1539 = vcombine.low %v1530, %v1538
  %v1540 = vcombine.high %v1530, %v1538
  %v1541 = vcombine.low %v1460, %v1464
  %v1543 = vunpack.c.l.s4 1983009808
  %v1544 = vunpack.c.0.s8 %v1543
  %v1545 = vlaneseq
  %v1546 = vshrl.u32 %v1545, 7
  %v1547 = vsub.s32 %v1544, %v1546
  %v1548 = vrot.slane %v1541, %v1547
  %v1549 = vcombine.low %v1462, %v1466
  %v1551 = vunpack.c.l.s4 1983009808
  %v1552 = vunpack.c.0.s8 %v1551
  %v1553 = vlaneseq
  %v1554 = vshrl.u32 %v1553, 7
  %v1555 = vsub.s32 %v1552, %v1554
  %v1556 = vrot.slane %v1549, %v1555
  %v1557 = vcombine.low %v1468, %v1472
  %v1559 = vunpack.c.l.s4 1983009808
  %v1560 = vunpack.c.0.s8 %v1559
  %v1561 = vlaneseq
  %v1562 = vshrl.u32 %v1561, 7
  %v1563 = vsub.s32 %v1560, %v1562
  %v1564 = vrot.slane %v1557, %v1563
  %v1565 = vcombine.low %v1470, %v1474
  %v1567 = vunpack.c.l.s4 1983009808
  %v1568 = vunpack.c.0.s8 %v1567
  %v1569 = vlaneseq
  %v1570 = vshrl.u32 %v1569, 7
  %v1571 = vsub.s32 %v1568, %v1570
  %v1572 = vrot.slane %v1565, %v1571
  %v1573 = vcombine.low %v1548, %v1556
  %v1575 = vunpack.c.l.s4 1934713408
  %v1576 = vunpack.c.0.s8 %v1575
  %v1577 = vlaneseq
  %v1578 = vshrl.u32 %v1577, 7
  %v1579 = vsub.s32 %v1576, %v1578
  %v1580 = vrot.slane %v1573, %v1579
  %v1581 = vcombine.low %v1564, %v1572
  %v1583 = vunpack.c.l.s4 1934713408
  %v1584 = vunpack.c.0.s8 %v1583
  %v1585 = vlaneseq
  %v1586 = vshrl.u32 %v1585, 7
  %v1587 = vsub.s32 %v1584, %v1586
  %v1588 = vrot.slane %v1581, %v1587
  %v1589 = vcombine.low %v1580, %v1588
  %v1590 = vcombine.high %v1580, %v1588
  %v1591 = vsel %vm376, %v1539, -inf
  %v1592 = vsel %vm376, %v1589, -inf
  %v1593 = vmax.f32 %v1591, %v1592
  %v1594 = vrot.slane %v1593, 4
  %v1595 = vmax.f32 %v1593, %v1594
  %v1596 = vrot.slane %v1595, 2
  %v1597 = vmax.f32 %v1595, %v1596
  %v1598 = vrot.slane %v1597, 1
  %v1599 = vmax.f32 %v1597, %v1598
  %v1600 = vsel %vm376, %v1540, -inf
  %v1601 = vsel %vm376, %v1590, -inf
  %v1602 = vmax.f32 %v1600, %v1601
  %v1603 = vrot.slane %v1602, 4
  %v1604 = vmax.f32 %v1602, %v1603
  %v1605 = vrot.slane %v1604, 2
  %v1606 = vmax.f32 %v1604, %v1605
  %v1607 = vrot.slane %v1606, 1
  %v1608 = vmax.f32 %v1606, %v1607
  %v1609 = vld [vmem:[%s9] sm:$0xff]
  %v1611 = vsel %vm376, %v1366, 0
  %1613 = vmatprep.subr.mxu0 0.0
  %1614 = vmatpush1.msra.mxu0 0.0
  %1615 = vmatprep.subr.mxu0 0.0
  %1616 = vmatpush1.msra.mxu0 0.0
  %1617 = vmatprep.subr.mxu0 0.0
  %1618 = vmatpush1.msra.mxu0 0.0
  %1619 = vmatprep.subr.mxu0 0.0
  %1620 = vmatpush1.msra.mxu0 0.0
  %1621 = vmatprep.subr.mxu0 0.0
  %1622 = vmatpush1.msra.mxu0 0.0
  %1623 = vmatprep.subr.mxu0 0.0
  %1624 = vmatpush1.msra.mxu0 0.0
  %1625 = vmatprep.subr.mxu0 0.0
  %1626 = vmatpush1.msra.mxu0 0.0
  %1627 = vmatprep.subr.mxu0 0.0
  %1628 = vmatpush1.msra.mxu0 0.0
  %1629 = vmatprep.subr.mxu0 0.0
  %1630 = vmatpush1.msra.mxu0 0.0
  %1631 = vmatprep.subr.mxu0 0.0
  %1632 = vmatpush1.msra.mxu0 0.0
  %1633 = vmatprep.subr.mxu0 0.0
  %1634 = vmatpush1.msra.mxu0 0.0
  %1635 = vmatprep.subr.mxu0 0.0
  %1636 = vmatpush1.msra.mxu0 0.0
  %1637 = vmatprep.subr.mxu0 0.0
  %1638 = vmatpush1.msra.mxu0 0.0
  %1639 = vmatprep.subr.mxu0 0.0
  %1640 = vmatpush1.msra.mxu0 0.0
  %1641 = vmatprep.subr.mxu0 0.0
  %1642 = vmatpush1.msra.mxu0 0.0
  %1643 = vmatprep.subr.mxu0 0.0
  %1644 = vmatpush1.msra.mxu0 %v1609
  %1645 = vmatprep.subr.mxu0 0.0
  %1646 = vmatpush2.msra.mxu0 0.0
  %1647 = vmatprep.subr.mxu0 0.0
  %1648 = vmatpush2.msra.mxu0 0.0
  %1649 = vmatprep.subr.mxu0 0.0
  %1650 = vmatpush2.msra.mxu0 0.0
  %1651 = vmatprep.subr.mxu0 0.0
  %1652 = vmatpush2.msra.mxu0 0.0
  %1653 = vmatprep.subr.mxu0 0.0
  %1654 = vmatpush2.msra.mxu0 0.0
  %1655 = vmatprep.subr.mxu0 0.0
  %1656 = vmatpush2.msra.mxu0 0.0
  %1657 = vmatprep.subr.mxu0 0.0
  %1658 = vmatpush2.msra.mxu0 0.0
  %1659 = vmatprep.subr.mxu0 0.0
  %1660 = vmatpush2.msra.mxu0 0.0
  %1661 = vmatprep.subr.mxu0 0.0
  %1662 = vmatpush2.msra.mxu0 0.0
  %1663 = vmatprep.subr.mxu0 0.0
  %1664 = vmatpush2.msra.mxu0 0.0
  %1665 = vmatprep.subr.mxu0 0.0
  %1666 = vmatpush2.msra.mxu0 0.0
  %1667 = vmatprep.subr.mxu0 0.0
  %1668 = vmatpush2.msra.mxu0 0.0
  %1669 = vmatprep.subr.mxu0 0.0
  %1670 = vmatpush2.msra.mxu0 0.0
  %1671 = vmatprep.subr.mxu0 0.0
  %1672 = vmatpush2.msra.mxu0 0.0
  %1673 = vmatprep.subr.mxu0 0.0
  %1674 = vmatpush2.msra.mxu0 0.0
  %1675 = vmatprep.subr.mxu0 0.0
  %1676 = vmatpush2.msra.mxu0 0.0
  %1677 = vmatprep.mubr.f32.mxu0 0.0
  %1678 = vmatmul.mubr.f32.gmra.mxu0 %v1611
  %v1679 = vpop.f32.mrf.mxu0
  %v1680 = vadd.f32 0.0, %v1679
  %v1681 = vpop.f32.mrf.mxu0
  %1682 = vdwg.mxu0
  %v1683 = vmax.f32 %v1680, 0.0
  %v1684 = vld [vmem:[%s10] sm:$0x1]
  %v1685 = vld [vmem:[%s11] sm:$0xff]
  %v1688 = vsel %vm1293, %v1608, %v1599
  %v1689 = vsel %vm376, %v1688, 0
  %1691 = vmatprep.subr.mxu0 0.0
  %1692 = vmatpush1.msra.mxu0 0.0
  %1693 = vmatprep.subr.mxu0 0.0
  %1694 = vmatpush1.msra.mxu0 0.0
  %1695 = vmatprep.subr.mxu0 0.0
  %1696 = vmatpush1.msra.mxu0 0.0
  %1697 = vmatprep.subr.mxu0 0.0
  %1698 = vmatpush1.msra.mxu0 0.0
  %1699 = vmatprep.subr.mxu0 0.0
  %1700 = vmatpush1.msra.mxu0 0.0
  %1701 = vmatprep.subr.mxu0 0.0
  %1702 = vmatpush1.msra.mxu0 0.0
  %1703 = vmatprep.subr.mxu0 0.0
  %1704 = vmatpush1.msra.mxu0 0.0
  %1705 = vmatprep.subr.mxu0 0.0
  %1706 = vmatpush1.msra.mxu0 0.0
  %1707 = vmatprep.subr.mxu0 0.0
  %1708 = vmatpush1.msra.mxu0 0.0
  %1709 = vmatprep.subr.mxu0 0.0
  %1710 = vmatpush1.msra.mxu0 0.0
  %1711 = vmatprep.subr.mxu0 0.0
  %1712 = vmatpush1.msra.mxu0 0.0
  %1713 = vmatprep.subr.mxu0 0.0
  %1714 = vmatpush1.msra.mxu0 0.0
  %1715 = vmatprep.subr.mxu0 0.0
  %1716 = vmatpush1.msra.mxu0 0.0
  %1717 = vmatprep.subr.mxu0 0.0
  %1718 = vmatpush1.msra.mxu0 0.0
  %1719 = vmatprep.subr.mxu0 0.0
  %1720 = vmatpush1.msra.mxu0 0.0
  %1721 = vmatprep.subr.mxu0 0.0
  %1722 = vmatpush1.msra.mxu0 %v1685
  %1723 = vmatprep.subr.mxu0 0.0
  %1724 = vmatpush2.msra.mxu0 0.0
  %1725 = vmatprep.subr.mxu0 0.0
  %1726 = vmatpush2.msra.mxu0 0.0
  %1727 = vmatprep.subr.mxu0 0.0
  %1728 = vmatpush2.msra.mxu0 0.0
  %1729 = vmatprep.subr.mxu0 0.0
  %1730 = vmatpush2.msra.mxu0 0.0
  %1731 = vmatprep.subr.mxu0 0.0
  %1732 = vmatpush2.msra.mxu0 0.0
  %1733 = vmatprep.subr.mxu0 0.0
  %1734 = vmatpush2.msra.mxu0 0.0
  %1735 = vmatprep.subr.mxu0 0.0
  %1736 = vmatpush2.msra.mxu0 0.0
  %1737 = vmatprep.subr.mxu0 0.0
  %1738 = vmatpush2.msra.mxu0 0.0
  %1739 = vmatprep.subr.mxu0 0.0
  %1740 = vmatpush2.msra.mxu0 0.0
  %1741 = vmatprep.subr.mxu0 0.0
  %1742 = vmatpush2.msra.mxu0 0.0
  %1743 = vmatprep.subr.mxu0 0.0
  %1744 = vmatpush2.msra.mxu0 0.0
  %1745 = vmatprep.subr.mxu0 0.0
  %1746 = vmatpush2.msra.mxu0 0.0
  %1747 = vmatprep.subr.mxu0 0.0
  %1748 = vmatpush2.msra.mxu0 0.0
  %1749 = vmatprep.subr.mxu0 0.0
  %1750 = vmatpush2.msra.mxu0 0.0
  %1751 = vmatprep.subr.mxu0 0.0
  %1752 = vmatpush2.msra.mxu0 0.0
  %1753 = vmatprep.subr.mxu0 0.0
  %1754 = vmatpush2.msra.mxu0 0.0
  %1755 = vmatprep.mubr.f32.mxu0 0.0
  %1756 = vmatmul.mubr.f32.gmra.mxu0 %v1689
  %v1757 = vpop.f32.mrf.mxu0
  %v1758 = vadd.f32 0.0, %v1757
  %v1759 = vpop.f32.mrf.mxu0
  %1760 = vdwg.mxu0
  %v1761 = vmax.f32 %v1758, 0.0
  %v1762 = vld [vmem:[%s12] sm:$0x1]
  %vm1763 = vcmask 7168
  %v1765 = vsel %vm1763, %v1761, 0
  %v1768 = vsel %vm567, %v1762, 0
  %1770 = vmatprep.subr.mxu0 0.0
  %1771 = vmatpush1.msra.mxu0 0.0
  %1772 = vmatprep.subr.mxu0 0.0
  %1773 = vmatpush1.msra.mxu0 0.0
  %1774 = vmatprep.subr.mxu0 0.0
  %1775 = vmatpush1.msra.mxu0 0.0
  %1776 = vmatprep.subr.mxu0 0.0
  %1777 = vmatpush1.msra.mxu0 0.0
  %1778 = vmatprep.subr.mxu0 0.0
  %1779 = vmatpush1.msra.mxu0 0.0
  %1780 = vmatprep.subr.mxu0 0.0
  %1781 = vmatpush1.msra.mxu0 0.0
  %1782 = vmatprep.subr.mxu0 0.0
  %1783 = vmatpush1.msra.mxu0 0.0
  %1784 = vmatprep.subr.mxu0 0.0
  %1785 = vmatpush1.msra.mxu0 0.0
  %1786 = vmatprep.subr.mxu0 0.0
  %1787 = vmatpush1.msra.mxu0 0.0
  %1788 = vmatprep.subr.mxu0 0.0
  %1789 = vmatpush1.msra.mxu0 0.0
  %1790 = vmatprep.subr.mxu0 0.0
  %1791 = vmatpush1.msra.mxu0 0.0
  %1792 = vmatprep.subr.mxu0 0.0
  %1793 = vmatpush1.msra.mxu0 0.0
  %1794 = vmatprep.subr.mxu0 0.0
  %1795 = vmatpush1.msra.mxu0 0.0
  %1796 = vmatprep.subr.mxu0 0.0
  %1797 = vmatpush1.msra.mxu0 0.0
  %1798 = vmatprep.subr.mxu0 0.0
  %1799 = vmatpush1.msra.mxu0 0.0
  %1800 = vmatprep.subr.mxu0 0.0
  %1801 = vmatpush1.msra.mxu0 %v1768
  %1802 = vmatprep.subr.mxu0 0.0
  %1803 = vmatpush2.msra.mxu0 0.0
  %1804 = vmatprep.subr.mxu0 0.0
  %1805 = vmatpush2.msra.mxu0 0.0
  %1806 = vmatprep.subr.mxu0 0.0
  %1807 = vmatpush2.msra.mxu0 0.0
  %1808 = vmatprep.subr.mxu0 0.0
  %1809 = vmatpush2.msra.mxu0 0.0
  %1810 = vmatprep.subr.mxu0 0.0
  %1811 = vmatpush2.msra.mxu0 0.0
  %1812 = vmatprep.subr.mxu0 0.0
  %1813 = vmatpush2.msra.mxu0 0.0
  %1814 = vmatprep.subr.mxu0 0.0
  %1815 = vmatpush2.msra.mxu0 0.0
  %1816 = vmatprep.subr.mxu0 0.0
  %1817 = vmatpush2.msra.mxu0 0.0
  %1818 = vmatprep.subr.mxu0 0.0
  %1819 = vmatpush2.msra.mxu0 0.0
  %1820 = vmatprep.subr.mxu0 0.0
  %1821 = vmatpush2.msra.mxu0 0.0
  %1822 = vmatprep.subr.mxu0 0.0
  %1823 = vmatpush2.msra.mxu0 0.0
  %1824 = vmatprep.subr.mxu0 0.0
  %1825 = vmatpush2.msra.mxu0 0.0
  %1826 = vmatprep.subr.mxu0 0.0
  %1827 = vmatpush2.msra.mxu0 0.0
  %1828 = vmatprep.subr.mxu0 0.0
  %1829 = vmatpush2.msra.mxu0 0.0
  %1830 = vmatprep.subr.mxu0 0.0
  %1831 = vmatpush2.msra.mxu0 0.0
  %1832 = vmatprep.subr.mxu0 0.0
  %1833 = vmatpush2.msra.mxu0 0.0
  %1834 = vmatprep.mubr.f32.mxu0 0.0
  %1835 = vmatmul.mubr.f32.gmra.mxu0 %v1765
  %v1836 = vpop.f32.mrf.mxu0
  %v1837 = vadd.f32 0.0, %v1836
  %v1838 = vpop.f32.mrf.mxu0
  %1839 = vdwg.mxu0
  %v1841 = vsel %vm1763, %v1683, 0
  %v1844 = vsel %vm567, %v1684, 0
  %1846 = vmatprep.subr.mxu0 0.0
  %1847 = vmatpush1.msra.mxu0 0.0
  %1848 = vmatprep.subr.mxu0 0.0
  %1849 = vmatpush1.msra.mxu0 0.0
  %1850 = vmatprep.subr.mxu0 0.0
  %1851 = vmatpush1.msra.mxu0 0.0
  %1852 = vmatprep.subr.mxu0 0.0
  %1853 = vmatpush1.msra.mxu0 0.0
  %1854 = vmatprep.subr.mxu0 0.0
  %1855 = vmatpush1.msra.mxu0 0.0
  %1856 = vmatprep.subr.mxu0 0.0
  %1857 = vmatpush1.msra.mxu0 0.0
  %1858 = vmatprep.subr.mxu0 0.0
  %1859 = vmatpush1.msra.mxu0 0.0
  %1860 = vmatprep.subr.mxu0 0.0
  %1861 = vmatpush1.msra.mxu0 0.0
  %1862 = vmatprep.subr.mxu0 0.0
  %1863 = vmatpush1.msra.mxu0 0.0
  %1864 = vmatprep.subr.mxu0 0.0
  %1865 = vmatpush1.msra.mxu0 0.0
  %1866 = vmatprep.subr.mxu0 0.0
  %1867 = vmatpush1.msra.mxu0 0.0
  %1868 = vmatprep.subr.mxu0 0.0
  %1869 = vmatpush1.msra.mxu0 0.0
  %1870 = vmatprep.subr.mxu0 0.0
  %1871 = vmatpush1.msra.mxu0 0.0
  %1872 = vmatprep.subr.mxu0 0.0
  %1873 = vmatpush1.msra.mxu0 0.0
  %1874 = vmatprep.subr.mxu0 0.0
  %1875 = vmatpush1.msra.mxu0 0.0
  %1876 = vmatprep.subr.mxu0 0.0
  %1877 = vmatpush1.msra.mxu0 %v1844
  %1878 = vmatprep.subr.mxu0 0.0
  %1879 = vmatpush2.msra.mxu0 0.0
  %1880 = vmatprep.subr.mxu0 0.0
  %1881 = vmatpush2.msra.mxu0 0.0
  %1882 = vmatprep.subr.mxu0 0.0
  %1883 = vmatpush2.msra.mxu0 0.0
  %1884 = vmatprep.subr.mxu0 0.0
  %1885 = vmatpush2.msra.mxu0 0.0
  %1886 = vmatprep.subr.mxu0 0.0
  %1887 = vmatpush2.msra.mxu0 0.0
  %1888 = vmatprep.subr.mxu0 0.0
  %1889 = vmatpush2.msra.mxu0 0.0
  %1890 = vmatprep.subr.mxu0 0.0
  %1891 = vmatpush2.msra.mxu0 0.0
  %1892 = vmatprep.subr.mxu0 0.0
  %1893 = vmatpush2.msra.mxu0 0.0
  %1894 = vmatprep.subr.mxu0 0.0
  %1895 = vmatpush2.msra.mxu0 0.0
  %1896 = vmatprep.subr.mxu0 0.0
  %1897 = vmatpush2.msra.mxu0 0.0
  %1898 = vmatprep.subr.mxu0 0.0
  %1899 = vmatpush2.msra.mxu0 0.0
  %1900 = vmatprep.subr.mxu0 0.0
  %1901 = vmatpush2.msra.mxu0 0.0
  %1902 = vmatprep.subr.mxu0 0.0
  %1903 = vmatpush2.msra.mxu0 0.0
  %1904 = vmatprep.subr.mxu0 0.0
  %1905 = vmatpush2.msra.mxu0 0.0
  %1906 = vmatprep.subr.mxu0 0.0
  %1907 = vmatpush2.msra.mxu0 0.0
  %1908 = vmatprep.subr.mxu0 0.0
  %1909 = vmatpush2.msra.mxu0 0.0
  %1910 = vmatprep.mubr.f32.mxu0 0.0
  %1911 = vmatmul.mubr.f32.gmra.mxu0 %v1841
  %v1912 = vpop.f32.mrf.mxu0
  %v1913 = vadd.f32 %v1837, %v1912
  %v1914 = vpop.f32.mrf.mxu0
  %1915 = vdwg.mxu0
  %v1916 = vxor.u32 %v1913, 2147483648
  %v1917 = vmul.f32 %v1916, 1.442695
  %v1918 = vpow.pop %v1917
  %v1919 = vadd.f32 %v1918, 1.0
  %v1920 = vrcp.pop %v1919
  %v1921 = vmul.f32 1.0, %v1920
  %v1923 = vsel %vm376, %v1921, 0
  %1925 = vmatprep.subr.mxu0 0.0
  %1926 = vmatpush1.msra.mxu0 0.0
  %1927 = vmatprep.subr.mxu0 0.0
  %1928 = vmatpush1.msra.mxu0 0.0
  %1929 = vmatprep.subr.mxu0 0.0
  %1930 = vmatpush1.msra.mxu0 0.0
  %1931 = vmatprep.subr.mxu0 0.0
  %1932 = vmatpush1.msra.mxu0 0.0
  %1933 = vmatprep.subr.mxu0 0.0
  %1934 = vmatpush1.msra.mxu0 0.0
  %1935 = vmatprep.subr.mxu0 0.0
  %1936 = vmatpush1.msra.mxu0 0.0
  %1937 = vmatprep.subr.mxu0 0.0
  %1938 = vmatpush1.msra.mxu0 0.0
  %1939 = vmatprep.subr.mxu0 0.0
  %1940 = vmatpush1.msra.mxu0 0.0
  %1941 = vmatprep.subr.mxu0 0.0
  %1942 = vmatpush1.msra.mxu0 0.0
  %1943 = vmatprep.subr.mxu0 0.0
  %1944 = vmatpush1.msra.mxu0 0.0
  %1945 = vmatprep.subr.mxu0 0.0
  %1946 = vmatpush1.msra.mxu0 0.0
  %1947 = vmatprep.subr.mxu0 0.0
  %1948 = vmatpush1.msra.mxu0 0.0
  %1949 = vmatprep.subr.mxu0 0.0
  %1950 = vmatpush1.msra.mxu0 0.0
  %1951 = vmatprep.subr.mxu0 0.0
  %1952 = vmatpush1.msra.mxu0 0.0
  %1953 = vmatprep.subr.mxu0 0.0
  %1954 = vmatpush1.msra.mxu0 0.0
  %1955 = vmatprep.subr.mxu0 0.0
  %1956 = vmatpush1.msra.mxu0 %v108
  %1957 = vmatprep.subr.mxu0 0.0
  %1958 = vmatpush2.msra.mxu0 0.0
  %1959 = vmatprep.subr.mxu0 0.0
  %1960 = vmatpush2.msra.mxu0 0.0
  %1961 = vmatprep.subr.mxu0 0.0
  %1962 = vmatpush2.msra.mxu0 0.0
  %1963 = vmatprep.subr.mxu0 0.0
  %1964 = vmatpush2.msra.mxu0 0.0
  %1965 = vmatprep.subr.mxu0 0.0
  %1966 = vmatpush2.msra.mxu0 0.0
  %1967 = vmatprep.subr.mxu0 0.0
  %1968 = vmatpush2.msra.mxu0 0.0
  %1969 = vmatprep.subr.mxu0 0.0
  %1970 = vmatpush2.msra.mxu0 0.0
  %1971 = vmatprep.subr.mxu0 0.0
  %1972 = vmatpush2.msra.mxu0 0.0
  %1973 = vmatprep.subr.mxu0 0.0
  %1974 = vmatpush2.msra.mxu0 0.0
  %1975 = vmatprep.subr.mxu0 0.0
  %1976 = vmatpush2.msra.mxu0 0.0
  %1977 = vmatprep.subr.mxu0 0.0
  %1978 = vmatpush2.msra.mxu0 0.0
  %1979 = vmatprep.subr.mxu0 0.0
  %1980 = vmatpush2.msra.mxu0 0.0
  %1981 = vmatprep.subr.mxu0 0.0
  %1982 = vmatpush2.msra.mxu0 0.0
  %1983 = vmatprep.subr.mxu0 0.0
  %1984 = vmatpush2.msra.mxu0 0.0
  %1985 = vmatprep.subr.mxu0 0.0
  %1986 = vmatpush2.msra.mxu0 0.0
  %1987 = vmatprep.subr.mxu0 0.0
  %1988 = vmatpush2.msra.mxu0 0.0
  %1989 = vmatprep.mubr.f32.mxu0 0.0
  %1990 = vmatmul.mubr.f32.gmra.mxu0 %v1923
  %v1991 = vpop.f32.mrf.mxu0
  %v1992 = vadd.f32 0.0, %v1991
  %v1993 = vpop.f32.mrf.mxu0
  %1994 = vdwg.mxu0
  %v1997 = vunpack.c.l.s4 1966171168
  %v1998 = vunpack.c.0.s8 %v1997
  %v1999 = vlaneseq
  %v2000 = vshrl.u32 %v1999, 7
  %v2001 = vsub.s32 %v1998, %v2000
  %v2002 = vrot.slane %v1992, %v2001
  %v2003 = vcombine.high %v2002, %v2002
  %v2005 = vunpack.c.l.s4 1966171168
  %v2006 = vunpack.c.0.s8 %v2005
  %v2007 = vlaneseq
  %v2008 = vshrl.u32 %v2007, 7
  %v2009 = vsub.s32 %v2006, %v2008
  %v2010 = vrot.slane %v2002, %v2009
  %v2012 = vunpack.c.l.s4 1966171168
  %v2013 = vunpack.c.0.s8 %v2012
  %v2014 = vlaneseq
  %v2015 = vshrl.u32 %v2014, 7
  %v2016 = vsub.s32 %v2013, %v2015
  %v2017 = vrot.slane %v2003, %v2016
  %v2018 = vlaneseq
  %v2019 = vshrl.u32 %v2018, 7
  %v2020 = vsub.s32 0, %v2019
  %v2021 = vrot.slane %v2010, %v2020
  %v2022 = vlaneseq
  %v2023 = vshrl.u32 %v2022, 7
  %v2024 = vsub.s32 0, %v2023
  %v2025 = vrot.slane %v2017, %v2024
  %v2028 = vmul.f32 %v1273, %v2021
  %v2029 = vmul.f32 %v1274, %v2021
  %v2030 = vmul.f32 %v1275, %v2025
  %v2031 = vmul.f32 %v1276, %v2025
  %v2032 = vld [vmem:[%s22] sm:$0xff]
  %v2033 = vld [vmem:[%s22 + $0x8] sm:$0xff]
  %v2034 = vld [vmem:[%s22 + $0x10] sm:$0xff]
  %v2035 = vld [vmem:[%s22 + $0x18] sm:$0xff]
  %v2036 = vld [vmem:[%s22 + $0x20] sm:$0xff]
  %v2037 = vld [vmem:[%s22 + $0x28] sm:$0xff]
  %v2038 = vld [vmem:[%s22 + $0x30] sm:$0xff]
  %v2039 = vld [vmem:[%s22 + $0x38] sm:$0xff]
  %v2040 = vld [vmem:[%s22 + $0x40] sm:$0xff]
  %v2041 = vld [vmem:[%s22 + $0x48] sm:$0xff]
  %v2042 = vld [vmem:[%s22 + $0x50] sm:$0xff]
  %v2043 = vld [vmem:[%s22 + $0x58] sm:$0xff]
  %v2044 = vld [vmem:[%s22 + $0x60] sm:$0xff]
  %v2045 = vld [vmem:[%s22 + $0x68] sm:$0xff]
  %v2046 = vld [vmem:[%s22 + $0x70] sm:$0xff]
  %v2047 = vld [vmem:[%s22 + $0x78] sm:$0xff]
  %2048 = vmatprep.subr.mxu0 0.0
  %2049 = vmatpush1.msra.mxu0 %v2047
  %2050 = vmatprep.subr.mxu0 0.0
  %2051 = vmatpush1.msra.mxu0 %v2046
  %2052 = vmatprep.subr.mxu0 0.0
  %2053 = vmatpush1.msra.mxu0 %v2045
  %2054 = vmatprep.subr.mxu0 0.0
  %2055 = vmatpush1.msra.mxu0 %v2044
  %2056 = vmatprep.subr.mxu0 0.0
  %2057 = vmatpush1.msra.mxu0 %v2043
  %2058 = vmatprep.subr.mxu0 0.0
  %2059 = vmatpush1.msra.mxu0 %v2042
  %2060 = vmatprep.subr.mxu0 0.0
  %2061 = vmatpush1.msra.mxu0 %v2041
  %2062 = vmatprep.subr.mxu0 0.0
  %2063 = vmatpush1.msra.mxu0 %v2040
  %2064 = vmatprep.subr.mxu0 0.0
  %2065 = vmatpush1.msra.mxu0 %v2039
  %2066 = vmatprep.subr.mxu0 0.0
  %2067 = vmatpush1.msra.mxu0 %v2038
  %2068 = vmatprep.subr.mxu0 0.0
  %2069 = vmatpush1.msra.mxu0 %v2037
  %2070 = vmatprep.subr.mxu0 0.0
  %2071 = vmatpush1.msra.mxu0 %v2036
  %2072 = vmatprep.subr.mxu0 0.0
  %2073 = vmatpush1.msra.mxu0 %v2035
  %2074 = vmatprep.subr.mxu0 0.0
  %2075 = vmatpush1.msra.mxu0 %v2034
  %2076 = vmatprep.subr.mxu0 0.0
  %2077 = vmatpush1.msra.mxu0 %v2033
  %2078 = vmatprep.subr.mxu0 0.0
  %2079 = vmatpush1.msra.mxu0 %v2032
  %2080 = vmatprep.subr.mxu0 0.0
  %2081 = vmatpush2.msra.mxu0 0.0
  %2082 = vmatprep.subr.mxu0 0.0
  %2083 = vmatpush2.msra.mxu0 0.0
  %2084 = vmatprep.subr.mxu0 0.0
  %2085 = vmatpush2.msra.mxu0 0.0
  %2086 = vmatprep.subr.mxu0 0.0
  %2087 = vmatpush2.msra.mxu0 0.0
  %2088 = vmatprep.subr.mxu0 0.0
  %2089 = vmatpush2.msra.mxu0 0.0
  %2090 = vmatprep.subr.mxu0 0.0
  %2091 = vmatpush2.msra.mxu0 0.0
  %2092 = vmatprep.subr.mxu0 0.0
  %2093 = vmatpush2.msra.mxu0 0.0
  %2094 = vmatprep.subr.mxu0 0.0
  %2095 = vmatpush2.msra.mxu0 0.0
  %2096 = vmatprep.subr.mxu0 0.0
  %2097 = vmatpush2.msra.mxu0 0.0
  %2098 = vmatprep.subr.mxu0 0.0
  %2099 = vmatpush2.msra.mxu0 0.0
  %2100 = vmatprep.subr.mxu0 0.0
  %2101 = vmatpush2.msra.mxu0 0.0
  %2102 = vmatprep.subr.mxu0 0.0
  %2103 = vmatpush2.msra.mxu0 0.0
  %2104 = vmatprep.subr.mxu0 0.0
  %2105 = vmatpush2.msra.mxu0 0.0
  %2106 = vmatprep.subr.mxu0 0.0
  %2107 = vmatpush2.msra.mxu0 0.0
  %2108 = vmatprep.subr.mxu0 0.0
  %2109 = vmatpush2.msra.mxu0 0.0
  %2110 = vmatprep.subr.mxu0 0.0
  %2111 = vmatpush2.msra.mxu0 0.0
  %2112 = vmatprep.mubr.f32.mxu0 0.0
  %2113 = vmatmul.mubr.f32.gmra.mxu0 %v2028
  %v2114 = vpop.f32.mrf.mxu0
  %v2115 = vadd.f32 0.0, %v2114
  %v2116 = vpop.f32.mrf.mxu0
  %2117 = vmatprep.mubr.f32.mxu0 0.0
  %2118 = vmatmul.mubr.f32.gmra.mxu0 %v2029
  %v2119 = vpop.f32.mrf.mxu0
  %v2120 = vadd.f32 0.0, %v2119
  %v2121 = vpop.f32.mrf.mxu0
  %2122 = vmatprep.mubr.f32.mxu0 0.0
  %2123 = vmatmul.mubr.f32.gmra.mxu0 %v2030
  %v2124 = vpop.f32.mrf.mxu0
  %v2125 = vadd.f32 0.0, %v2124
  %v2126 = vpop.f32.mrf.mxu0
  %2127 = vmatprep.mubr.f32.mxu0 0.0
  %2128 = vmatmul.mubr.f32.gmra.mxu0 %v2031
  %v2129 = vpop.f32.mrf.mxu0
  %v2130 = vadd.f32 0.0, %v2129
  %v2131 = vpop.f32.mrf.mxu0
  %2132 = vdwg.mxu0
  %v2133 = vmul.f32 %v2115, 0.125
  %v2134 = vmul.f32 %v2120, 0.125
  %v2135 = vmul.f32 %v2125, 0.125
  %v2136 = vmul.f32 %v2130, 0.125
  %2141 = vrot.lane.b32.xlu0 %v2028, 120
  %v2142 = vpop.permute.xlu0 %2141
  %2143 = vrot.lane.b32.xlu0 %v2029, 120
  %v2144 = vpop.permute.xlu0 %2143
  %2145 = vrot.lane.b32.xlu0 %v2030, 120
  %v2146 = vpop.permute.xlu0 %2145
  %2147 = vrot.lane.b32.xlu0 %v2031, 120
  %v2148 = vpop.permute.xlu0 %2147
  %2153 = vrot.lane.b32.xlu0 %v2028, 112
  %v2154 = vpop.permute.xlu0 %2153
  %2155 = vrot.lane.b32.xlu0 %v2029, 112
  %v2156 = vpop.permute.xlu0 %2155
  %2157 = vrot.lane.b32.xlu0 %v2030, 112
  %v2158 = vpop.permute.xlu0 %2157
  %2159 = vrot.lane.b32.xlu0 %v2031, 112
  %v2160 = vpop.permute.xlu0 %2159
  %2165 = vrot.lane.b32.xlu0 %v2028, 104
  %v2166 = vpop.permute.xlu0 %2165
  %2167 = vrot.lane.b32.xlu0 %v2029, 104
  %v2168 = vpop.permute.xlu0 %2167
  %2169 = vrot.lane.b32.xlu0 %v2030, 104
  %v2170 = vpop.permute.xlu0 %2169
  %2171 = vrot.lane.b32.xlu0 %v2031, 104
  %v2172 = vpop.permute.xlu0 %2171
  %2177 = vrot.lane.b32.xlu0 %v2028, 96
  %v2178 = vpop.permute.xlu0 %2177
  %2179 = vrot.lane.b32.xlu0 %v2029, 96
  %v2180 = vpop.permute.xlu0 %2179
  %2181 = vrot.lane.b32.xlu0 %v2030, 96
  %v2182 = vpop.permute.xlu0 %2181
  %2183 = vrot.lane.b32.xlu0 %v2031, 96
  %v2184 = vpop.permute.xlu0 %2183
  %2189 = vrot.lane.b32.xlu0 %v2028, 88
  %v2190 = vpop.permute.xlu0 %2189
  %2191 = vrot.lane.b32.xlu0 %v2029, 88
  %v2192 = vpop.permute.xlu0 %2191
  %2193 = vrot.lane.b32.xlu0 %v2030, 88
  %v2194 = vpop.permute.xlu0 %2193
  %2195 = vrot.lane.b32.xlu0 %v2031, 88
  %v2196 = vpop.permute.xlu0 %2195
  %2201 = vrot.lane.b32.xlu0 %v2028, 80
  %v2202 = vpop.permute.xlu0 %2201
  %2203 = vrot.lane.b32.xlu0 %v2029, 80
  %v2204 = vpop.permute.xlu0 %2203
  %2205 = vrot.lane.b32.xlu0 %v2030, 80
  %v2206 = vpop.permute.xlu0 %2205
  %2207 = vrot.lane.b32.xlu0 %v2031, 80
  %v2208 = vpop.permute.xlu0 %2207
  %2213 = vrot.lane.b32.xlu0 %v2028, 72
  %v2214 = vpop.permute.xlu0 %2213
  %2215 = vrot.lane.b32.xlu0 %v2029, 72
  %v2216 = vpop.permute.xlu0 %2215
  %2217 = vrot.lane.b32.xlu0 %v2030, 72
  %v2218 = vpop.permute.xlu0 %2217
  %2219 = vrot.lane.b32.xlu0 %v2031, 72
  %v2220 = vpop.permute.xlu0 %2219
  %2225 = vrot.lane.b32.xlu0 %v2028, 64
  %v2226 = vpop.permute.xlu0 %2225
  %2227 = vrot.lane.b32.xlu0 %v2029, 64
  %v2228 = vpop.permute.xlu0 %2227
  %2229 = vrot.lane.b32.xlu0 %v2030, 64
  %v2230 = vpop.permute.xlu0 %2229
  %2231 = vrot.lane.b32.xlu0 %v2031, 64
  %v2232 = vpop.permute.xlu0 %2231
  %2237 = vrot.lane.b32.xlu0 %v2028, 56
  %v2238 = vpop.permute.xlu0 %2237
  %2239 = vrot.lane.b32.xlu0 %v2029, 56
  %v2240 = vpop.permute.xlu0 %2239
  %2241 = vrot.lane.b32.xlu0 %v2030, 56
  %v2242 = vpop.permute.xlu0 %2241
  %2243 = vrot.lane.b32.xlu0 %v2031, 56
  %v2244 = vpop.permute.xlu0 %2243
  %2249 = vrot.lane.b32.xlu0 %v2028, 48
  %v2250 = vpop.permute.xlu0 %2249
  %2251 = vrot.lane.b32.xlu0 %v2029, 48
  %v2252 = vpop.permute.xlu0 %2251
  %2253 = vrot.lane.b32.xlu0 %v2030, 48
  %v2254 = vpop.permute.xlu0 %2253
  %2255 = vrot.lane.b32.xlu0 %v2031, 48
  %v2256 = vpop.permute.xlu0 %2255
  %2261 = vrot.lane.b32.xlu0 %v2028, 40
  %v2262 = vpop.permute.xlu0 %2261
  %2263 = vrot.lane.b32.xlu0 %v2029, 40
  %v2264 = vpop.permute.xlu0 %2263
  %2265 = vrot.lane.b32.xlu0 %v2030, 40
  %v2266 = vpop.permute.xlu0 %2265
  %2267 = vrot.lane.b32.xlu0 %v2031, 40
  %v2268 = vpop.permute.xlu0 %2267
  %2273 = vrot.lane.b32.xlu0 %v2028, 32
  %v2274 = vpop.permute.xlu0 %2273
  %2275 = vrot.lane.b32.xlu0 %v2029, 32
  %v2276 = vpop.permute.xlu0 %2275
  %2277 = vrot.lane.b32.xlu0 %v2030, 32
  %v2278 = vpop.permute.xlu0 %2277
  %2279 = vrot.lane.b32.xlu0 %v2031, 32
  %v2280 = vpop.permute.xlu0 %2279
  %2285 = vrot.lane.b32.xlu0 %v2028, 24
  %v2286 = vpop.permute.xlu0 %2285
  %2287 = vrot.lane.b32.xlu0 %v2029, 24
  %v2288 = vpop.permute.xlu0 %2287
  %2289 = vrot.lane.b32.xlu0 %v2030, 24
  %v2290 = vpop.permute.xlu0 %2289
  %2291 = vrot.lane.b32.xlu0 %v2031, 24
  %v2292 = vpop.permute.xlu0 %2291
  %2297 = vrot.lane.b32.xlu0 %v2028, 16
  %v2298 = vpop.permute.xlu0 %2297
  %2299 = vrot.lane.b32.xlu0 %v2029, 16
  %v2300 = vpop.permute.xlu0 %2299
  %2301 = vrot.lane.b32.xlu0 %v2030, 16
  %v2302 = vpop.permute.xlu0 %2301
  %2303 = vrot.lane.b32.xlu0 %v2031, 16
  %v2304 = vpop.permute.xlu0 %2303
  %2309 = vrot.lane.b32.xlu0 %v2028, 8
  %v2310 = vpop.permute.xlu0 %2309
  %2311 = vrot.lane.b32.xlu0 %v2029, 8
  %v2312 = vpop.permute.xlu0 %2311
  %2313 = vrot.lane.b32.xlu0 %v2030, 8
  %v2314 = vpop.permute.xlu0 %2313
  %2315 = vrot.lane.b32.xlu0 %v2031, 8
  %v2316 = vpop.permute.xlu0 %2315
  %v2321 = vcombine.low %v2028, %v2154
  %v2322 = vcombine.high %v2028, %v2154
  %v2324 = vunpack.c.l.s4 1983009808
  %v2325 = vunpack.c.0.s8 %v2324
  %v2326 = vlaneseq
  %v2327 = vshrl.u32 %v2326, 7
  %v2328 = vsub.s32 %v2325, %v2327
  %v2329 = vrot.slane %v2321, %v2328
  %v2331 = vunpack.c.l.s4 1983009808
  %v2332 = vunpack.c.0.s8 %v2331
  %v2333 = vlaneseq
  %v2334 = vshrl.u32 %v2333, 7
  %v2335 = vsub.s32 %v2332, %v2334
  %v2336 = vrot.slane %v2322, %v2335
  %v2337 = vcombine.low %v2142, %v2166
  %v2338 = vcombine.high %v2142, %v2166
  %v2340 = vunpack.c.l.s4 1983009808
  %v2341 = vunpack.c.0.s8 %v2340
  %v2342 = vlaneseq
  %v2343 = vshrl.u32 %v2342, 7
  %v2344 = vsub.s32 %v2341, %v2343
  %v2345 = vrot.slane %v2337, %v2344
  %v2347 = vunpack.c.l.s4 1983009808
  %v2348 = vunpack.c.0.s8 %v2347
  %v2349 = vlaneseq
  %v2350 = vshrl.u32 %v2349, 7
  %v2351 = vsub.s32 %v2348, %v2350
  %v2352 = vrot.slane %v2338, %v2351
  %v2353 = vcombine.low %v2178, %v2202
  %v2354 = vcombine.high %v2178, %v2202
  %v2356 = vunpack.c.l.s4 1983009808
  %v2357 = vunpack.c.0.s8 %v2356
  %v2358 = vlaneseq
  %v2359 = vshrl.u32 %v2358, 7
  %v2360 = vsub.s32 %v2357, %v2359
  %v2361 = vrot.slane %v2353, %v2360
  %v2363 = vunpack.c.l.s4 1983009808
  %v2364 = vunpack.c.0.s8 %v2363
  %v2365 = vlaneseq
  %v2366 = vshrl.u32 %v2365, 7
  %v2367 = vsub.s32 %v2364, %v2366
  %v2368 = vrot.slane %v2354, %v2367
  %v2369 = vcombine.low %v2190, %v2214
  %v2370 = vcombine.high %v2190, %v2214
  %v2372 = vunpack.c.l.s4 1983009808
  %v2373 = vunpack.c.0.s8 %v2372
  %v2374 = vlaneseq
  %v2375 = vshrl.u32 %v2374, 7
  %v2376 = vsub.s32 %v2373, %v2375
  %v2377 = vrot.slane %v2369, %v2376
  %v2379 = vunpack.c.l.s4 1983009808
  %v2380 = vunpack.c.0.s8 %v2379
  %v2381 = vlaneseq
  %v2382 = vshrl.u32 %v2381, 7
  %v2383 = vsub.s32 %v2380, %v2382
  %v2384 = vrot.slane %v2370, %v2383
  %v2385 = vcombine.low %v2329, %v2345
  %v2386 = vcombine.high %v2329, %v2345
  %v2388 = vunpack.c.l.s4 1934713408
  %v2389 = vunpack.c.0.s8 %v2388
  %v2390 = vlaneseq
  %v2391 = vshrl.u32 %v2390, 7
  %v2392 = vsub.s32 %v2389, %v2391
  %v2393 = vrot.slane %v2385, %v2392
  %v2395 = vunpack.c.l.s4 1934713408
  %v2396 = vunpack.c.0.s8 %v2395
  %v2397 = vlaneseq
  %v2398 = vshrl.u32 %v2397, 7
  %v2399 = vsub.s32 %v2396, %v2398
  %v2400 = vrot.slane %v2386, %v2399
  %v2401 = vcombine.low %v2336, %v2352
  %v2402 = vcombine.high %v2336, %v2352
  %v2404 = vunpack.c.l.s4 1934713408
  %v2405 = vunpack.c.0.s8 %v2404
  %v2406 = vlaneseq
  %v2407 = vshrl.u32 %v2406, 7
  %v2408 = vsub.s32 %v2405, %v2407
  %v2409 = vrot.slane %v2401, %v2408
  %v2411 = vunpack.c.l.s4 1934713408
  %v2412 = vunpack.c.0.s8 %v2411
  %v2413 = vlaneseq
  %v2414 = vshrl.u32 %v2413, 7
  %v2415 = vsub.s32 %v2412, %v2414
  %v2416 = vrot.slane %v2402, %v2415
  %v2417 = vcombine.low %v2361, %v2377
  %v2418 = vcombine.high %v2361, %v2377
  %v2420 = vunpack.c.l.s4 1934713408
  %v2421 = vunpack.c.0.s8 %v2420
  %v2422 = vlaneseq
  %v2423 = vshrl.u32 %v2422, 7
  %v2424 = vsub.s32 %v2421, %v2423
  %v2425 = vrot.slane %v2417, %v2424
  %v2427 = vunpack.c.l.s4 1934713408
  %v2428 = vunpack.c.0.s8 %v2427
  %v2429 = vlaneseq
  %v2430 = vshrl.u32 %v2429, 7
  %v2431 = vsub.s32 %v2428, %v2430
  %v2432 = vrot.slane %v2418, %v2431
  %v2433 = vcombine.low %v2368, %v2384
  %v2434 = vcombine.high %v2368, %v2384
  %v2436 = vunpack.c.l.s4 1934713408
  %v2437 = vunpack.c.0.s8 %v2436
  %v2438 = vlaneseq
  %v2439 = vshrl.u32 %v2438, 7
  %v2440 = vsub.s32 %v2437, %v2439
  %v2441 = vrot.slane %v2433, %v2440
  %v2443 = vunpack.c.l.s4 1934713408
  %v2444 = vunpack.c.0.s8 %v2443
  %v2445 = vlaneseq
  %v2446 = vshrl.u32 %v2445, 7
  %v2447 = vsub.s32 %v2444, %v2446
  %v2448 = vrot.slane %v2434, %v2447
  %v2449 = vcombine.low %v2393, %v2425
  %v2450 = vcombine.high %v2393, %v2425
  %v2451 = vcombine.low %v2400, %v2432
  %v2452 = vcombine.high %v2400, %v2432
  %v2453 = vcombine.low %v2409, %v2441
  %v2454 = vcombine.high %v2409, %v2441
  %v2455 = vcombine.low %v2416, %v2448
  %v2456 = vcombine.high %v2416, %v2448
  %v2457 = vcombine.low %v2226, %v2250
  %v2458 = vcombine.high %v2226, %v2250
  %v2460 = vunpack.c.l.s4 1983009808
  %v2461 = vunpack.c.0.s8 %v2460
  %v2462 = vlaneseq
  %v2463 = vshrl.u32 %v2462, 7
  %v2464 = vsub.s32 %v2461, %v2463
  %v2465 = vrot.slane %v2457, %v2464
  %v2467 = vunpack.c.l.s4 1983009808
  %v2468 = vunpack.c.0.s8 %v2467
  %v2469 = vlaneseq
  %v2470 = vshrl.u32 %v2469, 7
  %v2471 = vsub.s32 %v2468, %v2470
  %v2472 = vrot.slane %v2458, %v2471
  %v2473 = vcombine.low %v2238, %v2262
  %v2474 = vcombine.high %v2238, %v2262
  %v2476 = vunpack.c.l.s4 1983009808
  %v2477 = vunpack.c.0.s8 %v2476
  %v2478 = vlaneseq
  %v2479 = vshrl.u32 %v2478, 7
  %v2480 = vsub.s32 %v2477, %v2479
  %v2481 = vrot.slane %v2473, %v2480
  %v2483 = vunpack.c.l.s4 1983009808
  %v2484 = vunpack.c.0.s8 %v2483
  %v2485 = vlaneseq
  %v2486 = vshrl.u32 %v2485, 7
  %v2487 = vsub.s32 %v2484, %v2486
  %v2488 = vrot.slane %v2474, %v2487
  %v2489 = vcombine.low %v2274, %v2298
  %v2490 = vcombine.high %v2274, %v2298
  %v2492 = vunpack.c.l.s4 1983009808
  %v2493 = vunpack.c.0.s8 %v2492
  %v2494 = vlaneseq
  %v2495 = vshrl.u32 %v2494, 7
  %v2496 = vsub.s32 %v2493, %v2495
  %v2497 = vrot.slane %v2489, %v2496
  %v2499 = vunpack.c.l.s4 1983009808
  %v2500 = vunpack.c.0.s8 %v2499
  %v2501 = vlaneseq
  %v2502 = vshrl.u32 %v2501, 7
  %v2503 = vsub.s32 %v2500, %v2502
  %v2504 = vrot.slane %v2490, %v2503
  %v2505 = vcombine.low %v2286, %v2310
  %v2506 = vcombine.high %v2286, %v2310
  %v2508 = vunpack.c.l.s4 1983009808
  %v2509 = vunpack.c.0.s8 %v2508
  %v2510 = vlaneseq
  %v2511 = vshrl.u32 %v2510, 7
  %v2512 = vsub.s32 %v2509, %v2511
  %v2513 = vrot.slane %v2505, %v2512
  %v2515 = vunpack.c.l.s4 1983009808
  %v2516 = vunpack.c.0.s8 %v2515
  %v2517 = vlaneseq
  %v2518 = vshrl.u32 %v2517, 7
  %v2519 = vsub.s32 %v2516, %v2518
  %v2520 = vrot.slane %v2506, %v2519
  %v2521 = vcombine.low %v2465, %v2481
  %v2522 = vcombine.high %v2465, %v2481
  %v2524 = vunpack.c.l.s4 1934713408
  %v2525 = vunpack.c.0.s8 %v2524
  %v2526 = vlaneseq
  %v2527 = vshrl.u32 %v2526, 7
  %v2528 = vsub.s32 %v2525, %v2527
  %v2529 = vrot.slane %v2521, %v2528
  %v2531 = vunpack.c.l.s4 1934713408
  %v2532 = vunpack.c.0.s8 %v2531
  %v2533 = vlaneseq
  %v2534 = vshrl.u32 %v2533, 7
  %v2535 = vsub.s32 %v2532, %v2534
  %v2536 = vrot.slane %v2522, %v2535
  %v2537 = vcombine.low %v2472, %v2488
  %v2538 = vcombine.high %v2472, %v2488
  %v2540 = vunpack.c.l.s4 1934713408
  %v2541 = vunpack.c.0.s8 %v2540
  %v2542 = vlaneseq
  %v2543 = vshrl.u32 %v2542, 7
  %v2544 = vsub.s32 %v2541, %v2543
  %v2545 = vrot.slane %v2537, %v2544
  %v2547 = vunpack.c.l.s4 1934713408
  %v2548 = vunpack.c.0.s8 %v2547
  %v2549 = vlaneseq
  %v2550 = vshrl.u32 %v2549, 7
  %v2551 = vsub.s32 %v2548, %v2550
  %v2552 = vrot.slane %v2538, %v2551
  %v2553 = vcombine.low %v2497, %v2513
  %v2554 = vcombine.high %v2497, %v2513
  %v2556 = vunpack.c.l.s4 1934713408
  %v2557 = vunpack.c.0.s8 %v2556
  %v2558 = vlaneseq
  %v2559 = vshrl.u32 %v2558, 7
  %v2560 = vsub.s32 %v2557, %v2559
  %v2561 = vrot.slane %v2553, %v2560
  %v2563 = vunpack.c.l.s4 1934713408
  %v2564 = vunpack.c.0.s8 %v2563
  %v2565 = vlaneseq
  %v2566 = vshrl.u32 %v2565, 7
  %v2567 = vsub.s32 %v2564, %v2566
  %v2568 = vrot.slane %v2554, %v2567
  %v2569 = vcombine.low %v2504, %v2520
  %v2570 = vcombine.high %v2504, %v2520
  %v2572 = vunpack.c.l.s4 1934713408
  %v2573 = vunpack.c.0.s8 %v2572
  %v2574 = vlaneseq
  %v2575 = vshrl.u32 %v2574, 7
  %v2576 = vsub.s32 %v2573, %v2575
  %v2577 = vrot.slane %v2569, %v2576
  %v2579 = vunpack.c.l.s4 1934713408
  %v2580 = vunpack.c.0.s8 %v2579
  %v2581 = vlaneseq
  %v2582 = vshrl.u32 %v2581, 7
  %v2583 = vsub.s32 %v2580, %v2582
  %v2584 = vrot.slane %v2570, %v2583
  %v2585 = vcombine.low %v2529, %v2561
  %v2586 = vcombine.high %v2529, %v2561
  %v2587 = vcombine.low %v2536, %v2568
  %v2588 = vcombine.high %v2536, %v2568
  %v2589 = vcombine.low %v2545, %v2577
  %v2590 = vcombine.high %v2545, %v2577
  %v2591 = vcombine.low %v2552, %v2584
  %v2592 = vcombine.high %v2552, %v2584
  %v2593 = vcombine.low %v2029, %v2156
  %v2594 = vcombine.high %v2029, %v2156
  %v2596 = vunpack.c.l.s4 1983009808
  %v2597 = vunpack.c.0.s8 %v2596
  %v2598 = vlaneseq
  %v2599 = vshrl.u32 %v2598, 7
  %v2600 = vsub.s32 %v2597, %v2599
  %v2601 = vrot.slane %v2593, %v2600
  %v2603 = vunpack.c.l.s4 1983009808
  %v2604 = vunpack.c.0.s8 %v2603
  %v2605 = vlaneseq
  %v2606 = vshrl.u32 %v2605, 7
  %v2607 = vsub.s32 %v2604, %v2606
  %v2608 = vrot.slane %v2594, %v2607
  %v2609 = vcombine.low %v2144, %v2168
  %v2610 = vcombine.high %v2144, %v2168
  %v2612 = vunpack.c.l.s4 1983009808
  %v2613 = vunpack.c.0.s8 %v2612
  %v2614 = vlaneseq
  %v2615 = vshrl.u32 %v2614, 7
  %v2616 = vsub.s32 %v2613, %v2615
  %v2617 = vrot.slane %v2609, %v2616
  %v2619 = vunpack.c.l.s4 1983009808
  %v2620 = vunpack.c.0.s8 %v2619
  %v2621 = vlaneseq
  %v2622 = vshrl.u32 %v2621, 7
  %v2623 = vsub.s32 %v2620, %v2622
  %v2624 = vrot.slane %v2610, %v2623
  %v2625 = vcombine.low %v2180, %v2204
  %v2626 = vcombine.high %v2180, %v2204
  %v2628 = vunpack.c.l.s4 1983009808
  %v2629 = vunpack.c.0.s8 %v2628
  %v2630 = vlaneseq
  %v2631 = vshrl.u32 %v2630, 7
  %v2632 = vsub.s32 %v2629, %v2631
  %v2633 = vrot.slane %v2625, %v2632
  %v2635 = vunpack.c.l.s4 1983009808
  %v2636 = vunpack.c.0.s8 %v2635
  %v2637 = vlaneseq
  %v2638 = vshrl.u32 %v2637, 7
  %v2639 = vsub.s32 %v2636, %v2638
  %v2640 = vrot.slane %v2626, %v2639
  %v2641 = vcombine.low %v2192, %v2216
  %v2642 = vcombine.high %v2192, %v2216
  %v2644 = vunpack.c.l.s4 1983009808
  %v2645 = vunpack.c.0.s8 %v2644
  %v2646 = vlaneseq
  %v2647 = vshrl.u32 %v2646, 7
  %v2648 = vsub.s32 %v2645, %v2647
  %v2649 = vrot.slane %v2641, %v2648
  %v2651 = vunpack.c.l.s4 1983009808
  %v2652 = vunpack.c.0.s8 %v2651
  %v2653 = vlaneseq
  %v2654 = vshrl.u32 %v2653, 7
  %v2655 = vsub.s32 %v2652, %v2654
  %v2656 = vrot.slane %v2642, %v2655
  %v2657 = vcombine.low %v2601, %v2617
  %v2658 = vcombine.high %v2601, %v2617
  %v2660 = vunpack.c.l.s4 1934713408
  %v2661 = vunpack.c.0.s8 %v2660
  %v2662 = vlaneseq
  %v2663 = vshrl.u32 %v2662, 7
  %v2664 = vsub.s32 %v2661, %v2663
  %v2665 = vrot.slane %v2657, %v2664
  %v2667 = vunpack.c.l.s4 1934713408
  %v2668 = vunpack.c.0.s8 %v2667
  %v2669 = vlaneseq
  %v2670 = vshrl.u32 %v2669, 7
  %v2671 = vsub.s32 %v2668, %v2670
  %v2672 = vrot.slane %v2658, %v2671
  %v2673 = vcombine.low %v2608, %v2624
  %v2674 = vcombine.high %v2608, %v2624
  %v2676 = vunpack.c.l.s4 1934713408
  %v2677 = vunpack.c.0.s8 %v2676
  %v2678 = vlaneseq
  %v2679 = vshrl.u32 %v2678, 7
  %v2680 = vsub.s32 %v2677, %v2679
  %v2681 = vrot.slane %v2673, %v2680
  %v2683 = vunpack.c.l.s4 1934713408
  %v2684 = vunpack.c.0.s8 %v2683
  %v2685 = vlaneseq
  %v2686 = vshrl.u32 %v2685, 7
  %v2687 = vsub.s32 %v2684, %v2686
  %v2688 = vrot.slane %v2674, %v2687
  %v2689 = vcombine.low %v2633, %v2649
  %v2690 = vcombine.high %v2633, %v2649
  %v2692 = vunpack.c.l.s4 1934713408
  %v2693 = vunpack.c.0.s8 %v2692
  %v2694 = vlaneseq
  %v2695 = vshrl.u32 %v2694, 7
  %v2696 = vsub.s32 %v2693, %v2695
  %v2697 = vrot.slane %v2689, %v2696
  %v2699 = vunpack.c.l.s4 1934713408
  %v2700 = vunpack.c.0.s8 %v2699
  %v2701 = vlaneseq
  %v2702 = vshrl.u32 %v2701, 7
  %v2703 = vsub.s32 %v2700, %v2702
  %v2704 = vrot.slane %v2690, %v2703
  %v2705 = vcombine.low %v2640, %v2656
  %v2706 = vcombine.high %v2640, %v2656
  %v2708 = vunpack.c.l.s4 1934713408
  %v2709 = vunpack.c.0.s8 %v2708
  %v2710 = vlaneseq
  %v2711 = vshrl.u32 %v2710, 7
  %v2712 = vsub.s32 %v2709, %v2711
  %v2713 = vrot.slane %v2705, %v2712
  %v2715 = vunpack.c.l.s4 1934713408
  %v2716 = vunpack.c.0.s8 %v2715
  %v2717 = vlaneseq
  %v2718 = vshrl.u32 %v2717, 7
  %v2719 = vsub.s32 %v2716, %v2718
  %v2720 = vrot.slane %v2706, %v2719
  %v2721 = vcombine.low %v2665, %v2697
  %v2722 = vcombine.high %v2665, %v2697
  %v2723 = vcombine.low %v2672, %v2704
  %v2724 = vcombine.high %v2672, %v2704
  %v2725 = vcombine.low %v2681, %v2713
  %v2726 = vcombine.high %v2681, %v2713
  %v2727 = vcombine.low %v2688, %v2720
  %v2728 = vcombine.high %v2688, %v2720
  %v2729 = vcombine.low %v2228, %v2252
  %v2730 = vcombine.high %v2228, %v2252
  %v2732 = vunpack.c.l.s4 1983009808
  %v2733 = vunpack.c.0.s8 %v2732
  %v2734 = vlaneseq
  %v2735 = vshrl.u32 %v2734, 7
  %v2736 = vsub.s32 %v2733, %v2735
  %v2737 = vrot.slane %v2729, %v2736
  %v2739 = vunpack.c.l.s4 1983009808
  %v2740 = vunpack.c.0.s8 %v2739
  %v2741 = vlaneseq
  %v2742 = vshrl.u32 %v2741, 7
  %v2743 = vsub.s32 %v2740, %v2742
  %v2744 = vrot.slane %v2730, %v2743
  %v2745 = vcombine.low %v2240, %v2264
  %v2746 = vcombine.high %v2240, %v2264
  %v2748 = vunpack.c.l.s4 1983009808
  %v2749 = vunpack.c.0.s8 %v2748
  %v2750 = vlaneseq
  %v2751 = vshrl.u32 %v2750, 7
  %v2752 = vsub.s32 %v2749, %v2751
  %v2753 = vrot.slane %v2745, %v2752
  %v2755 = vunpack.c.l.s4 1983009808
  %v2756 = vunpack.c.0.s8 %v2755
  %v2757 = vlaneseq
  %v2758 = vshrl.u32 %v2757, 7
  %v2759 = vsub.s32 %v2756, %v2758
  %v2760 = vrot.slane %v2746, %v2759
  %v2761 = vcombine.low %v2276, %v2300
  %v2762 = vcombine.high %v2276, %v2300
  %v2764 = vunpack.c.l.s4 1983009808
  %v2765 = vunpack.c.0.s8 %v2764
  %v2766 = vlaneseq
  %v2767 = vshrl.u32 %v2766, 7
  %v2768 = vsub.s32 %v2765, %v2767
  %v2769 = vrot.slane %v2761, %v2768
  %v2771 = vunpack.c.l.s4 1983009808
  %v2772 = vunpack.c.0.s8 %v2771
  %v2773 = vlaneseq
  %v2774 = vshrl.u32 %v2773, 7
  %v2775 = vsub.s32 %v2772, %v2774
  %v2776 = vrot.slane %v2762, %v2775
  %v2777 = vcombine.low %v2288, %v2312
  %v2778 = vcombine.high %v2288, %v2312
  %v2780 = vunpack.c.l.s4 1983009808
  %v2781 = vunpack.c.0.s8 %v2780
  %v2782 = vlaneseq
  %v2783 = vshrl.u32 %v2782, 7
  %v2784 = vsub.s32 %v2781, %v2783
  %v2785 = vrot.slane %v2777, %v2784
  %v2787 = vunpack.c.l.s4 1983009808
  %v2788 = vunpack.c.0.s8 %v2787
  %v2789 = vlaneseq
  %v2790 = vshrl.u32 %v2789, 7
  %v2791 = vsub.s32 %v2788, %v2790
  %v2792 = vrot.slane %v2778, %v2791
  %v2793 = vcombine.low %v2737, %v2753
  %v2794 = vcombine.high %v2737, %v2753
  %v2796 = vunpack.c.l.s4 1934713408
  %v2797 = vunpack.c.0.s8 %v2796
  %v2798 = vlaneseq
  %v2799 = vshrl.u32 %v2798, 7
  %v2800 = vsub.s32 %v2797, %v2799
  %v2801 = vrot.slane %v2793, %v2800
  %v2803 = vunpack.c.l.s4 1934713408
  %v2804 = vunpack.c.0.s8 %v2803
  %v2805 = vlaneseq
  %v2806 = vshrl.u32 %v2805, 7
  %v2807 = vsub.s32 %v2804, %v2806
  %v2808 = vrot.slane %v2794, %v2807
  %v2809 = vcombine.low %v2744, %v2760
  %v2810 = vcombine.high %v2744, %v2760
  %v2812 = vunpack.c.l.s4 1934713408
  %v2813 = vunpack.c.0.s8 %v2812
  %v2814 = vlaneseq
  %v2815 = vshrl.u32 %v2814, 7
  %v2816 = vsub.s32 %v2813, %v2815
  %v2817 = vrot.slane %v2809, %v2816
  %v2819 = vunpack.c.l.s4 1934713408
  %v2820 = vunpack.c.0.s8 %v2819
  %v2821 = vlaneseq
  %v2822 = vshrl.u32 %v2821, 7
  %v2823 = vsub.s32 %v2820, %v2822
  %v2824 = vrot.slane %v2810, %v2823
  %v2825 = vcombine.low %v2769, %v2785
  %v2826 = vcombine.high %v2769, %v2785
  %v2828 = vunpack.c.l.s4 1934713408
  %v2829 = vunpack.c.0.s8 %v2828
  %v2830 = vlaneseq
  %v2831 = vshrl.u32 %v2830, 7
  %v2832 = vsub.s32 %v2829, %v2831
  %v2833 = vrot.slane %v2825, %v2832
  %v2835 = vunpack.c.l.s4 1934713408
  %v2836 = vunpack.c.0.s8 %v2835
  %v2837 = vlaneseq
  %v2838 = vshrl.u32 %v2837, 7
  %v2839 = vsub.s32 %v2836, %v2838
  %v2840 = vrot.slane %v2826, %v2839
  %v2841 = vcombine.low %v2776, %v2792
  %v2842 = vcombine.high %v2776, %v2792
  %v2844 = vunpack.c.l.s4 1934713408
  %v2845 = vunpack.c.0.s8 %v2844
  %v2846 = vlaneseq
  %v2847 = vshrl.u32 %v2846, 7
  %v2848 = vsub.s32 %v2845, %v2847
  %v2849 = vrot.slane %v2841, %v2848
  %v2851 = vunpack.c.l.s4 1934713408
  %v2852 = vunpack.c.0.s8 %v2851
  %v2853 = vlaneseq
  %v2854 = vshrl.u32 %v2853, 7
  %v2855 = vsub.s32 %v2852, %v2854
  %v2856 = vrot.slane %v2842, %v2855
  %v2857 = vcombine.low %v2801, %v2833
  %v2858 = vcombine.high %v2801, %v2833
  %v2859 = vcombine.low %v2808, %v2840
  %v2860 = vcombine.high %v2808, %v2840
  %v2861 = vcombine.low %v2817, %v2849
  %v2862 = vcombine.high %v2817, %v2849
  %v2863 = vcombine.low %v2824, %v2856
  %v2864 = vcombine.high %v2824, %v2856
  %v2865 = vcombine.low %v2030, %v2158
  %v2866 = vcombine.high %v2030, %v2158
  %v2868 = vunpack.c.l.s4 1983009808
  %v2869 = vunpack.c.0.s8 %v2868
  %v2870 = vlaneseq
  %v2871 = vshrl.u32 %v2870, 7
  %v2872 = vsub.s32 %v2869, %v2871
  %v2873 = vrot.slane %v2865, %v2872
  %v2875 = vunpack.c.l.s4 1983009808
  %v2876 = vunpack.c.0.s8 %v2875
  %v2877 = vlaneseq
  %v2878 = vshrl.u32 %v2877, 7
  %v2879 = vsub.s32 %v2876, %v2878
  %v2880 = vrot.slane %v2866, %v2879
  %v2881 = vcombine.low %v2146, %v2170
  %v2882 = vcombine.high %v2146, %v2170
  %v2884 = vunpack.c.l.s4 1983009808
  %v2885 = vunpack.c.0.s8 %v2884
  %v2886 = vlaneseq
  %v2887 = vshrl.u32 %v2886, 7
  %v2888 = vsub.s32 %v2885, %v2887
  %v2889 = vrot.slane %v2881, %v2888
  %v2891 = vunpack.c.l.s4 1983009808
  %v2892 = vunpack.c.0.s8 %v2891
  %v2893 = vlaneseq
  %v2894 = vshrl.u32 %v2893, 7
  %v2895 = vsub.s32 %v2892, %v2894
  %v2896 = vrot.slane %v2882, %v2895
  %v2897 = vcombine.low %v2182, %v2206
  %v2898 = vcombine.high %v2182, %v2206
  %v2900 = vunpack.c.l.s4 1983009808
  %v2901 = vunpack.c.0.s8 %v2900
  %v2902 = vlaneseq
  %v2903 = vshrl.u32 %v2902, 7
  %v2904 = vsub.s32 %v2901, %v2903
  %v2905 = vrot.slane %v2897, %v2904
  %v2907 = vunpack.c.l.s4 1983009808
  %v2908 = vunpack.c.0.s8 %v2907
  %v2909 = vlaneseq
  %v2910 = vshrl.u32 %v2909, 7
  %v2911 = vsub.s32 %v2908, %v2910
  %v2912 = vrot.slane %v2898, %v2911
  %v2913 = vcombine.low %v2194, %v2218
  %v2914 = vcombine.high %v2194, %v2218
  %v2916 = vunpack.c.l.s4 1983009808
  %v2917 = vunpack.c.0.s8 %v2916
  %v2918 = vlaneseq
  %v2919 = vshrl.u32 %v2918, 7
  %v2920 = vsub.s32 %v2917, %v2919
  %v2921 = vrot.slane %v2913, %v2920
  %v2923 = vunpack.c.l.s4 1983009808
  %v2924 = vunpack.c.0.s8 %v2923
  %v2925 = vlaneseq
  %v2926 = vshrl.u32 %v2925, 7
  %v2927 = vsub.s32 %v2924, %v2926
  %v2928 = vrot.slane %v2914, %v2927
  %v2929 = vcombine.low %v2873, %v2889
  %v2930 = vcombine.high %v2873, %v2889
  %v2932 = vunpack.c.l.s4 1934713408
  %v2933 = vunpack.c.0.s8 %v2932
  %v2934 = vlaneseq
  %v2935 = vshrl.u32 %v2934, 7
  %v2936 = vsub.s32 %v2933, %v2935
  %v2937 = vrot.slane %v2929, %v2936
  %v2939 = vunpack.c.l.s4 1934713408
  %v2940 = vunpack.c.0.s8 %v2939
  %v2941 = vlaneseq
  %v2942 = vshrl.u32 %v2941, 7
  %v2943 = vsub.s32 %v2940, %v2942
  %v2944 = vrot.slane %v2930, %v2943
  %v2945 = vcombine.low %v2880, %v2896
  %v2946 = vcombine.high %v2880, %v2896
  %v2948 = vunpack.c.l.s4 1934713408
  %v2949 = vunpack.c.0.s8 %v2948
  %v2950 = vlaneseq
  %v2951 = vshrl.u32 %v2950, 7
  %v2952 = vsub.s32 %v2949, %v2951
  %v2953 = vrot.slane %v2945, %v2952
  %v2955 = vunpack.c.l.s4 1934713408
  %v2956 = vunpack.c.0.s8 %v2955
  %v2957 = vlaneseq
  %v2958 = vshrl.u32 %v2957, 7
  %v2959 = vsub.s32 %v2956, %v2958
  %v2960 = vrot.slane %v2946, %v2959
  %v2961 = vcombine.low %v2905, %v2921
  %v2962 = vcombine.high %v2905, %v2921
  %v2964 = vunpack.c.l.s4 1934713408
  %v2965 = vunpack.c.0.s8 %v2964
  %v2966 = vlaneseq
  %v2967 = vshrl.u32 %v2966, 7
  %v2968 = vsub.s32 %v2965, %v2967
  %v2969 = vrot.slane %v2961, %v2968
  %v2971 = vunpack.c.l.s4 1934713408
  %v2972 = vunpack.c.0.s8 %v2971
  %v2973 = vlaneseq
  %v2974 = vshrl.u32 %v2973, 7
  %v2975 = vsub.s32 %v2972, %v2974
  %v2976 = vrot.slane %v2962, %v2975
  %v2977 = vcombine.low %v2912, %v2928
  %v2978 = vcombine.high %v2912, %v2928
  %v2980 = vunpack.c.l.s4 1934713408
  %v2981 = vunpack.c.0.s8 %v2980
  %v2982 = vlaneseq
  %v2983 = vshrl.u32 %v2982, 7
  %v2984 = vsub.s32 %v2981, %v2983
  %v2985 = vrot.slane %v2977, %v2984
  %v2987 = vunpack.c.l.s4 1934713408
  %v2988 = vunpack.c.0.s8 %v2987
  %v2989 = vlaneseq
  %v2990 = vshrl.u32 %v2989, 7
  %v2991 = vsub.s32 %v2988, %v2990
  %v2992 = vrot.slane %v2978, %v2991
  %v2993 = vcombine.low %v2937, %v2969
  %v2994 = vcombine.high %v2937, %v2969
  %v2995 = vcombine.low %v2944, %v2976
  %v2996 = vcombine.high %v2944, %v2976
  %v2997 = vcombine.low %v2953, %v2985
  %v2998 = vcombine.high %v2953, %v2985
  %v2999 = vcombine.low %v2960, %v2992
  %v3000 = vcombine.high %v2960, %v2992
  %v3001 = vcombine.low %v2230, %v2254
  %v3002 = vcombine.high %v2230, %v2254
  %v3004 = vunpack.c.l.s4 1983009808
  %v3005 = vunpack.c.0.s8 %v3004
  %v3006 = vlaneseq
  %v3007 = vshrl.u32 %v3006, 7
  %v3008 = vsub.s32 %v3005, %v3007
  %v3009 = vrot.slane %v3001, %v3008
  %v3011 = vunpack.c.l.s4 1983009808
  %v3012 = vunpack.c.0.s8 %v3011
  %v3013 = vlaneseq
  %v3014 = vshrl.u32 %v3013, 7
  %v3015 = vsub.s32 %v3012, %v3014
  %v3016 = vrot.slane %v3002, %v3015
  %v3017 = vcombine.low %v2242, %v2266
  %v3018 = vcombine.high %v2242, %v2266
  %v3020 = vunpack.c.l.s4 1983009808
  %v3021 = vunpack.c.0.s8 %v3020
  %v3022 = vlaneseq
  %v3023 = vshrl.u32 %v3022, 7
  %v3024 = vsub.s32 %v3021, %v3023
  %v3025 = vrot.slane %v3017, %v3024
  %v3027 = vunpack.c.l.s4 1983009808
  %v3028 = vunpack.c.0.s8 %v3027
  %v3029 = vlaneseq
  %v3030 = vshrl.u32 %v3029, 7
  %v3031 = vsub.s32 %v3028, %v3030
  %v3032 = vrot.slane %v3018, %v3031
  %v3033 = vcombine.low %v2278, %v2302
  %v3034 = vcombine.high %v2278, %v2302
  %v3036 = vunpack.c.l.s4 1983009808
  %v3037 = vunpack.c.0.s8 %v3036
  %v3038 = vlaneseq
  %v3039 = vshrl.u32 %v3038, 7
  %v3040 = vsub.s32 %v3037, %v3039
  %v3041 = vrot.slane %v3033, %v3040
  %v3043 = vunpack.c.l.s4 1983009808
  %v3044 = vunpack.c.0.s8 %v3043
  %v3045 = vlaneseq
  %v3046 = vshrl.u32 %v3045, 7
  %v3047 = vsub.s32 %v3044, %v3046
  %v3048 = vrot.slane %v3034, %v3047
  %v3049 = vcombine.low %v2290, %v2314
  %v3050 = vcombine.high %v2290, %v2314
  %v3052 = vunpack.c.l.s4 1983009808
  %v3053 = vunpack.c.0.s8 %v3052
  %v3054 = vlaneseq
  %v3055 = vshrl.u32 %v3054, 7
  %v3056 = vsub.s32 %v3053, %v3055
  %v3057 = vrot.slane %v3049, %v3056
  %v3059 = vunpack.c.l.s4 1983009808
  %v3060 = vunpack.c.0.s8 %v3059
  %v3061 = vlaneseq
  %v3062 = vshrl.u32 %v3061, 7
  %v3063 = vsub.s32 %v3060, %v3062
  %v3064 = vrot.slane %v3050, %v3063
  %v3065 = vcombine.low %v3009, %v3025
  %v3066 = vcombine.high %v3009, %v3025
  %v3068 = vunpack.c.l.s4 1934713408
  %v3069 = vunpack.c.0.s8 %v3068
  %v3070 = vlaneseq
  %v3071 = vshrl.u32 %v3070, 7
  %v3072 = vsub.s32 %v3069, %v3071
  %v3073 = vrot.slane %v3065, %v3072
  %v3075 = vunpack.c.l.s4 1934713408
  %v3076 = vunpack.c.0.s8 %v3075
  %v3077 = vlaneseq
  %v3078 = vshrl.u32 %v3077, 7
  %v3079 = vsub.s32 %v3076, %v3078
  %v3080 = vrot.slane %v3066, %v3079
  %v3081 = vcombine.low %v3016, %v3032
  %v3082 = vcombine.high %v3016, %v3032
  %v3084 = vunpack.c.l.s4 1934713408
  %v3085 = vunpack.c.0.s8 %v3084
  %v3086 = vlaneseq
  %v3087 = vshrl.u32 %v3086, 7
  %v3088 = vsub.s32 %v3085, %v3087
  %v3089 = vrot.slane %v3081, %v3088
  %v3091 = vunpack.c.l.s4 1934713408
  %v3092 = vunpack.c.0.s8 %v3091
  %v3093 = vlaneseq
  %v3094 = vshrl.u32 %v3093, 7
  %v3095 = vsub.s32 %v3092, %v3094
  %v3096 = vrot.slane %v3082, %v3095
  %v3097 = vcombine.low %v3041, %v3057
  %v3098 = vcombine.high %v3041, %v3057
  %v3100 = vunpack.c.l.s4 1934713408
  %v3101 = vunpack.c.0.s8 %v3100
  %v3102 = vlaneseq
  %v3103 = vshrl.u32 %v3102, 7
  %v3104 = vsub.s32 %v3101, %v3103
  %v3105 = vrot.slane %v3097, %v3104
  %v3107 = vunpack.c.l.s4 1934713408
  %v3108 = vunpack.c.0.s8 %v3107
  %v3109 = vlaneseq
  %v3110 = vshrl.u32 %v3109, 7
  %v3111 = vsub.s32 %v3108, %v3110
  %v3112 = vrot.slane %v3098, %v3111
  %v3113 = vcombine.low %v3048, %v3064
  %v3114 = vcombine.high %v3048, %v3064
  %v3116 = vunpack.c.l.s4 1934713408
  %v3117 = vunpack.c.0.s8 %v3116
  %v3118 = vlaneseq
  %v3119 = vshrl.u32 %v3118, 7
  %v3120 = vsub.s32 %v3117, %v3119
  %v3121 = vrot.slane %v3113, %v3120
  %v3123 = vunpack.c.l.s4 1934713408
  %v3124 = vunpack.c.0.s8 %v3123
  %v3125 = vlaneseq
  %v3126 = vshrl.u32 %v3125, 7
  %v3127 = vsub.s32 %v3124, %v3126
  %v3128 = vrot.slane %v3114, %v3127
  %v3129 = vcombine.low %v3073, %v3105
  %v3130 = vcombine.high %v3073, %v3105
  %v3131 = vcombine.low %v3080, %v3112
  %v3132 = vcombine.high %v3080, %v3112
  %v3133 = vcombine.low %v3089, %v3121
  %v3134 = vcombine.high %v3089, %v3121
  %v3135 = vcombine.low %v3096, %v3128
  %v3136 = vcombine.high %v3096, %v3128
  %v3137 = vcombine.low %v2031, %v2160
  %v3138 = vcombine.high %v2031, %v2160
  %v3140 = vunpack.c.l.s4 1983009808
  %v3141 = vunpack.c.0.s8 %v3140
  %v3142 = vlaneseq
  %v3143 = vshrl.u32 %v3142, 7
  %v3144 = vsub.s32 %v3141, %v3143
  %v3145 = vrot.slane %v3137, %v3144
  %v3147 = vunpack.c.l.s4 1983009808
  %v3148 = vunpack.c.0.s8 %v3147
  %v3149 = vlaneseq
  %v3150 = vshrl.u32 %v3149, 7
  %v3151 = vsub.s32 %v3148, %v3150
  %v3152 = vrot.slane %v3138, %v3151
  %v3153 = vcombine.low %v2148, %v2172
  %v3154 = vcombine.high %v2148, %v2172
  %v3156 = vunpack.c.l.s4 1983009808
  %v3157 = vunpack.c.0.s8 %v3156
  %v3158 = vlaneseq
  %v3159 = vshrl.u32 %v3158, 7
  %v3160 = vsub.s32 %v3157, %v3159
  %v3161 = vrot.slane %v3153, %v3160
  %v3163 = vunpack.c.l.s4 1983009808
  %v3164 = vunpack.c.0.s8 %v3163
  %v3165 = vlaneseq
  %v3166 = vshrl.u32 %v3165, 7
  %v3167 = vsub.s32 %v3164, %v3166
  %v3168 = vrot.slane %v3154, %v3167
  %v3169 = vcombine.low %v2184, %v2208
  %v3170 = vcombine.high %v2184, %v2208
  %v3172 = vunpack.c.l.s4 1983009808
  %v3173 = vunpack.c.0.s8 %v3172
  %v3174 = vlaneseq
  %v3175 = vshrl.u32 %v3174, 7
  %v3176 = vsub.s32 %v3173, %v3175
  %v3177 = vrot.slane %v3169, %v3176
  %v3179 = vunpack.c.l.s4 1983009808
  %v3180 = vunpack.c.0.s8 %v3179
  %v3181 = vlaneseq
  %v3182 = vshrl.u32 %v3181, 7
  %v3183 = vsub.s32 %v3180, %v3182
  %v3184 = vrot.slane %v3170, %v3183
  %v3185 = vcombine.low %v2196, %v2220
  %v3186 = vcombine.high %v2196, %v2220
  %v3188 = vunpack.c.l.s4 1983009808
  %v3189 = vunpack.c.0.s8 %v3188
  %v3190 = vlaneseq
  %v3191 = vshrl.u32 %v3190, 7
  %v3192 = vsub.s32 %v3189, %v3191
  %v3193 = vrot.slane %v3185, %v3192
  %v3195 = vunpack.c.l.s4 1983009808
  %v3196 = vunpack.c.0.s8 %v3195
  %v3197 = vlaneseq
  %v3198 = vshrl.u32 %v3197, 7
  %v3199 = vsub.s32 %v3196, %v3198
  %v3200 = vrot.slane %v3186, %v3199
  %v3201 = vcombine.low %v3145, %v3161
  %v3202 = vcombine.high %v3145, %v3161
  %v3204 = vunpack.c.l.s4 1934713408
  %v3205 = vunpack.c.0.s8 %v3204
  %v3206 = vlaneseq
  %v3207 = vshrl.u32 %v3206, 7
  %v3208 = vsub.s32 %v3205, %v3207
  %v3209 = vrot.slane %v3201, %v3208
  %v3211 = vunpack.c.l.s4 1934713408
  %v3212 = vunpack.c.0.s8 %v3211
  %v3213 = vlaneseq
  %v3214 = vshrl.u32 %v3213, 7
  %v3215 = vsub.s32 %v3212, %v3214
  %v3216 = vrot.slane %v3202, %v3215
  %v3217 = vcombine.low %v3152, %v3168
  %v3218 = vcombine.high %v3152, %v3168
  %v3220 = vunpack.c.l.s4 1934713408
  %v3221 = vunpack.c.0.s8 %v3220
  %v3222 = vlaneseq
  %v3223 = vshrl.u32 %v3222, 7
  %v3224 = vsub.s32 %v3221, %v3223
  %v3225 = vrot.slane %v3217, %v3224
  %v3227 = vunpack.c.l.s4 1934713408
  %v3228 = vunpack.c.0.s8 %v3227
  %v3229 = vlaneseq
  %v3230 = vshrl.u32 %v3229, 7
  %v3231 = vsub.s32 %v3228, %v3230
  %v3232 = vrot.slane %v3218, %v3231
  %v3233 = vcombine.low %v3177, %v3193
  %v3234 = vcombine.high %v3177, %v3193
  %v3236 = vunpack.c.l.s4 1934713408
  %v3237 = vunpack.c.0.s8 %v3236
  %v3238 = vlaneseq
  %v3239 = vshrl.u32 %v3238, 7
  %v3240 = vsub.s32 %v3237, %v3239
  %v3241 = vrot.slane %v3233, %v3240
  %v3243 = vunpack.c.l.s4 1934713408
  %v3244 = vunpack.c.0.s8 %v3243
  %v3245 = vlaneseq
  %v3246 = vshrl.u32 %v3245, 7
  %v3247 = vsub.s32 %v3244, %v3246
  %v3248 = vrot.slane %v3234, %v3247
  %v3249 = vcombine.low %v3184, %v3200
  %v3250 = vcombine.high %v3184, %v3200
  %v3252 = vunpack.c.l.s4 1934713408
  %v3253 = vunpack.c.0.s8 %v3252
  %v3254 = vlaneseq
  %v3255 = vshrl.u32 %v3254, 7
  %v3256 = vsub.s32 %v3253, %v3255
  %v3257 = vrot.slane %v3249, %v3256
  %v3259 = vunpack.c.l.s4 1934713408
  %v3260 = vunpack.c.0.s8 %v3259
  %v3261 = vlaneseq
  %v3262 = vshrl.u32 %v3261, 7
  %v3263 = vsub.s32 %v3260, %v3262
  %v3264 = vrot.slane %v3250, %v3263
  %v3265 = vcombine.low %v3209, %v3241
  %v3266 = vcombine.high %v3209, %v3241
  %v3267 = vcombine.low %v3216, %v3248
  %v3268 = vcombine.high %v3216, %v3248
  %v3269 = vcombine.low %v3225, %v3257
  %v3270 = vcombine.high %v3225, %v3257
  %v3271 = vcombine.low %v3232, %v3264
  %v3272 = vcombine.high %v3232, %v3264
  %v3273 = vcombine.low %v2232, %v2256
  %v3274 = vcombine.high %v2232, %v2256
  %v3276 = vunpack.c.l.s4 1983009808
  %v3277 = vunpack.c.0.s8 %v3276
  %v3278 = vlaneseq
  %v3279 = vshrl.u32 %v3278, 7
  %v3280 = vsub.s32 %v3277, %v3279
  %v3281 = vrot.slane %v3273, %v3280
  %v3283 = vunpack.c.l.s4 1983009808
  %v3284 = vunpack.c.0.s8 %v3283
  %v3285 = vlaneseq
  %v3286 = vshrl.u32 %v3285, 7
  %v3287 = vsub.s32 %v3284, %v3286
  %v3288 = vrot.slane %v3274, %v3287
  %v3289 = vcombine.low %v2244, %v2268
  %v3290 = vcombine.high %v2244, %v2268
  %v3292 = vunpack.c.l.s4 1983009808
  %v3293 = vunpack.c.0.s8 %v3292
  %v3294 = vlaneseq
  %v3295 = vshrl.u32 %v3294, 7
  %v3296 = vsub.s32 %v3293, %v3295
  %v3297 = vrot.slane %v3289, %v3296
  %v3299 = vunpack.c.l.s4 1983009808
  %v3300 = vunpack.c.0.s8 %v3299
  %v3301 = vlaneseq
  %v3302 = vshrl.u32 %v3301, 7
  %v3303 = vsub.s32 %v3300, %v3302
  %v3304 = vrot.slane %v3290, %v3303
  %v3305 = vcombine.low %v2280, %v2304
  %v3306 = vcombine.high %v2280, %v2304
  %v3308 = vunpack.c.l.s4 1983009808
  %v3309 = vunpack.c.0.s8 %v3308
  %v3310 = vlaneseq
  %v3311 = vshrl.u32 %v3310, 7
  %v3312 = vsub.s32 %v3309, %v3311
  %v3313 = vrot.slane %v3305, %v3312
  %v3315 = vunpack.c.l.s4 1983009808
  %v3316 = vunpack.c.0.s8 %v3315
  %v3317 = vlaneseq
  %v3318 = vshrl.u32 %v3317, 7
  %v3319 = vsub.s32 %v3316, %v3318
  %v3320 = vrot.slane %v3306, %v3319
  %v3321 = vcombine.low %v2292, %v2316
  %v3322 = vcombine.high %v2292, %v2316
  %v3324 = vunpack.c.l.s4 1983009808
  %v3325 = vunpack.c.0.s8 %v3324
  %v3326 = vlaneseq
  %v3327 = vshrl.u32 %v3326, 7
  %v3328 = vsub.s32 %v3325, %v3327
  %v3329 = vrot.slane %v3321, %v3328
  %v3331 = vunpack.c.l.s4 1983009808
  %v3332 = vunpack.c.0.s8 %v3331
  %v3333 = vlaneseq
  %v3334 = vshrl.u32 %v3333, 7
  %v3335 = vsub.s32 %v3332, %v3334
  %v3336 = vrot.slane %v3322, %v3335
  %v3337 = vcombine.low %v3281, %v3297
  %v3338 = vcombine.high %v3281, %v3297
  %v3340 = vunpack.c.l.s4 1934713408
  %v3341 = vunpack.c.0.s8 %v3340
  %v3342 = vlaneseq
  %v3343 = vshrl.u32 %v3342, 7
  %v3344 = vsub.s32 %v3341, %v3343
  %v3345 = vrot.slane %v3337, %v3344
  %v3347 = vunpack.c.l.s4 1934713408
  %v3348 = vunpack.c.0.s8 %v3347
  %v3349 = vlaneseq
  %v3350 = vshrl.u32 %v3349, 7
  %v3351 = vsub.s32 %v3348, %v3350
  %v3352 = vrot.slane %v3338, %v3351
  %v3353 = vcombine.low %v3288, %v3304
  %v3354 = vcombine.high %v3288, %v3304
  %v3356 = vunpack.c.l.s4 1934713408
  %v3357 = vunpack.c.0.s8 %v3356
  %v3358 = vlaneseq
  %v3359 = vshrl.u32 %v3358, 7
  %v3360 = vsub.s32 %v3357, %v3359
  %v3361 = vrot.slane %v3353, %v3360
  %v3363 = vunpack.c.l.s4 1934713408
  %v3364 = vunpack.c.0.s8 %v3363
  %v3365 = vlaneseq
  %v3366 = vshrl.u32 %v3365, 7
  %v3367 = vsub.s32 %v3364, %v3366
  %v3368 = vrot.slane %v3354, %v3367
  %v3369 = vcombine.low %v3313, %v3329
  %v3370 = vcombine.high %v3313, %v3329
  %v3372 = vunpack.c.l.s4 1934713408
  %v3373 = vunpack.c.0.s8 %v3372
  %v3374 = vlaneseq
  %v3375 = vshrl.u32 %v3374, 7
  %v3376 = vsub.s32 %v3373, %v3375
  %v3377 = vrot.slane %v3369, %v3376
  %v3379 = vunpack.c.l.s4 1934713408
  %v3380 = vunpack.c.0.s8 %v3379
  %v3381 = vlaneseq
  %v3382 = vshrl.u32 %v3381, 7
  %v3383 = vsub.s32 %v3380, %v3382
  %v3384 = vrot.slane %v3370, %v3383
  %v3385 = vcombine.low %v3320, %v3336
  %v3386 = vcombine.high %v3320, %v3336
  %v3388 = vunpack.c.l.s4 1934713408
  %v3389 = vunpack.c.0.s8 %v3388
  %v3390 = vlaneseq
  %v3391 = vshrl.u32 %v3390, 7
  %v3392 = vsub.s32 %v3389, %v3391
  %v3393 = vrot.slane %v3385, %v3392
  %v3395 = vunpack.c.l.s4 1934713408
  %v3396 = vunpack.c.0.s8 %v3395
  %v3397 = vlaneseq
  %v3398 = vshrl.u32 %v3397, 7
  %v3399 = vsub.s32 %v3396, %v3398
  %v3400 = vrot.slane %v3386, %v3399
  %v3401 = vcombine.low %v3345, %v3377
  %v3402 = vcombine.high %v3345, %v3377
  %v3403 = vcombine.low %v3352, %v3384
  %v3404 = vcombine.high %v3352, %v3384
  %v3405 = vcombine.low %v3361, %v3393
  %v3406 = vcombine.high %v3361, %v3393
  %v3407 = vcombine.low %v3368, %v3400
  %v3408 = vcombine.high %v3368, %v3400
  %v3409 = vsel %vm376, %v2449, -inf
  %3410 = vmax.xlane.f32.xlu0 %v3409
  %v3411 = vpop.xlane.xlu0 %3410
  %v3412 = vsel %vm376, %v2585, -inf
  %3413 = vmax.xlane.f32.xlu0 %v3412
  %v3414 = vpop.xlane.xlu0 %3413
  %v3415 = vsel %vm376, %v2450, -inf
  %3416 = vmax.xlane.f32.xlu0 %v3415
  %v3417 = vpop.xlane.xlu0 %3416
  %v3418 = vsel %vm376, %v2586, -inf
  %3419 = vmax.xlane.f32.xlu0 %v3418
  %v3420 = vpop.xlane.xlu0 %3419
  %v3421 = vsel %vm376, %v2451, -inf
  %3422 = vmax.xlane.f32.xlu0 %v3421
  %v3423 = vpop.xlane.xlu0 %3422
  %v3424 = vsel %vm376, %v2587, -inf
  %3425 = vmax.xlane.f32.xlu0 %v3424
  %v3426 = vpop.xlane.xlu0 %3425
  %v3427 = vsel %vm376, %v2452, -inf
  %3428 = vmax.xlane.f32.xlu0 %v3427
  %v3429 = vpop.xlane.xlu0 %3428
  %v3430 = vsel %vm376, %v2588, -inf
  %3431 = vmax.xlane.f32.xlu0 %v3430
  %v3432 = vpop.xlane.xlu0 %3431
  %v3433 = vsel %vm376, %v2453, -inf
  %3434 = vmax.xlane.f32.xlu0 %v3433
  %v3435 = vpop.xlane.xlu0 %3434
  %v3436 = vsel %vm376, %v2589, -inf
  %3437 = vmax.xlane.f32.xlu0 %v3436
  %v3438 = vpop.xlane.xlu0 %3437
  %v3439 = vsel %vm376, %v2454, -inf
  %3440 = vmax.xlane.f32.xlu0 %v3439
  %v3441 = vpop.xlane.xlu0 %3440
  %v3442 = vsel %vm376, %v2590, -inf
  %3443 = vmax.xlane.f32.xlu0 %v3442
  %v3444 = vpop.xlane.xlu0 %3443
  %v3445 = vsel %vm376, %v2455, -inf
  %3446 = vmax.xlane.f32.xlu0 %v3445
  %v3447 = vpop.xlane.xlu0 %3446
  %v3448 = vsel %vm376, %v2591, -inf
  %3449 = vmax.xlane.f32.xlu0 %v3448
  %v3450 = vpop.xlane.xlu0 %3449
  %v3451 = vsel %vm376, %v2456, -inf
  %3452 = vmax.xlane.f32.xlu0 %v3451
  %v3453 = vpop.xlane.xlu0 %3452
  %v3454 = vsel %vm376, %v2592, -inf
  %3455 = vmax.xlane.f32.xlu0 %v3454
  %v3456 = vpop.xlane.xlu0 %3455
  %v3457 = vsel %vm376, %v2721, -inf
  %3458 = vmax.xlane.f32.xlu0 %v3457
  %v3459 = vpop.xlane.xlu0 %3458
  %v3460 = vsel %vm376, %v2857, -inf
  %3461 = vmax.xlane.f32.xlu0 %v3460
  %v3462 = vpop.xlane.xlu0 %3461
  %v3463 = vsel %vm376, %v2722, -inf
  %3464 = vmax.xlane.f32.xlu0 %v3463
  %v3465 = vpop.xlane.xlu0 %3464
  %v3466 = vsel %vm376, %v2858, -inf
  %3467 = vmax.xlane.f32.xlu0 %v3466
  %v3468 = vpop.xlane.xlu0 %3467
  %v3469 = vsel %vm376, %v2723, -inf
  %3470 = vmax.xlane.f32.xlu0 %v3469
  %v3471 = vpop.xlane.xlu0 %3470
  %v3472 = vsel %vm376, %v2859, -inf
  %3473 = vmax.xlane.f32.xlu0 %v3472
  %v3474 = vpop.xlane.xlu0 %3473
  %v3475 = vsel %vm376, %v2724, -inf
  %3476 = vmax.xlane.f32.xlu0 %v3475
  %v3477 = vpop.xlane.xlu0 %3476
  %v3478 = vsel %vm376, %v2860, -inf
  %3479 = vmax.xlane.f32.xlu0 %v3478
  %v3480 = vpop.xlane.xlu0 %3479
  %v3481 = vsel %vm376, %v2725, -inf
  %3482 = vmax.xlane.f32.xlu0 %v3481
  %v3483 = vpop.xlane.xlu0 %3482
  %v3484 = vsel %vm376, %v2861, -inf
  %3485 = vmax.xlane.f32.xlu0 %v3484
  %v3486 = vpop.xlane.xlu0 %3485
  %v3487 = vsel %vm376, %v2726, -inf
  %3488 = vmax.xlane.f32.xlu0 %v3487
  %v3489 = vpop.xlane.xlu0 %3488
  %v3490 = vsel %vm376, %v2862, -inf
  %3491 = vmax.xlane.f32.xlu0 %v3490
  %v3492 = vpop.xlane.xlu0 %3491
  %v3493 = vsel %vm376, %v2727, -inf
  %3494 = vmax.xlane.f32.xlu0 %v3493
  %v3495 = vpop.xlane.xlu0 %3494
  %v3496 = vsel %vm376, %v2863, -inf
  %3497 = vmax.xlane.f32.xlu0 %v3496
  %v3498 = vpop.xlane.xlu0 %3497
  %v3499 = vsel %vm376, %v2728, -inf
  %3500 = vmax.xlane.f32.xlu0 %v3499
  %v3501 = vpop.xlane.xlu0 %3500
  %v3502 = vsel %vm376, %v2864, -inf
  %3503 = vmax.xlane.f32.xlu0 %v3502
  %v3504 = vpop.xlane.xlu0 %3503
  %v3505 = vsel %vm376, %v2993, -inf
  %3506 = vmax.xlane.f32.xlu0 %v3505
  %v3507 = vpop.xlane.xlu0 %3506
  %v3508 = vsel %vm376, %v3129, -inf
  %3509 = vmax.xlane.f32.xlu0 %v3508
  %v3510 = vpop.xlane.xlu0 %3509
  %v3511 = vsel %vm376, %v2994, -inf
  %3512 = vmax.xlane.f32.xlu0 %v3511
  %v3513 = vpop.xlane.xlu0 %3512
  %v3514 = vsel %vm376, %v3130, -inf
  %3515 = vmax.xlane.f32.xlu0 %v3514
  %v3516 = vpop.xlane.xlu0 %3515
  %v3517 = vsel %vm376, %v2995, -inf
  %3518 = vmax.xlane.f32.xlu0 %v3517
  %v3519 = vpop.xlane.xlu0 %3518
  %v3520 = vsel %vm376, %v3131, -inf
  %3521 = vmax.xlane.f32.xlu0 %v3520
  %v3522 = vpop.xlane.xlu0 %3521
  %v3523 = vsel %vm376, %v2996, -inf
  %3524 = vmax.xlane.f32.xlu0 %v3523
  %v3525 = vpop.xlane.xlu0 %3524
  %v3526 = vsel %vm376, %v3132, -inf
  %3527 = vmax.xlane.f32.xlu0 %v3526
  %v3528 = vpop.xlane.xlu0 %3527
  %v3529 = vsel %vm376, %v2997, -inf
  %3530 = vmax.xlane.f32.xlu0 %v3529
  %v3531 = vpop.xlane.xlu0 %3530
  %v3532 = vsel %vm376, %v3133, -inf
  %3533 = vmax.xlane.f32.xlu0 %v3532
  %v3534 = vpop.xlane.xlu0 %3533
  %v3535 = vsel %vm376, %v2998, -inf
  %3536 = vmax.xlane.f32.xlu0 %v3535
  %v3537 = vpop.xlane.xlu0 %3536
  %v3538 = vsel %vm376, %v3134, -inf
  %3539 = vmax.xlane.f32.xlu0 %v3538
  %v3540 = vpop.xlane.xlu0 %3539
  %v3541 = vsel %vm376, %v2999, -inf
  %3542 = vmax.xlane.f32.xlu0 %v3541
  %v3543 = vpop.xlane.xlu0 %3542
  %v3544 = vsel %vm376, %v3135, -inf
  %3545 = vmax.xlane.f32.xlu0 %v3544
  %v3546 = vpop.xlane.xlu0 %3545
  %v3547 = vsel %vm376, %v3000, -inf
  %3548 = vmax.xlane.f32.xlu0 %v3547
  %v3549 = vpop.xlane.xlu0 %3548
  %v3550 = vsel %vm376, %v3136, -inf
  %3551 = vmax.xlane.f32.xlu0 %v3550
  %v3552 = vpop.xlane.xlu0 %3551
  %v3553 = vsel %vm376, %v3265, -inf
  %3554 = vmax.xlane.f32.xlu0 %v3553
  %v3555 = vpop.xlane.xlu0 %3554
  %v3556 = vsel %vm376, %v3401, -inf
  %3557 = vmax.xlane.f32.xlu0 %v3556
  %v3558 = vpop.xlane.xlu0 %3557
  %v3559 = vsel %vm376, %v3266, -inf
  %3560 = vmax.xlane.f32.xlu0 %v3559
  %v3561 = vpop.xlane.xlu0 %3560
  %v3562 = vsel %vm376, %v3402, -inf
  %3563 = vmax.xlane.f32.xlu0 %v3562
  %v3564 = vpop.xlane.xlu0 %3563
  %v3565 = vsel %vm376, %v3267, -inf
  %3566 = vmax.xlane.f32.xlu0 %v3565
  %v3567 = vpop.xlane.xlu0 %3566
  %v3568 = vsel %vm376, %v3403, -inf
  %3569 = vmax.xlane.f32.xlu0 %v3568
  %v3570 = vpop.xlane.xlu0 %3569
  %v3571 = vsel %vm376, %v3268, -inf
  %3572 = vmax.xlane.f32.xlu0 %v3571
  %v3573 = vpop.xlane.xlu0 %3572
  %v3574 = vsel %vm376, %v3404, -inf
  %3575 = vmax.xlane.f32.xlu0 %v3574
  %v3576 = vpop.xlane.xlu0 %3575
  %v3577 = vsel %vm376, %v3269, -inf
  %3578 = vmax.xlane.f32.xlu0 %v3577
  %v3579 = vpop.xlane.xlu0 %3578
  %v3580 = vsel %vm376, %v3405, -inf
  %3581 = vmax.xlane.f32.xlu0 %v3580
  %v3582 = vpop.xlane.xlu0 %3581
  %v3583 = vsel %vm376, %v3270, -inf
  %3584 = vmax.xlane.f32.xlu0 %v3583
  %v3585 = vpop.xlane.xlu0 %3584
  %v3586 = vsel %vm376, %v3406, -inf
  %3587 = vmax.xlane.f32.xlu0 %v3586
  %v3588 = vpop.xlane.xlu0 %3587
  %v3589 = vsel %vm376, %v3271, -inf
  %3590 = vmax.xlane.f32.xlu0 %v3589
  %v3591 = vpop.xlane.xlu0 %3590
  %v3592 = vsel %vm376, %v3407, -inf
  %3593 = vmax.xlane.f32.xlu0 %v3592
  %v3594 = vpop.xlane.xlu0 %3593
  %v3595 = vsel %vm376, %v3272, -inf
  %3596 = vmax.xlane.f32.xlu0 %v3595
  %v3597 = vpop.xlane.xlu0 %3596
  %v3598 = vsel %vm376, %v3408, -inf
  %3599 = vmax.xlane.f32.xlu0 %v3598
  %v3600 = vpop.xlane.xlu0 %3599
  %v3665 = vlaneseq
  %v3666 = vand.u32 %v3665, 127
  %v3667 = vadd.s32 %v3666, 4294967280
  %v3668 = vlaneseq
  %v3669 = vshrl.u32 %v3668, 7
  %v3670 = vsub.s32 %v3667, %v3669
  %v3671 = vrot.slane %v3411, %v3670
  %v3672 = vadd.s32 %v3666, 4294967272
  %v3673 = vlaneseq
  %v3674 = vshrl.u32 %v3673, 7
  %v3675 = vsub.s32 %v3672, %v3674
  %v3676 = vrot.slane %v3414, %v3675
  %vm3677 = vcmask 261312
  %v3678 = vsel %vm3677, %v3676, %v3671
  %v3679 = vlaneseq
  %v3680 = vshrl.u32 %v3679, 7
  %v3681 = vsub.s32 %v3667, %v3680
  %v3682 = vrot.slane %v3417, %v3681
  %v3683 = vlaneseq
  %v3684 = vshrl.u32 %v3683, 7
  %v3685 = vsub.s32 %v3672, %v3684
  %v3686 = vrot.slane %v3420, %v3685
  %v3687 = vsel %vm3677, %v3686, %v3682
  %v3688 = vlaneseq
  %v3689 = vshrl.u32 %v3688, 7
  %v3690 = vsub.s32 %v3667, %v3689
  %v3691 = vrot.slane %v3423, %v3690
  %v3692 = vlaneseq
  %v3693 = vshrl.u32 %v3692, 7
  %v3694 = vsub.s32 %v3672, %v3693
  %v3695 = vrot.slane %v3426, %v3694
  %v3696 = vsel %vm3677, %v3695, %v3691
  %v3697 = vlaneseq
  %v3698 = vshrl.u32 %v3697, 7
  %v3699 = vsub.s32 %v3667, %v3698
  %v3700 = vrot.slane %v3429, %v3699
  %v3701 = vlaneseq
  %v3702 = vshrl.u32 %v3701, 7
  %v3703 = vsub.s32 %v3672, %v3702
  %v3704 = vrot.slane %v3432, %v3703
  %v3705 = vsel %vm3677, %v3704, %v3700
  %v3706 = vlaneseq
  %v3707 = vshrl.u32 %v3706, 7
  %v3708 = vsub.s32 %v3667, %v3707
  %v3709 = vrot.slane %v3435, %v3708
  %v3710 = vlaneseq
  %v3711 = vshrl.u32 %v3710, 7
  %v3712 = vsub.s32 %v3672, %v3711
  %v3713 = vrot.slane %v3438, %v3712
  %v3714 = vsel %vm3677, %v3713, %v3709
  %v3715 = vlaneseq
  %v3716 = vshrl.u32 %v3715, 7
  %v3717 = vsub.s32 %v3667, %v3716
  %v3718 = vrot.slane %v3441, %v3717
  %v3719 = vlaneseq
  %v3720 = vshrl.u32 %v3719, 7
  %v3721 = vsub.s32 %v3672, %v3720
  %v3722 = vrot.slane %v3444, %v3721
  %v3723 = vsel %vm3677, %v3722, %v3718
  %v3724 = vlaneseq
  %v3725 = vshrl.u32 %v3724, 7
  %v3726 = vsub.s32 %v3667, %v3725
  %v3727 = vrot.slane %v3447, %v3726
  %v3728 = vlaneseq
  %v3729 = vshrl.u32 %v3728, 7
  %v3730 = vsub.s32 %v3672, %v3729
  %v3731 = vrot.slane %v3450, %v3730
  %v3732 = vsel %vm3677, %v3731, %v3727
  %v3733 = vlaneseq
  %v3734 = vshrl.u32 %v3733, 7
  %v3735 = vsub.s32 %v3667, %v3734
  %v3736 = vrot.slane %v3453, %v3735
  %v3737 = vlaneseq
  %v3738 = vshrl.u32 %v3737, 7
  %v3739 = vsub.s32 %v3672, %v3738
  %v3740 = vrot.slane %v3456, %v3739
  %v3741 = vsel %vm3677, %v3740, %v3736
  %v3742 = vlaneseq
  %v3743 = vshrl.u32 %v3742, 7
  %v3744 = vsub.s32 %v3667, %v3743
  %v3745 = vrot.slane %v3459, %v3744
  %v3746 = vlaneseq
  %v3747 = vshrl.u32 %v3746, 7
  %v3748 = vsub.s32 %v3672, %v3747
  %v3749 = vrot.slane %v3462, %v3748
  %v3750 = vsel %vm3677, %v3749, %v3745
  %v3751 = vlaneseq
  %v3752 = vshrl.u32 %v3751, 7
  %v3753 = vsub.s32 %v3667, %v3752
  %v3754 = vrot.slane %v3465, %v3753
  %v3755 = vlaneseq
  %v3756 = vshrl.u32 %v3755, 7
  %v3757 = vsub.s32 %v3672, %v3756
  %v3758 = vrot.slane %v3468, %v3757
  %v3759 = vsel %vm3677, %v3758, %v3754
  %v3760 = vlaneseq
  %v3761 = vshrl.u32 %v3760, 7
  %v3762 = vsub.s32 %v3667, %v3761
  %v3763 = vrot.slane %v3471, %v3762
  %v3764 = vlaneseq
  %v3765 = vshrl.u32 %v3764, 7
  %v3766 = vsub.s32 %v3672, %v3765
  %v3767 = vrot.slane %v3474, %v3766
  %v3768 = vsel %vm3677, %v3767, %v3763
  %v3769 = vlaneseq
  %v3770 = vshrl.u32 %v3769, 7
  %v3771 = vsub.s32 %v3667, %v3770
  %v3772 = vrot.slane %v3477, %v3771
  %v3773 = vlaneseq
  %v3774 = vshrl.u32 %v3773, 7
  %v3775 = vsub.s32 %v3672, %v3774
  %v3776 = vrot.slane %v3480, %v3775
  %v3777 = vsel %vm3677, %v3776, %v3772
  %v3778 = vlaneseq
  %v3779 = vshrl.u32 %v3778, 7
  %v3780 = vsub.s32 %v3667, %v3779
  %v3781 = vrot.slane %v3483, %v3780
  %v3782 = vlaneseq
  %v3783 = vshrl.u32 %v3782, 7
  %v3784 = vsub.s32 %v3672, %v3783
  %v3785 = vrot.slane %v3486, %v3784
  %v3786 = vsel %vm3677, %v3785, %v3781
  %v3787 = vlaneseq
  %v3788 = vshrl.u32 %v3787, 7
  %v3789 = vsub.s32 %v3667, %v3788
  %v3790 = vrot.slane %v3489, %v3789
  %v3791 = vlaneseq
  %v3792 = vshrl.u32 %v3791, 7
  %v3793 = vsub.s32 %v3672, %v3792
  %v3794 = vrot.slane %v3492, %v3793
  %v3795 = vsel %vm3677, %v3794, %v3790
  %v3796 = vlaneseq
  %v3797 = vshrl.u32 %v3796, 7
  %v3798 = vsub.s32 %v3667, %v3797
  %v3799 = vrot.slane %v3495, %v3798
  %v3800 = vlaneseq
  %v3801 = vshrl.u32 %v3800, 7
  %v3802 = vsub.s32 %v3672, %v3801
  %v3803 = vrot.slane %v3498, %v3802
  %v3804 = vsel %vm3677, %v3803, %v3799
  %v3805 = vlaneseq
  %v3806 = vshrl.u32 %v3805, 7
  %v3807 = vsub.s32 %v3667, %v3806
  %v3808 = vrot.slane %v3501, %v3807
  %v3809 = vlaneseq
  %v3810 = vshrl.u32 %v3809, 7
  %v3811 = vsub.s32 %v3672, %v3810
  %v3812 = vrot.slane %v3504, %v3811
  %v3813 = vsel %vm3677, %v3812, %v3808
  %v3814 = vlaneseq
  %v3815 = vshrl.u32 %v3814, 7
  %v3816 = vsub.s32 %v3667, %v3815
  %v3817 = vrot.slane %v3507, %v3816
  %v3818 = vlaneseq
  %v3819 = vshrl.u32 %v3818, 7
  %v3820 = vsub.s32 %v3672, %v3819
  %v3821 = vrot.slane %v3510, %v3820
  %v3822 = vsel %vm3677, %v3821, %v3817
  %v3823 = vlaneseq
  %v3824 = vshrl.u32 %v3823, 7
  %v3825 = vsub.s32 %v3667, %v3824
  %v3826 = vrot.slane %v3513, %v3825
  %v3827 = vlaneseq
  %v3828 = vshrl.u32 %v3827, 7
  %v3829 = vsub.s32 %v3672, %v3828
  %v3830 = vrot.slane %v3516, %v3829
  %v3831 = vsel %vm3677, %v3830, %v3826
  %v3832 = vlaneseq
  %v3833 = vshrl.u32 %v3832, 7
  %v3834 = vsub.s32 %v3667, %v3833
  %v3835 = vrot.slane %v3519, %v3834
  %v3836 = vlaneseq
  %v3837 = vshrl.u32 %v3836, 7
  %v3838 = vsub.s32 %v3672, %v3837
  %v3839 = vrot.slane %v3522, %v3838
  %v3840 = vsel %vm3677, %v3839, %v3835
  %v3841 = vlaneseq
  %v3842 = vshrl.u32 %v3841, 7
  %v3843 = vsub.s32 %v3667, %v3842
  %v3844 = vrot.slane %v3525, %v3843
  %v3845 = vlaneseq
  %v3846 = vshrl.u32 %v3845, 7
  %v3847 = vsub.s32 %v3672, %v3846
  %v3848 = vrot.slane %v3528, %v3847
  %v3849 = vsel %vm3677, %v3848, %v3844
  %v3850 = vlaneseq
  %v3851 = vshrl.u32 %v3850, 7
  %v3852 = vsub.s32 %v3667, %v3851
  %v3853 = vrot.slane %v3531, %v3852
  %v3854 = vlaneseq
  %v3855 = vshrl.u32 %v3854, 7
  %v3856 = vsub.s32 %v3672, %v3855
  %v3857 = vrot.slane %v3534, %v3856
  %v3858 = vsel %vm3677, %v3857, %v3853
  %v3859 = vlaneseq
  %v3860 = vshrl.u32 %v3859, 7
  %v3861 = vsub.s32 %v3667, %v3860
  %v3862 = vrot.slane %v3537, %v3861
  %v3863 = vlaneseq
  %v3864 = vshrl.u32 %v3863, 7
  %v3865 = vsub.s32 %v3672, %v3864
  %v3866 = vrot.slane %v3540, %v3865
  %v3867 = vsel %vm3677, %v3866, %v3862
  %v3868 = vlaneseq
  %v3869 = vshrl.u32 %v3868, 7
  %v3870 = vsub.s32 %v3667, %v3869
  %v3871 = vrot.slane %v3543, %v3870
  %v3872 = vlaneseq
  %v3873 = vshrl.u32 %v3872, 7
  %v3874 = vsub.s32 %v3672, %v3873
  %v3875 = vrot.slane %v3546, %v3874
  %v3876 = vsel %vm3677, %v3875, %v3871
  %v3877 = vlaneseq
  %v3878 = vshrl.u32 %v3877, 7
  %v3879 = vsub.s32 %v3667, %v3878
  %v3880 = vrot.slane %v3549, %v3879
  %v3881 = vlaneseq
  %v3882 = vshrl.u32 %v3881, 7
  %v3883 = vsub.s32 %v3672, %v3882
  %v3884 = vrot.slane %v3552, %v3883
  %v3885 = vsel %vm3677, %v3884, %v3880
  %v3886 = vlaneseq
  %v3887 = vshrl.u32 %v3886, 7
  %v3888 = vsub.s32 %v3667, %v3887
  %v3889 = vrot.slane %v3555, %v3888
  %v3890 = vlaneseq
  %v3891 = vshrl.u32 %v3890, 7
  %v3892 = vsub.s32 %v3672, %v3891
  %v3893 = vrot.slane %v3558, %v3892
  %v3894 = vsel %vm3677, %v3893, %v3889
  %v3895 = vlaneseq
  %v3896 = vshrl.u32 %v3895, 7
  %v3897 = vsub.s32 %v3667, %v3896
  %v3898 = vrot.slane %v3561, %v3897
  %v3899 = vlaneseq
  %v3900 = vshrl.u32 %v3899, 7
  %v3901 = vsub.s32 %v3672, %v3900
  %v3902 = vrot.slane %v3564, %v3901
  %v3903 = vsel %vm3677, %v3902, %v3898
  %v3904 = vlaneseq
  %v3905 = vshrl.u32 %v3904, 7
  %v3906 = vsub.s32 %v3667, %v3905
  %v3907 = vrot.slane %v3567, %v3906
  %v3908 = vlaneseq
  %v3909 = vshrl.u32 %v3908, 7
  %v3910 = vsub.s32 %v3672, %v3909
  %v3911 = vrot.slane %v3570, %v3910
  %v3912 = vsel %vm3677, %v3911, %v3907
  %v3913 = vlaneseq
  %v3914 = vshrl.u32 %v3913, 7
  %v3915 = vsub.s32 %v3667, %v3914
  %v3916 = vrot.slane %v3573, %v3915
  %v3917 = vlaneseq
  %v3918 = vshrl.u32 %v3917, 7
  %v3919 = vsub.s32 %v3672, %v3918
  %v3920 = vrot.slane %v3576, %v3919
  %v3921 = vsel %vm3677, %v3920, %v3916
  %v3922 = vlaneseq
  %v3923 = vshrl.u32 %v3922, 7
  %v3924 = vsub.s32 %v3667, %v3923
  %v3925 = vrot.slane %v3579, %v3924
  %v3926 = vlaneseq
  %v3927 = vshrl.u32 %v3926, 7
  %v3928 = vsub.s32 %v3672, %v3927
  %v3929 = vrot.slane %v3582, %v3928
  %v3930 = vsel %vm3677, %v3929, %v3925
  %v3931 = vlaneseq
  %v3932 = vshrl.u32 %v3931, 7
  %v3933 = vsub.s32 %v3667, %v3932
  %v3934 = vrot.slane %v3585, %v3933
  %v3935 = vlaneseq
  %v3936 = vshrl.u32 %v3935, 7
  %v3937 = vsub.s32 %v3672, %v3936
  %v3938 = vrot.slane %v3588, %v3937
  %v3939 = vsel %vm3677, %v3938, %v3934
  %v3940 = vlaneseq
  %v3941 = vshrl.u32 %v3940, 7
  %v3942 = vsub.s32 %v3667, %v3941
  %v3943 = vrot.slane %v3591, %v3942
  %v3944 = vlaneseq
  %v3945 = vshrl.u32 %v3944, 7
  %v3946 = vsub.s32 %v3672, %v3945
  %v3947 = vrot.slane %v3594, %v3946
  %v3948 = vsel %vm3677, %v3947, %v3943
  %v3949 = vlaneseq
  %v3950 = vshrl.u32 %v3949, 7
  %v3951 = vsub.s32 %v3667, %v3950
  %v3952 = vrot.slane %v3597, %v3951
  %v3953 = vlaneseq
  %v3954 = vshrl.u32 %v3953, 7
  %v3955 = vsub.s32 %v3672, %v3954
  %v3956 = vrot.slane %v3600, %v3955
  %v3957 = vsel %vm3677, %v3956, %v3952
  %v3958 = vsel %vm1293, %v3687, %v3678
  %vm3959 = vcmask 1042434
  %v3960 = vsel %vm3959, %v3696, %v3958
  %vm3961 = vcmask 1043459
  %v3962 = vsel %vm3961, %v3705, %v3960
  %vm3963 = vcmask 1044484
  %v3964 = vsel %vm3963, %v3714, %v3962
  %vm3965 = vcmask 1045509
  %v3966 = vsel %vm3965, %v3723, %v3964
  %vm3967 = vcmask 1046534
  %v3968 = vsel %vm3967, %v3732, %v3966
  %vm3969 = vcmask 1047559
  %v3970 = vsel %vm3969, %v3741, %v3968
  %v3971 = vsel %vm1293, %v3759, %v3750
  %v3972 = vsel %vm3959, %v3768, %v3971
  %v3973 = vsel %vm3961, %v3777, %v3972
  %v3974 = vsel %vm3963, %v3786, %v3973
  %v3975 = vsel %vm3965, %v3795, %v3974
  %v3976 = vsel %vm3967, %v3804, %v3975
  %v3977 = vsel %vm3969, %v3813, %v3976
  %v3978 = vsel %vm1293, %v3831, %v3822
  %v3979 = vsel %vm3959, %v3840, %v3978
  %v3980 = vsel %vm3961, %v3849, %v3979
  %v3981 = vsel %vm3963, %v3858, %v3980
  %v3982 = vsel %vm3965, %v3867, %v3981
  %v3983 = vsel %vm3967, %v3876, %v3982
  %v3984 = vsel %vm3969, %v3885, %v3983
  %v3985 = vsel %vm1293, %v3903, %v3894
  %v3986 = vsel %vm3959, %v3912, %v3985
  %v3987 = vsel %vm3961, %v3921, %v3986
  %v3988 = vsel %vm3963, %v3930, %v3987
  %v3989 = vsel %vm3965, %v3939, %v3988
  %v3990 = vsel %vm3967, %v3948, %v3989
  %v3991 = vsel %vm3969, %v3957, %v3990
  %vm3996 = vcmask 130048
  %v3997 = vsel %vm3996, %v2133, %v3970
  %v3998 = vsel %vm3996, %v2134, %v3977
  %v3999 = vsel %vm3996, %v2135, %v3984
  %v4000 = vsel %vm3996, %v2136, %v3991
  %vm4005 = vcmask 1042432
  %v4006 = vrot.slane %v3997, 5
  %v4007 = vrot.slane %v3998, 5
  %v4008 = vsel %vm4005, %v4006, %v4007
  %v4009 = vrot.slane %v3999, 5
  %v4010 = vrot.slane %v4000, 5
  %v4011 = vsel %vm4005, %v4009, %v4010
  %v4018 = vsel %vm4005, 0.0, %v4006
  %v4019 = vsel %vm4005, 0.0, %v4009
  %v4020 = vsel %vm4005, %v4007, 0.0
  %v4021 = vsel %vm4005, %v4010, 0.0
  %v4026 = vrot.slane %v4018, 1
  %v4027 = vrot.slane %v4008, 1
  %v4028 = vsel %vm588, %v4026, %v4027
  %v4029 = vrot.slane %v4020, 1
  %v4030 = vsel %vm588, %v4027, %v4029
  %v4031 = vrot.slane %v4019, 1
  %v4032 = vrot.slane %v4011, 1
  %v4033 = vsel %vm588, %v4031, %v4032
  %v4034 = vrot.slane %v4021, 1
  %v4035 = vsel %vm588, %v4032, %v4034
  %4036 = vrot.lane.b32.xlu0 %v4028, 32
  %v4037 = vpop.permute.xlu0 %4036
  %4038 = vrot.lane.b32.xlu0 %v4030, 32
  %v4039 = vpop.permute.xlu0 %4038
  %4040 = vrot.lane.b32.xlu0 %v4033, 32
  %v4041 = vpop.permute.xlu0 %4040
  %4042 = vrot.lane.b32.xlu0 %v4035, 32
  %v4043 = vpop.permute.xlu0 %4042
  %v4048 = vrot.slane %v4018, 2
  %v4049 = vrot.slane %v4008, 2
  %v4050 = vsel %vm603, %v4048, %v4049
  %v4051 = vrot.slane %v4020, 2
  %v4052 = vsel %vm603, %v4049, %v4051
  %v4053 = vrot.slane %v4019, 2
  %v4054 = vrot.slane %v4011, 2
  %v4055 = vsel %vm603, %v4053, %v4054
  %v4056 = vrot.slane %v4021, 2
  %v4057 = vsel %vm603, %v4054, %v4056
  %4058 = vrot.lane.b32.xlu0 %v4050, 64
  %v4059 = vpop.permute.xlu0 %4058
  %4060 = vrot.lane.b32.xlu0 %v4052, 64
  %v4061 = vpop.permute.xlu0 %4060
  %4062 = vrot.lane.b32.xlu0 %v4055, 64
  %v4063 = vpop.permute.xlu0 %4062
  %4064 = vrot.lane.b32.xlu0 %v4057, 64
  %v4065 = vpop.permute.xlu0 %4064
  %vm4070 = vcmask 1044480
  %v4071 = vrot.slane %v4018, 3
  %v4072 = vrot.slane %v4008, 3
  %v4073 = vsel %vm4070, %v4071, %v4072
  %v4074 = vrot.slane %v4020, 3
  %v4075 = vsel %vm4070, %v4072, %v4074
  %v4076 = vrot.slane %v4019, 3
  %v4077 = vrot.slane %v4011, 3
  %v4078 = vsel %vm4070, %v4076, %v4077
  %v4079 = vrot.slane %v4021, 3
  %v4080 = vsel %vm4070, %v4077, %v4079
  %4081 = vrot.lane.b32.xlu0 %v4073, 96
  %v4082 = vpop.permute.xlu0 %4081
  %4083 = vrot.lane.b32.xlu0 %v4075, 96
  %v4084 = vpop.permute.xlu0 %4083
  %4085 = vrot.lane.b32.xlu0 %v4078, 96
  %v4086 = vpop.permute.xlu0 %4085
  %4087 = vrot.lane.b32.xlu0 %v4080, 96
  %v4088 = vpop.permute.xlu0 %4087
  %vm4093 = vcmask 1043456
  %v4094 = vrot.slane %v4018, 4
  %v4095 = vrot.slane %v4008, 4
  %v4096 = vsel %vm4093, %v4094, %v4095
  %v4097 = vrot.slane %v4020, 4
  %v4098 = vsel %vm4093, %v4095, %v4097
  %v4099 = vrot.slane %v4019, 4
  %v4100 = vrot.slane %v4011, 4
  %v4101 = vsel %vm4093, %v4099, %v4100
  %v4102 = vrot.slane %v4021, 4
  %v4103 = vsel %vm4093, %v4100, %v4102
  %v4108 = vrot.slane %v4018, 5
  %v4109 = vrot.slane %v4008, 5
  %v4110 = vsel %vm4005, %v4108, %v4109
  %v4111 = vrot.slane %v4020, 5
  %v4112 = vsel %vm4005, %v4109, %v4111
  %v4113 = vrot.slane %v4019, 5
  %v4114 = vrot.slane %v4011, 5
  %v4115 = vsel %vm4005, %v4113, %v4114
  %v4116 = vrot.slane %v4021, 5
  %v4117 = vsel %vm4005, %v4114, %v4116
  %4118 = vrot.lane.b32.xlu0 %v4110, 32
  %v4119 = vpop.permute.xlu0 %4118
  %4120 = vrot.lane.b32.xlu0 %v4112, 32
  %v4121 = vpop.permute.xlu0 %4120
  %4122 = vrot.lane.b32.xlu0 %v4115, 32
  %v4123 = vpop.permute.xlu0 %4122
  %4124 = vrot.lane.b32.xlu0 %v4117, 32
  %v4125 = vpop.permute.xlu0 %4124
  %vm4130 = vcmask 1041408
  %v4131 = vrot.slane %v4018, 6
  %v4132 = vrot.slane %v4008, 6
  %v4133 = vsel %vm4130, %v4131, %v4132
  %v4134 = vrot.slane %v4020, 6
  %v4135 = vsel %vm4130, %v4132, %v4134
  %v4136 = vrot.slane %v4019, 6
  %v4137 = vrot.slane %v4011, 6
  %v4138 = vsel %vm4130, %v4136, %v4137
  %v4139 = vrot.slane %v4021, 6
  %v4140 = vsel %vm4130, %v4137, %v4139
  %4141 = vrot.lane.b32.xlu0 %v4133, 64
  %v4142 = vpop.permute.xlu0 %4141
  %4143 = vrot.lane.b32.xlu0 %v4135, 64
  %v4144 = vpop.permute.xlu0 %4143
  %4145 = vrot.lane.b32.xlu0 %v4138, 64
  %v4146 = vpop.permute.xlu0 %4145
  %4147 = vrot.lane.b32.xlu0 %v4140, 64
  %v4148 = vpop.permute.xlu0 %4147
  %vm4153 = vcmask 261120
  %v4154 = vsel %vm4153, %v4018, %v4037
  %v4155 = vsel %vm4153, %v4008, %v4039
  %v4156 = vsel %vm4153, %v4019, %v4041
  %v4157 = vsel %vm4153, %v4011, %v4043
  %v4158 = vsel %vm150, %v4154, %v4059
  %v4159 = vsel %vm150, %v4155, %v4061
  %v4160 = vsel %vm150, %v4156, %v4063
  %v4161 = vsel %vm150, %v4157, %v4065
  %vm4162 = vcmask 785408
  %v4163 = vsel %vm4162, %v4158, %v4082
  %v4164 = vsel %vm4162, %v4159, %v4084
  %v4165 = vsel %vm4162, %v4160, %v4086
  %v4166 = vsel %vm4162, %v4161, %v4088
  %v4167 = vsel %vm4153, %v4096, %v4119
  %v4168 = vsel %vm4153, %v4098, %v4121
  %v4169 = vsel %vm4153, %v4101, %v4123
  %v4170 = vsel %vm4153, %v4103, %v4125
  %v4171 = vsel %vm150, %v4167, %v4142
  %v4172 = vsel %vm150, %v4168, %v4144
  %v4173 = vsel %vm150, %v4169, %v4146
  %v4174 = vsel %vm150, %v4170, %v4148
  %v4175 = vld [vmem:[%s13] sm:$0xff]
  %v4176 = vld [vmem:[%s13 + $0x8] sm:$0xff]
  %v4177 = vld [vmem:[%s13 + $0x10] sm:$0xff]
  %v4178 = vld [vmem:[%s13 + $0x18] sm:$0xff]
  %v4179 = vld [vmem:[%s13 + $0x20] sm:$0xff]
  %v4180 = vld [vmem:[%s13 + $0x28] sm:$0xff]
  %v4181 = vld [vmem:[%s13 + $0x30] sm:$0xff]
  %v4182 = vld [vmem:[%s13 + $0x38] sm:$0xff]
  %v4183 = vld [vmem:[%s13 + $0x40] sm:$0xff]
  %v4184 = vld [vmem:[%s13 + $0x48] sm:$0xff]
  %v4185 = vld [vmem:[%s13 + $0x50] sm:$0xff]
  %v4186 = vld [vmem:[%s13 + $0x58] sm:$0xff]
  %v4187 = vld [vmem:[%s13 + $0x60] sm:$0xff]
  %v4188 = vld [vmem:[%s13 + $0x68] sm:$0xff]
  %v4189 = vld [vmem:[%s13 + $0x70] sm:$0xff]
  %v4190 = vld [vmem:[%s13 + $0x78] sm:$0xff]
  %v4191 = vld [vmem:[%s13 + $0x80] sm:$0xff]
  %v4192 = vld [vmem:[%s13 + $0x88] sm:$0xff]
  %v4193 = vld [vmem:[%s13 + $0x90] sm:$0xff]
  %v4194 = vld [vmem:[%s13 + $0x98] sm:$0xff]
  %v4195 = vld [vmem:[%s13 + $0xa0] sm:$0xff]
  %v4196 = vld [vmem:[%s13 + $0xa8] sm:$0xff]
  %v4197 = vld [vmem:[%s13 + $0xb0] sm:$0xff]
  %v4198 = vld [vmem:[%s13 + $0xb8] sm:$0xff]
  %v4199 = vld [vmem:[%s13 + $0xc0] sm:$0xff]
  %v4200 = vld [vmem:[%s13 + $0xc8] sm:$0xff]
  %v4201 = vld [vmem:[%s13 + $0xd0] sm:$0xff]
  %v4202 = vld [vmem:[%s13 + $0xd8] sm:$0xff]
  %v4204 = vsel %vm4162, %v4171, 0
  %v4207 = vsel %vm4162, %v4172, 0
  %v4210 = vsel %vm4162, %v4173, 0
  %v4213 = vsel %vm4162, %v4174, 0
  %4215 = vmatprep.subr.mxu0 0.0
  %4216 = vmatpush1.msra.mxu0 %v4190
  %4217 = vmatprep.subr.mxu0 0.0
  %4218 = vmatpush1.msra.mxu0 %v4189
  %4219 = vmatprep.subr.mxu0 0.0
  %4220 = vmatpush1.msra.mxu0 %v4188
  %4221 = vmatprep.subr.mxu0 0.0
  %4222 = vmatpush1.msra.mxu0 %v4187
  %4223 = vmatprep.subr.mxu0 0.0
  %4224 = vmatpush1.msra.mxu0 %v4186
  %4225 = vmatprep.subr.mxu0 0.0
  %4226 = vmatpush1.msra.mxu0 %v4185
  %4227 = vmatprep.subr.mxu0 0.0
  %4228 = vmatpush1.msra.mxu0 %v4184
  %4229 = vmatprep.subr.mxu0 0.0
  %4230 = vmatpush1.msra.mxu0 %v4183
  %4231 = vmatprep.subr.mxu0 0.0
  %4232 = vmatpush1.msra.mxu0 %v4182
  %4233 = vmatprep.subr.mxu0 0.0
  %4234 = vmatpush1.msra.mxu0 %v4181
  %4235 = vmatprep.subr.mxu0 0.0
  %4236 = vmatpush1.msra.mxu0 %v4180
  %4237 = vmatprep.subr.mxu0 0.0
  %4238 = vmatpush1.msra.mxu0 %v4179
  %4239 = vmatprep.subr.mxu0 0.0
  %4240 = vmatpush1.msra.mxu0 %v4178
  %4241 = vmatprep.subr.mxu0 0.0
  %4242 = vmatpush1.msra.mxu0 %v4177
  %4243 = vmatprep.subr.mxu0 0.0
  %4244 = vmatpush1.msra.mxu0 %v4176
  %4245 = vmatprep.subr.mxu0 0.0
  %4246 = vmatpush1.msra.mxu0 %v4175
  %4247 = vmatprep.subr.mxu0 0.0
  %4248 = vmatpush2.msra.mxu0 0.0
  %4249 = vmatprep.subr.mxu0 0.0
  %4250 = vmatpush2.msra.mxu0 0.0
  %4251 = vmatprep.subr.mxu0 0.0
  %4252 = vmatpush2.msra.mxu0 0.0
  %4253 = vmatprep.subr.mxu0 0.0
  %4254 = vmatpush2.msra.mxu0 0.0
  %4255 = vmatprep.subr.mxu0 0.0
  %4256 = vmatpush2.msra.mxu0 %v4202
  %4257 = vmatprep.subr.mxu0 0.0
  %4258 = vmatpush2.msra.mxu0 %v4201
  %4259 = vmatprep.subr.mxu0 0.0
  %4260 = vmatpush2.msra.mxu0 %v4200
  %4261 = vmatprep.subr.mxu0 0.0
  %4262 = vmatpush2.msra.mxu0 %v4199
  %4263 = vmatprep.subr.mxu0 0.0
  %4264 = vmatpush2.msra.mxu0 %v4198
  %4265 = vmatprep.subr.mxu0 0.0
  %4266 = vmatpush2.msra.mxu0 %v4197
  %4267 = vmatprep.subr.mxu0 0.0
  %4268 = vmatpush2.msra.mxu0 %v4196
  %4269 = vmatprep.subr.mxu0 0.0
  %4270 = vmatpush2.msra.mxu0 %v4195
  %4271 = vmatprep.subr.mxu0 0.0
  %4272 = vmatpush2.msra.mxu0 %v4194
  %4273 = vmatprep.subr.mxu0 0.0
  %4274 = vmatpush2.msra.mxu0 %v4193
  %4275 = vmatprep.subr.mxu0 0.0
  %4276 = vmatpush2.msra.mxu0 %v4192
  %4277 = vmatprep.subr.mxu0 0.0
  %4278 = vmatpush2.msra.mxu0 %v4191
  %4279 = vmatprep.mubr.f32.mxu0 %v4204
  %4280 = vmatmul.mubr.f32.gmra.mxu0 %v4163
  %v4281 = vpop.f32.mrf.mxu0
  %v4282 = vadd.f32 0.0, %v4281
  %v4283 = vpop.f32.mrf.mxu0
  %4284 = vmatprep.mubr.f32.mxu0 %v4207
  %4285 = vmatmul.mubr.f32.gmra.mxu0 %v4164
  %v4286 = vpop.f32.mrf.mxu0
  %v4287 = vadd.f32 0.0, %v4286
  %v4288 = vpop.f32.mrf.mxu0
  %4289 = vmatprep.mubr.f32.mxu0 %v4210
  %4290 = vmatmul.mubr.f32.gmra.mxu0 %v4165
  %v4291 = vpop.f32.mrf.mxu0
  %v4292 = vadd.f32 0.0, %v4291
  %v4293 = vpop.f32.mrf.mxu0
  %4294 = vmatprep.mubr.f32.mxu0 %v4213
  %4295 = vmatmul.mubr.f32.gmra.mxu0 %v4166
  %v4296 = vpop.f32.mrf.mxu0
  %v4297 = vadd.f32 0.0, %v4296
  %v4298 = vpop.f32.mrf.mxu0
  %4299 = vdwg.mxu0
  %v4300 = vsel %vm3996, %v4282, 0.0
  %v4301 = vsel %vm3996, %v4287, 0.0
  %v4302 = vadd.f32 %v4300, %v4301
  %v4303 = vsel %vm3996, %v4292, 0.0
  %v4304 = vadd.f32 %v4302, %v4303
  %v4305 = vsel %vm3996, %v4297, 0.0
  %v4306 = vadd.f32 %v4304, %v4305
  %4307 = vadd.xlane.f32.xlu0 %v4306
  %v4308 = vpop.xlane.xlu0 %4307
  %v4309 = vrot.slane %v4308, 4
  %v4310 = vadd.f32 %v4308, %v4309
  %v4311 = vrot.slane %v4310, 2
  %v4312 = vadd.f32 %v4310, %v4311
  %v4313 = vrot.slane %v4312, 1
  %v4314 = vadd.f32 %v4312, %v4313
  %s4315 = vtos %v4314
  %v4316 = vstv %s4315
  %v4317 = vrcp.pop 512.0
  %v4318 = vmul.f32 %v4316, %v4317
  %v4319 = vmul.f32 %v4282, %v4282
  %v4320 = vmul.f32 %v4287, %v4287
  %v4321 = vmul.f32 %v4292, %v4292
  %v4322 = vmul.f32 %v4297, %v4297
  %v4323 = vsel %vm3996, %v4319, 0.0
  %v4324 = vsel %vm3996, %v4320, 0.0
  %v4325 = vadd.f32 %v4323, %v4324
  %v4326 = vsel %vm3996, %v4321, 0.0
  %v4327 = vadd.f32 %v4325, %v4326
  %v4328 = vsel %vm3996, %v4322, 0.0
  %v4329 = vadd.f32 %v4327, %v4328
  %4330 = vadd.xlane.f32.xlu0 %v4329
  %v4331 = vpop.xlane.xlu0 %4330
  %v4332 = vrot.slane %v4331, 4
  %v4333 = vadd.f32 %v4331, %v4332
  %v4334 = vrot.slane %v4333, 2
  %v4335 = vadd.f32 %v4333, %v4334
  %v4336 = vrot.slane %v4335, 1
  %v4337 = vadd.f32 %v4335, %v4336
  %s4338 = vtos %v4337
  %v4339 = vstv %s4338
  %v4340 = vmul.f32 %v4339, %v4317
  %v4341 = vmul.f32 %v4318, %v4318
  %v4342 = vsub.f32 %v4340, %v4341
  %v4343 = vsub.f32 %v4282, %v4318
  %v4344 = vsub.f32 %v4287, %v4318
  %v4345 = vsub.f32 %v4292, %v4318
  %v4346 = vsub.f32 %v4297, %v4318
  %v4347 = vadd.f32 %v4342, 1e-05
  %v4348 = vrsqrt.pop %v4347
  %v4349 = vmul.f32 %v4343, %v4348
  %v4350 = vmul.f32 %v4344, %v4348
  %v4351 = vmul.f32 %v4345, %v4348
  %v4352 = vmul.f32 %v4346, %v4348
  %v4353 = vld [vmem:[#allocation2] sm:$0x1]
  %v4355 = vlaneseq
  %v4356 = vshrl.u32 %v4355, 7
  %v4357 = vsub.s32 0, %v4356
  %v4358 = vrot.slane %v4353, %v4357
  %4359 = vset.pattern.permute.xlu0 0
  %4360 = vperm.xlu0 %4359, %v4358
  %v4361 = vpop.permute.xlu0 %4360
  %v4363 = vmul.f32 %v4349, %v4361
  %v4364 = vmul.f32 %v4350, %v4361
  %v4365 = vmul.f32 %v4351, %v4361
  %v4366 = vmul.f32 %v4352, %v4361
  %v4367 = vld [vmem:[#allocation3] sm:$0x1]
  %v4369 = vlaneseq
  %v4370 = vshrl.u32 %v4369, 7
  %v4371 = vsub.s32 0, %v4370
  %v4372 = vrot.slane %v4367, %v4371
  %4373 = vset.pattern.permute.xlu0 0
  %4374 = vperm.xlu0 %4373, %v4372
  %v4375 = vpop.permute.xlu0 %4374
  %v4377 = vadd.f32 %v4363, %v4375
  %v4378 = vadd.f32 %v4364, %v4375
  %v4379 = vadd.f32 %v4365, %v4375
  %v4380 = vadd.f32 %v4366, %v4375
  %v4381 = vxor.u32 %v4377, 2147483648
  %v4382 = vxor.u32 %v4378, 2147483648
  %v4383 = vxor.u32 %v4379, 2147483648
  %v4384 = vxor.u32 %v4380, 2147483648
  %v4385 = vmul.f32 %v4381, 1.442695
  %v4386 = vpow.pop %v4385
  %v4387 = vmul.f32 %v4382, 1.442695
  %v4388 = vpow.pop %v4387
  %v4389 = vmul.f32 %v4383, 1.442695
  %v4390 = vpow.pop %v4389
  %v4391 = vmul.f32 %v4384, 1.442695
  %v4392 = vpow.pop %v4391
  %v4393 = vadd.f32 %v4386, 1.0
  %v4394 = vadd.f32 %v4388, 1.0
  %v4395 = vadd.f32 %v4390, 1.0
  %v4396 = vadd.f32 %v4392, 1.0
  %v4397 = vrcp.pop %v4393
  %v4398 = vmul.f32 1.0, %v4397
  %v4399 = vrcp.pop %v4394
  %v4400 = vmul.f32 1.0, %v4399
  %v4401 = vrcp.pop %v4395
  %v4402 = vmul.f32 1.0, %v4401
  %v4403 = vrcp.pop %v4396
  %v4404 = vmul.f32 1.0, %v4403
  %v4405 = vld [vmem:[%s23] sm:$0xff]
  %v4406 = vld [vmem:[%s23 + $0x8] sm:$0xff]
  %v4408 = vsel %vm3996, %v4398, 0
  %v4411 = vsel %vm3996, %v4400, 0
  %v4414 = vsel %vm3996, %v4402, 0
  %v4417 = vsel %vm3996, %v4404, 0
  %4419 = vmatprep.subr.mxu0 0.0
  %4420 = vmatpush1.msra.mxu0 0.0
  %4421 = vmatprep.subr.mxu0 0.0
  %4422 = vmatpush1.msra.mxu0 0.0
  %4423 = vmatprep.subr.mxu0 0.0
  %4424 = vmatpush1.msra.mxu0 0.0
  %4425 = vmatprep.subr.mxu0 0.0
  %4426 = vmatpush1.msra.mxu0 0.0
  %4427 = vmatprep.subr.mxu0 0.0
  %4428 = vmatpush1.msra.mxu0 0.0
  %4429 = vmatprep.subr.mxu0 0.0
  %4430 = vmatpush1.msra.mxu0 0.0
  %4431 = vmatprep.subr.mxu0 0.0
  %4432 = vmatpush1.msra.mxu0 0.0
  %4433 = vmatprep.subr.mxu0 0.0
  %4434 = vmatpush1.msra.mxu0 0.0
  %4435 = vmatprep.subr.mxu0 0.0
  %4436 = vmatpush1.msra.mxu0 0.0
  %4437 = vmatprep.subr.mxu0 0.0
  %4438 = vmatpush1.msra.mxu0 0.0
  %4439 = vmatprep.subr.mxu0 0.0
  %4440 = vmatpush1.msra.mxu0 0.0
  %4441 = vmatprep.subr.mxu0 0.0
  %4442 = vmatpush1.msra.mxu0 0.0
  %4443 = vmatprep.subr.mxu0 0.0
  %4444 = vmatpush1.msra.mxu0 0.0
  %4445 = vmatprep.subr.mxu0 0.0
  %4446 = vmatpush1.msra.mxu0 0.0
  %4447 = vmatprep.subr.mxu0 0.0
  %4448 = vmatpush1.msra.mxu0 %v4406
  %4449 = vmatprep.subr.mxu0 0.0
  %4450 = vmatpush1.msra.mxu0 %v4405
  %4451 = vmatprep.subr.mxu0 0.0
  %4452 = vmatpush2.msra.mxu0 0.0
  %4453 = vmatprep.subr.mxu0 0.0
  %4454 = vmatpush2.msra.mxu0 0.0
  %4455 = vmatprep.subr.mxu0 0.0
  %4456 = vmatpush2.msra.mxu0 0.0
  %4457 = vmatprep.subr.mxu0 0.0
  %4458 = vmatpush2.msra.mxu0 0.0
  %4459 = vmatprep.subr.mxu0 0.0
  %4460 = vmatpush2.msra.mxu0 0.0
  %4461 = vmatprep.subr.mxu0 0.0
  %4462 = vmatpush2.msra.mxu0 0.0
  %4463 = vmatprep.subr.mxu0 0.0
  %4464 = vmatpush2.msra.mxu0 0.0
  %4465 = vmatprep.subr.mxu0 0.0
  %4466 = vmatpush2.msra.mxu0 0.0
  %4467 = vmatprep.subr.mxu0 0.0
  %4468 = vmatpush2.msra.mxu0 0.0
  %4469 = vmatprep.subr.mxu0 0.0
  %4470 = vmatpush2.msra.mxu0 0.0
  %4471 = vmatprep.subr.mxu0 0.0
  %4472 = vmatpush2.msra.mxu0 0.0
  %4473 = vmatprep.subr.mxu0 0.0
  %4474 = vmatpush2.msra.mxu0 0.0
  %4475 = vmatprep.subr.mxu0 0.0
  %4476 = vmatpush2.msra.mxu0 0.0
  %4477 = vmatprep.subr.mxu0 0.0
  %4478 = vmatpush2.msra.mxu0 0.0
  %4479 = vmatprep.subr.mxu0 0.0
  %4480 = vmatpush2.msra.mxu0 0.0
  %4481 = vmatprep.subr.mxu0 0.0
  %4482 = vmatpush2.msra.mxu0 0.0
  %4483 = vmatprep.mubr.f32.mxu0 0.0
  %4484 = vmatmul.mubr.f32.gmra.mxu0 %v4408
  %v4485 = vpop.f32.mrf.mxu0
  %v4486 = vadd.f32 0.0, %v4485
  %v4487 = vpop.f32.mrf.mxu0
  %4488 = vmatprep.mubr.f32.mxu0 0.0
  %4489 = vmatmul.mubr.f32.gmra.mxu0 %v4411
  %v4490 = vpop.f32.mrf.mxu0
  %v4491 = vadd.f32 0.0, %v4490
  %v4492 = vpop.f32.mrf.mxu0
  %4493 = vmatprep.mubr.f32.mxu0 0.0
  %4494 = vmatmul.mubr.f32.gmra.mxu0 %v4414
  %v4495 = vpop.f32.mrf.mxu0
  %v4496 = vadd.f32 0.0, %v4495
  %v4497 = vpop.f32.mrf.mxu0
  %4498 = vmatprep.mubr.f32.mxu0 0.0
  %4499 = vmatmul.mubr.f32.gmra.mxu0 %v4417
  %v4500 = vpop.f32.mrf.mxu0
  %v4501 = vadd.f32 0.0, %v4500
  %v4502 = vpop.f32.mrf.mxu0
  %4503 = vdwg.mxu0
  %v4504 = vmul.f32 %v2028, %v4486
  %v4505 = vmul.f32 %v2029, %v4491
  %v4506 = vmul.f32 %v2030, %v4496
  %v4507 = vmul.f32 %v2031, %v4501
  %v4508 = vpack.c.bf16 %v4505, %v4504
  %v4509 = vpack.c.bf16 %v4507, %v4506
  %v4510 = vld [vmem:[%s16] sm:$0xf]
  %v4511 = vld [vmem:[%s16 + $0x4] sm:$0xf]
  %v4512 = vld [vmem:[%s16 + $0x8] sm:$0xf]
  %v4513 = vld [vmem:[%s16 + $0xc] sm:$0xf]
  %v4514 = vld [vmem:[%s16 + $0x10] sm:$0xf]
  %v4515 = vld [vmem:[%s16 + $0x14] sm:$0xf]
  %v4516 = vld [vmem:[%s16 + $0x18] sm:$0xf]
  %v4517 = vld [vmem:[%s16 + $0x1c] sm:$0xf]
  %v4518 = vld [vmem:[%s16 + $0x20] sm:$0xf]
  %v4519 = vld [vmem:[%s16 + $0x24] sm:$0xf]
  %v4520 = vld [vmem:[%s16 + $0x28] sm:$0xf]
  %v4521 = vld [vmem:[%s16 + $0x2c] sm:$0xf]
  %v4522 = vld [vmem:[%s16 + $0x30] sm:$0xf]
  %v4523 = vld [vmem:[%s16 + $0x34] sm:$0xf]
  %v4524 = vld [vmem:[%s16 + $0x38] sm:$0xf]
  %v4525 = vld [vmem:[%s16 + $0x3c] sm:$0xf]
  %v4526 = vld [vmem:[%s17] sm:$0x1]
  %v4528 = vlaneseq
  %v4529 = vshrl.u32 %v4528, 7
  %v4530 = vsub.s32 0, %v4529
  %v4531 = vrot.slane %v4526, %v4530
  %v4549 = vunpack.c.l.b16 %v4510
  %v4550 = vunpack.c.l.b16 %v4511
  %v4551 = vunpack.c.l.b16 %v4512
  %v4552 = vunpack.c.l.b16 %v4513
  %v4553 = vunpack.c.l.b16 %v4514
  %v4554 = vunpack.c.l.b16 %v4515
  %v4555 = vunpack.c.l.b16 %v4516
  %v4556 = vunpack.c.l.b16 %v4517
  %v4557 = vunpack.c.l.b16 %v4518
  %v4558 = vunpack.c.l.b16 %v4519
  %v4559 = vunpack.c.l.b16 %v4520
  %v4560 = vunpack.c.l.b16 %v4521
  %v4561 = vunpack.c.l.b16 %v4522
  %v4562 = vunpack.c.l.b16 %v4523
  %v4563 = vunpack.c.l.b16 %v4524
  %v4564 = vunpack.c.l.b16 %v4525
  %v4565 = vpack.c.b16 %v4550, %v4549
  %v4566 = vpack.c.b16 %v4552, %v4551
  %v4567 = vpack.c.b16 %v4554, %v4553
  %v4568 = vpack.c.b16 %v4556, %v4555
  %v4569 = vpack.c.b16 %v4558, %v4557
  %v4570 = vpack.c.b16 %v4560, %v4559
  %v4571 = vpack.c.b16 %v4562, %v4561
  %v4572 = vpack.c.b16 %v4564, %v4563
  %4581 = vmatprep.subr.bf16.mxu0 0
  %4582 = vmatpush1.bf16.msra.mxu0 %v4572
  %4583 = vmatprep.subr.bf16.mxu0 0
  %4584 = vmatpush1.bf16.msra.mxu0 %v4571
  %4585 = vmatprep.subr.bf16.mxu0 0
  %4586 = vmatpush1.bf16.msra.mxu0 %v4570
  %4587 = vmatprep.subr.bf16.mxu0 0
  %4588 = vmatpush1.bf16.msra.mxu0 %v4569
  %4589 = vmatprep.subr.bf16.mxu0 0
  %4590 = vmatpush1.bf16.msra.mxu0 %v4568
  %4591 = vmatprep.subr.bf16.mxu0 0
  %4592 = vmatpush1.bf16.msra.mxu0 %v4567
  %4593 = vmatprep.subr.bf16.mxu0 0
  %4594 = vmatpush1.bf16.msra.mxu0 %v4566
  %4595 = vmatprep.subr.bf16.mxu0 0
  %4596 = vmatpush1.bf16.msra.mxu0 %v4565
  %4597 = vmatprep.subr.bf16.mxu0 0
  %4598 = vmatpush2.bf16.msra.mxu0 0
  %4599 = vmatprep.subr.bf16.mxu0 0
  %4600 = vmatpush2.bf16.msra.mxu0 0
  %4601 = vmatprep.subr.bf16.mxu0 0
  %4602 = vmatpush2.bf16.msra.mxu0 0
  %4603 = vmatprep.subr.bf16.mxu0 0
  %4604 = vmatpush2.bf16.msra.mxu0 0
  %4605 = vmatprep.subr.bf16.mxu0 0
  %4606 = vmatpush2.bf16.msra.mxu0 0
  %4607 = vmatprep.subr.bf16.mxu0 0
  %4608 = vmatpush2.bf16.msra.mxu0 0
  %4609 = vmatprep.subr.bf16.mxu0 0
  %4610 = vmatpush2.bf16.msra.mxu0 0
  %4611 = vmatprep.subr.bf16.mxu0 0
  %4612 = vmatpush2.bf16.msra.mxu0 0
  %4613 = vmatprep.mubr.bf16.mxu0 0
  %4614 = vmatmul.mubr.bf16.gmra.mxu0 %v4508
  %v4615 = vpop.f32.mrf.mxu0
  %v4616 = vadd.f32 %v4531, %v4615
  %v4617 = vpop.f32.mrf.mxu0
  %v4618 = vpop.f32.mrf.mxu0
  %v4619 = vadd.f32 %v4531, %v4618
  %v4620 = vpop.f32.mrf.mxu0
  %4621 = vmatprep.mubr.bf16.mxu0 0
  %4622 = vmatmul.mubr.bf16.gmra.mxu0 %v4509
  %v4623 = vpop.f32.mrf.mxu0
  %v4624 = vadd.f32 %v4531, %v4623
  %v4625 = vpop.f32.mrf.mxu0
  %v4626 = vpop.f32.mrf.mxu0
  %v4627 = vadd.f32 %v4531, %v4626
  %v4628 = vpop.f32.mrf.mxu0
  %4629 = vdwg.mxu0
  %v4630 = vld [vmem:[%s18] sm:$0x1]
  %v4631 = vld [vmem:[%s19] sm:$0x1]
  %v4632 = vld [vmem:[%s24] sm:$0xff]
  %v4633 = vld [vmem:[%s24 + $0x8] sm:$0xff]
  %v4634 = vld [vmem:[%s24 + $0x10] sm:$0xff]
  %v4635 = vld [vmem:[%s24 + $0x18] sm:$0xff]
  %v4636 = vld [vmem:[%s24 + $0x20] sm:$0xff]
  %v4637 = vld [vmem:[%s24 + $0x28] sm:$0xff]
  %v4638 = vld [vmem:[%s24 + $0x30] sm:$0xff]
  %v4639 = vld [vmem:[%s24 + $0x38] sm:$0xff]
  %v4640 = vld [vmem:[%s25] sm:$0xf]
  %v4641 = vsel %vm150, %v4616, 0.0
  %v4642 = vsel %vm150, %v4619, 0.0
  %v4643 = vadd.f32 %v4641, %v4642
  %v4644 = vsel %vm150, %v4624, 0.0
  %v4645 = vadd.f32 %v4643, %v4644
  %v4646 = vsel %vm150, %v4627, 0.0
  %v4647 = vadd.f32 %v4645, %v4646
  %v4648 = vrot.slane %v4647, 4
  %v4649 = vadd.f32 %v4647, %v4648
  %v4650 = vrot.slane %v4649, 2
  %v4651 = vadd.f32 %v4649, %v4650
  %v4652 = vrot.slane %v4651, 1
  %v4653 = vadd.f32 %v4651, %v4652
  %v4654 = vmul.f32 %v4616, %v4616
  %v4655 = vmul.f32 %v4619, %v4619
  %v4656 = vmul.f32 %v4624, %v4624
  %v4657 = vmul.f32 %v4627, %v4627
  %v4658 = vsel %vm150, %v4654, 0.0
  %v4659 = vsel %vm150, %v4655, 0.0
  %v4660 = vadd.f32 %v4658, %v4659
  %v4661 = vsel %vm150, %v4656, 0.0
  %v4662 = vadd.f32 %v4660, %v4661
  %v4663 = vsel %vm150, %v4657, 0.0
  %v4664 = vadd.f32 %v4662, %v4663
  %v4665 = vrot.slane %v4664, 4
  %v4666 = vadd.f32 %v4664, %v4665
  %v4667 = vrot.slane %v4666, 2
  %v4668 = vadd.f32 %v4666, %v4667
  %v4669 = vrot.slane %v4668, 1
  %v4670 = vadd.f32 %v4668, %v4669
  %v4672 = vsel %vm150, %v4653, 0
  %4674 = vmatprep.subr.mxu0 0.0
  %4675 = vmatpush1.msra.mxu0 0.0
  %4676 = vmatprep.subr.mxu0 0.0
  %4677 = vmatpush1.msra.mxu0 0.0
  %4678 = vmatprep.subr.mxu0 0.0
  %4679 = vmatpush1.msra.mxu0 0.0
  %4680 = vmatprep.subr.mxu0 0.0
  %4681 = vmatpush1.msra.mxu0 0.0
  %4682 = vmatprep.subr.mxu0 0.0
  %4683 = vmatpush1.msra.mxu0 0.0
  %4684 = vmatprep.subr.mxu0 0.0
  %4685 = vmatpush1.msra.mxu0 0.0
  %4686 = vmatprep.subr.mxu0 0.0
  %4687 = vmatpush1.msra.mxu0 0.0
  %4688 = vmatprep.subr.mxu0 0.0
  %4689 = vmatpush1.msra.mxu0 0.0
  %4690 = vmatprep.subr.mxu0 0.0
  %4691 = vmatpush1.msra.mxu0 %v4639
  %4692 = vmatprep.subr.mxu0 0.0
  %4693 = vmatpush1.msra.mxu0 %v4638
  %4694 = vmatprep.subr.mxu0 0.0
  %4695 = vmatpush1.msra.mxu0 %v4637
  %4696 = vmatprep.subr.mxu0 0.0
  %4697 = vmatpush1.msra.mxu0 %v4636
  %4698 = vmatprep.subr.mxu0 0.0
  %4699 = vmatpush1.msra.mxu0 %v4635
  %4700 = vmatprep.subr.mxu0 0.0
  %4701 = vmatpush1.msra.mxu0 %v4634
  %4702 = vmatprep.subr.mxu0 0.0
  %4703 = vmatpush1.msra.mxu0 %v4633
  %4704 = vmatprep.subr.mxu0 0.0
  %4705 = vmatpush1.msra.mxu0 %v4632
  %4706 = vmatprep.subr.mxu0 0.0
  %4707 = vmatpush2.msra.mxu0 0.0
  %4708 = vmatprep.subr.mxu0 0.0
  %4709 = vmatpush2.msra.mxu0 0.0
  %4710 = vmatprep.subr.mxu0 0.0
  %4711 = vmatpush2.msra.mxu0 0.0
  %4712 = vmatprep.subr.mxu0 0.0
  %4713 = vmatpush2.msra.mxu0 0.0
  %4714 = vmatprep.subr.mxu0 0.0
  %4715 = vmatpush2.msra.mxu0 0.0
  %4716 = vmatprep.subr.mxu0 0.0
  %4717 = vmatpush2.msra.mxu0 0.0
  %4718 = vmatprep.subr.mxu0 0.0
  %4719 = vmatpush2.msra.mxu0 0.0
  %4720 = vmatprep.subr.mxu0 0.0
  %4721 = vmatpush2.msra.mxu0 0.0
  %4722 = vmatprep.subr.mxu0 0.0
  %4723 = vmatpush2.msra.mxu0 0.0
  %4724 = vmatprep.subr.mxu0 0.0
  %4725 = vmatpush2.msra.mxu0 0.0
  %4726 = vmatprep.subr.mxu0 0.0
  %4727 = vmatpush2.msra.mxu0 0.0
  %4728 = vmatprep.subr.mxu0 0.0
  %4729 = vmatpush2.msra.mxu0 0.0
  %4730 = vmatprep.subr.mxu0 0.0
  %4731 = vmatpush2.msra.mxu0 0.0
  %4732 = vmatprep.subr.mxu0 0.0
  %4733 = vmatpush2.msra.mxu0 0.0
  %4734 = vmatprep.subr.mxu0 0.0
  %4735 = vmatpush2.msra.mxu0 0.0
  %4736 = vmatprep.subr.mxu0 0.0
  %4737 = vmatpush2.msra.mxu0 0.0
  %4738 = vmatprep.mubr.f32.mxu0 0.0
  %4739 = vmatmul.mubr.f32.gmra.mxu0 %v4672
  %v4740 = vpop.f32.mrf.mxu0
  %v4741 = vadd.f32 0.0, %v4740
  %v4742 = vpop.f32.mrf.mxu0
  %4743 = vdwg.mxu0
  %v4745 = vsel %vm150, %v4670, 0
  %4747 = vmatprep.subr.mxu0 0.0
  %4748 = vmatpush1.msra.mxu0 0.0
  %4749 = vmatprep.subr.mxu0 0.0
  %4750 = vmatpush1.msra.mxu0 0.0
  %4751 = vmatprep.subr.mxu0 0.0
  %4752 = vmatpush1.msra.mxu0 0.0
  %4753 = vmatprep.subr.mxu0 0.0
  %4754 = vmatpush1.msra.mxu0 0.0
  %4755 = vmatprep.subr.mxu0 0.0
  %4756 = vmatpush1.msra.mxu0 0.0
  %4757 = vmatprep.subr.mxu0 0.0
  %4758 = vmatpush1.msra.mxu0 0.0
  %4759 = vmatprep.subr.mxu0 0.0
  %4760 = vmatpush1.msra.mxu0 0.0
  %4761 = vmatprep.subr.mxu0 0.0
  %4762 = vmatpush1.msra.mxu0 0.0
  %4763 = vmatprep.subr.mxu0 0.0
  %4764 = vmatpush1.msra.mxu0 %v4639
  %4765 = vmatprep.subr.mxu0 0.0
  %4766 = vmatpush1.msra.mxu0 %v4638
  %4767 = vmatprep.subr.mxu0 0.0
  %4768 = vmatpush1.msra.mxu0 %v4637
  %4769 = vmatprep.subr.mxu0 0.0
  %4770 = vmatpush1.msra.mxu0 %v4636
  %4771 = vmatprep.subr.mxu0 0.0
  %4772 = vmatpush1.msra.mxu0 %v4635
  %4773 = vmatprep.subr.mxu0 0.0
  %4774 = vmatpush1.msra.mxu0 %v4634
  %4775 = vmatprep.subr.mxu0 0.0
  %4776 = vmatpush1.msra.mxu0 %v4633
  %4777 = vmatprep.subr.mxu0 0.0
  %4778 = vmatpush1.msra.mxu0 %v4632
  %4779 = vmatprep.subr.mxu0 0.0
  %4780 = vmatpush2.msra.mxu0 0.0
  %4781 = vmatprep.subr.mxu0 0.0
  %4782 = vmatpush2.msra.mxu0 0.0
  %4783 = vmatprep.subr.mxu0 0.0
  %4784 = vmatpush2.msra.mxu0 0.0
  %4785 = vmatprep.subr.mxu0 0.0
  %4786 = vmatpush2.msra.mxu0 0.0
  %4787 = vmatprep.subr.mxu0 0.0
  %4788 = vmatpush2.msra.mxu0 0.0
  %4789 = vmatprep.subr.mxu0 0.0
  %4790 = vmatpush2.msra.mxu0 0.0
  %4791 = vmatprep.subr.mxu0 0.0
  %4792 = vmatpush2.msra.mxu0 0.0
  %4793 = vmatprep.subr.mxu0 0.0
  %4794 = vmatpush2.msra.mxu0 0.0
  %4795 = vmatprep.subr.mxu0 0.0
  %4796 = vmatpush2.msra.mxu0 0.0
  %4797 = vmatprep.subr.mxu0 0.0
  %4798 = vmatpush2.msra.mxu0 0.0
  %4799 = vmatprep.subr.mxu0 0.0
  %4800 = vmatpush2.msra.mxu0 0.0
  %4801 = vmatprep.subr.mxu0 0.0
  %4802 = vmatpush2.msra.mxu0 0.0
  %4803 = vmatprep.subr.mxu0 0.0
  %4804 = vmatpush2.msra.mxu0 0.0
  %4805 = vmatprep.subr.mxu0 0.0
  %4806 = vmatpush2.msra.mxu0 0.0
  %4807 = vmatprep.subr.mxu0 0.0
  %4808 = vmatpush2.msra.mxu0 0.0
  %4809 = vmatprep.subr.mxu0 0.0
  %4810 = vmatpush2.msra.mxu0 0.0
  %4811 = vmatprep.mubr.f32.mxu0 0.0
  %4812 = vmatmul.mubr.f32.gmra.mxu0 %v4745
  %v4813 = vpop.f32.mrf.mxu0
  %v4814 = vadd.f32 0.0, %v4813
  %v4815 = vpop.f32.mrf.mxu0
  %4816 = vdwg.mxu0
  %v4817 = vmul.f32 %v4741, 0.001953125
  %v4818 = vmul.f32 %v4814, 0.001953125
  %v4819 = vmul.f32 %v4817, %v4817
  %v4820 = vsub.f32 %v4818, %v4819
  %v4821 = vadd.f32 %v4820, 1e-05
  %v4822 = vrsqrt.pop %v4821
  %vm4823 = vcmask 31744
  %v4825 = vsel %vm4823, %v4817, 0
  %v4828 = vsel %vm4093, %v4640, 0
  %4830 = vmatprep.subr.mxu0 0.0
  %4831 = vmatpush1.msra.mxu0 0.0
  %4832 = vmatprep.subr.mxu0 0.0
  %4833 = vmatpush1.msra.mxu0 0.0
  %4834 = vmatprep.subr.mxu0 0.0
  %4835 = vmatpush1.msra.mxu0 0.0
  %4836 = vmatprep.subr.mxu0 0.0
  %4837 = vmatpush1.msra.mxu0 0.0
  %4838 = vmatprep.subr.mxu0 0.0
  %4839 = vmatpush1.msra.mxu0 0.0
  %4840 = vmatprep.subr.mxu0 0.0
  %4841 = vmatpush1.msra.mxu0 0.0
  %4842 = vmatprep.subr.mxu0 0.0
  %4843 = vmatpush1.msra.mxu0 0.0
  %4844 = vmatprep.subr.mxu0 0.0
  %4845 = vmatpush1.msra.mxu0 0.0
  %4846 = vmatprep.subr.mxu0 0.0
  %4847 = vmatpush1.msra.mxu0 0.0
  %4848 = vmatprep.subr.mxu0 0.0
  %4849 = vmatpush1.msra.mxu0 0.0
  %4850 = vmatprep.subr.mxu0 0.0
  %4851 = vmatpush1.msra.mxu0 0.0
  %4852 = vmatprep.subr.mxu0 0.0
  %4853 = vmatpush1.msra.mxu0 0.0
  %4854 = vmatprep.subr.mxu0 0.0
  %4855 = vmatpush1.msra.mxu0 0.0
  %4856 = vmatprep.subr.mxu0 0.0
  %4857 = vmatpush1.msra.mxu0 0.0
  %4858 = vmatprep.subr.mxu0 0.0
  %4859 = vmatpush1.msra.mxu0 0.0
  %4860 = vmatprep.subr.mxu0 0.0
  %4861 = vmatpush1.msra.mxu0 %v4828
  %4862 = vmatprep.subr.mxu0 0.0
  %4863 = vmatpush2.msra.mxu0 0.0
  %4864 = vmatprep.subr.mxu0 0.0
  %4865 = vmatpush2.msra.mxu0 0.0
  %4866 = vmatprep.subr.mxu0 0.0
  %4867 = vmatpush2.msra.mxu0 0.0
  %4868 = vmatprep.subr.mxu0 0.0
  %4869 = vmatpush2.msra.mxu0 0.0
  %4870 = vmatprep.subr.mxu0 0.0
  %4871 = vmatpush2.msra.mxu0 0.0
  %4872 = vmatprep.subr.mxu0 0.0
  %4873 = vmatpush2.msra.mxu0 0.0
  %4874 = vmatprep.subr.mxu0 0.0
  %4875 = vmatpush2.msra.mxu0 0.0
  %4876 = vmatprep.subr.mxu0 0.0
  %4877 = vmatpush2.msra.mxu0 0.0
  %4878 = vmatprep.subr.mxu0 0.0
  %4879 = vmatpush2.msra.mxu0 0.0
  %4880 = vmatprep.subr.mxu0 0.0
  %4881 = vmatpush2.msra.mxu0 0.0
  %4882 = vmatprep.subr.mxu0 0.0
  %4883 = vmatpush2.msra.mxu0 0.0
  %4884 = vmatprep.subr.mxu0 0.0
  %4885 = vmatpush2.msra.mxu0 0.0
  %4886 = vmatprep.subr.mxu0 0.0
  %4887 = vmatpush2.msra.mxu0 0.0
  %4888 = vmatprep.subr.mxu0 0.0
  %4889 = vmatpush2.msra.mxu0 0.0
  %4890 = vmatprep.subr.mxu0 0.0
  %4891 = vmatpush2.msra.mxu0 0.0
  %4892 = vmatprep.subr.mxu0 0.0
  %4893 = vmatpush2.msra.mxu0 0.0
  %4894 = vmatprep.mubr.f32.mxu0 0.0
  %4895 = vmatmul.mubr.f32.gmra.mxu0 %v4825
  %v4896 = vpop.f32.mrf.mxu0
  %v4897 = vadd.f32 0.0, %v4896
  %v4898 = vpop.f32.mrf.mxu0
  %4899 = vdwg.mxu0
  %v4901 = vsel %vm4823, %v4822, 0
  %4903 = vmatprep.subr.mxu0 0.0
  %4904 = vmatpush1.msra.mxu0 0.0
  %4905 = vmatprep.subr.mxu0 0.0
  %4906 = vmatpush1.msra.mxu0 0.0
  %4907 = vmatprep.subr.mxu0 0.0
  %4908 = vmatpush1.msra.mxu0 0.0
  %4909 = vmatprep.subr.mxu0 0.0
  %4910 = vmatpush1.msra.mxu0 0.0
  %4911 = vmatprep.subr.mxu0 0.0
  %4912 = vmatpush1.msra.mxu0 0.0
  %4913 = vmatprep.subr.mxu0 0.0
  %4914 = vmatpush1.msra.mxu0 0.0
  %4915 = vmatprep.subr.mxu0 0.0
  %4916 = vmatpush1.msra.mxu0 0.0
  %4917 = vmatprep.subr.mxu0 0.0
  %4918 = vmatpush1.msra.mxu0 0.0
  %4919 = vmatprep.subr.mxu0 0.0
  %4920 = vmatpush1.msra.mxu0 0.0
  %4921 = vmatprep.subr.mxu0 0.0
  %4922 = vmatpush1.msra.mxu0 0.0
  %4923 = vmatprep.subr.mxu0 0.0
  %4924 = vmatpush1.msra.mxu0 0.0
  %4925 = vmatprep.subr.mxu0 0.0
  %4926 = vmatpush1.msra.mxu0 0.0
  %4927 = vmatprep.subr.mxu0 0.0
  %4928 = vmatpush1.msra.mxu0 0.0
  %4929 = vmatprep.subr.mxu0 0.0
  %4930 = vmatpush1.msra.mxu0 0.0
  %4931 = vmatprep.subr.mxu0 0.0
  %4932 = vmatpush1.msra.mxu0 0.0
  %4933 = vmatprep.subr.mxu0 0.0
  %4934 = vmatpush1.msra.mxu0 %v4828
  %4935 = vmatprep.subr.mxu0 0.0
  %4936 = vmatpush2.msra.mxu0 0.0
  %4937 = vmatprep.subr.mxu0 0.0
  %4938 = vmatpush2.msra.mxu0 0.0
  %4939 = vmatprep.subr.mxu0 0.0
  %4940 = vmatpush2.msra.mxu0 0.0
  %4941 = vmatprep.subr.mxu0 0.0
  %4942 = vmatpush2.msra.mxu0 0.0
  %4943 = vmatprep.subr.mxu0 0.0
  %4944 = vmatpush2.msra.mxu0 0.0
  %4945 = vmatprep.subr.mxu0 0.0
  %4946 = vmatpush2.msra.mxu0 0.0
  %4947 = vmatprep.subr.mxu0 0.0
  %4948 = vmatpush2.msra.mxu0 0.0
  %4949 = vmatprep.subr.mxu0 0.0
  %4950 = vmatpush2.msra.mxu0 0.0
  %4951 = vmatprep.subr.mxu0 0.0
  %4952 = vmatpush2.msra.mxu0 0.0
  %4953 = vmatprep.subr.mxu0 0.0
  %4954 = vmatpush2.msra.mxu0 0.0
  %4955 = vmatprep.subr.mxu0 0.0
  %4956 = vmatpush2.msra.mxu0 0.0
  %4957 = vmatprep.subr.mxu0 0.0
  %4958 = vmatpush2.msra.mxu0 0.0
  %4959 = vmatprep.subr.mxu0 0.0
  %4960 = vmatpush2.msra.mxu0 0.0
  %4961 = vmatprep.subr.mxu0 0.0
  %4962 = vmatpush2.msra.mxu0 0.0
  %4963 = vmatprep.subr.mxu0 0.0
  %4964 = vmatpush2.msra.mxu0 0.0
  %4965 = vmatprep.subr.mxu0 0.0
  %4966 = vmatpush2.msra.mxu0 0.0
  %4967 = vmatprep.mubr.f32.mxu0 0.0
  %4968 = vmatmul.mubr.f32.gmra.mxu0 %v4901
  %v4969 = vpop.f32.mrf.mxu0
  %v4970 = vadd.f32 0.0, %v4969
  %v4971 = vpop.f32.mrf.mxu0
  %4972 = vdwg.mxu0
  %v4973 = vlaneseq
  %v4974 = vshrl.u32 %v4973, 7
  %v4975 = vsub.s32 0, %v4974
  %v4976 = vrot.slane %v4897, %v4975
  %v4977 = vsub.f32 %v4616, %v4976
  %v4978 = vsub.f32 %v4619, %v4976
  %v4979 = vsub.f32 %v4624, %v4976
  %v4980 = vsub.f32 %v4627, %v4976
  %v4981 = vlaneseq
  %v4982 = vshrl.u32 %v4981, 7
  %v4983 = vsub.s32 0, %v4982
  %v4984 = vrot.slane %v4970, %v4983
  %v4985 = vmul.f32 %v4977, %v4984
  %v4986 = vmul.f32 %v4978, %v4984
  %v4987 = vmul.f32 %v4979, %v4984
  %v4988 = vmul.f32 %v4980, %v4984
  %v4990 = vlaneseq
  %v4991 = vshrl.u32 %v4990, 7
  %v4992 = vsub.s32 0, %v4991
  %v4993 = vrot.slane %v4630, %v4992
  %v4995 = vmul.f32 %v4985, %v4993
  %v4996 = vmul.f32 %v4986, %v4993
  %v4997 = vmul.f32 %v4987, %v4993
  %v4998 = vmul.f32 %v4988, %v4993
  %v5000 = vlaneseq
  %v5001 = vshrl.u32 %v5000, 7
  %v5002 = vsub.s32 0, %v5001
  %v5003 = vrot.slane %v4631, %v5002
  %v5005 = vadd.f32 %v4995, %v5003
  %v5006 = vadd.f32 %v4996, %v5003
  %v5007 = vadd.f32 %v4997, %v5003
  %v5008 = vadd.f32 %v4998, %v5003
  %v5009 = vadd.f32 %v5005, %v88
  %v5010 = vadd.f32 %v5006, %v89
  %v5011 = vadd.f32 %v5007, %v90
  %v5012 = vadd.f32 %v5008, %v91
  %v5013 = vmax.f32 %v5009, 0.0
  %v5014 = vmax.f32 %v5010, 0.0
  %v5015 = vmax.f32 %v5011, 0.0
  %v5016 = vmax.f32 %v5012, 0.0
  %5017 = vst.msk [vmem:[%s26] sm:$0xff] %vm150, %v5013
  %5018 = vst.msk [vmem:[%s26 + $0x8] sm:$0xff] %vm150, %v5014
  %5019 = vst.msk [vmem:[%s26 + $0x10] sm:$0xff] %vm150, %v5015
  %5020 = vst.msk [vmem:[%s26 + $0x18] sm:$0xff] %vm150, %v5016
  // Predicated region
  $region106: #{_run.1} parent=0 // pred_check
    _
  $region107: #{_run.1} parent=0 // pred_check_branch
    %5022 = sbr.rel (0) target = $region109
  $region108: #{_run.1} parent=0 // pred_region
    _
  $region109: #{_run.1} parent=0 // pred_fallthru
    _
  // Predicated region
  $region110: #{_run.1} parent=0 // pred_check
    _
  $region111: #{_run.1} parent=0 // pred_check_branch
    %5024 = sbr.rel (0) target = $region113
  $region112: #{_run.1} parent=0 // pred_region
    _
  $region113: #{_run.1} parent=0 // pred_fallthru
    _

</llo_original>
